<compile_context>
chip_gen: v7x
topology: tpu7x:2x2x1
jax: 0.10.0
libtpu: 0.0.40
codegen_flags: <defaults>
</compile_context>

<pallas_src>
import math

import jax
import jax.numpy as jnp
from jax.experimental import pallas as pl
from jax.experimental.pallas import tpu as pltpu

# ---------------- small Gemma config ----------------
B = 2               # batch
S = 8               # sequence length
H = 32              # hidden_size
N_HEADS = 4         # num_attention_heads
N_KV_HEADS = 2      # num_key_value_heads
HEAD_DIM = 16       # head_dim
INTER = 64          # intermediate_size
N_LAYERS = 2        # num_hidden_layers
EPS = 1e-6          # rms_norm_eps
ROPE_THETA = 10000.0
GROUP = N_HEADS // N_KV_HEADS
GELU_C = math.sqrt(2.0 / math.pi)

BS = B * S
Q_WIDTH = N_HEADS * HEAD_DIM            # 64
KV_WIDTH = N_KV_HEADS * HEAD_DIM        # 32
QKV_WIDTH = Q_WIDTH + 2 * KV_WIDTH      # 128  (lane-dense fused QKV)
GU_WIDTH = 2 * INTER                    # 128  (lane-dense fused gate/up)
HALF = HEAD_DIM // 2
SCALE = 1.0 / math.sqrt(HEAD_DIM)
NORMALIZER = math.sqrt(H)
STACK = B * N_HEADS * S                 # 64   (stacked (batch, head) rows)


# ---------------- in-kernel helpers ----------------
def _rms(x, w):
    var = jnp.mean(x * x, axis=-1, keepdims=True)
    return x * jax.lax.rsqrt(var + EPS) * (1.0 + w)


def _rotate_half(t):
    # t: (rows, HEAD_DIM) -> concat([-t[:, HALF:], t[:, :HALF]])
    return jnp.concatenate([-t[:, HALF:], t[:, :HALF]], axis=-1)


def _gelu_tanh(g):
    return 0.5 * g * (1.0 + jnp.tanh(GELU_C * (g + 0.044715 * g * g * g)))


# ---------------- the fused whole-model kernel ----------------
def _gemma_kernel(x_ref, cos_ref, sin_ref, mask_ref,
                  ln_in_ref, ln_post_ref, wqkv_ref, wo_ref,
                  wgu_ref, bgu_ref, wd_ref, bd_ref, final_ln_ref,
                  o_ref):
    x = x_ref[...] * jnp.float32(NORMALIZER)        # (BS, H)   embed scaling
    cos = cos_ref[...]                              # (STACK, D)  per-(b,h,s)
    sin = sin_ref[...]
    mask = mask_ref[...]                            # (STACK, STACK) block-diag

    for li in range(N_LAYERS):                      # static unroll (2 layers)
        # ---- attention block ----
        h = _rms(x, ln_in_ref[li])                  # (BS, H)
        # fused QKV: one 128-lane-wide MXU matmul
        qkv = jnp.dot(h, wqkv_ref[li],
                      preferred_element_type=jnp.float32)          # (BS, 128)

        # Stack every (batch, head) block along sublanes -> (STACK, D).
        # GQA: K/V kv-head slices are reused (duplicated) for each query head
        # in the group, so the stacked attention is plain MHA.
        q_blocks, k_blocks, v_blocks = [], [], []
        for b in range(B):
            r0, r1 = b * S, (b + 1) * S
            for hh in range(N_HEADS):
                kh = hh // GROUP
                kc = Q_WIDTH + kh * HEAD_DIM
                vc = Q_WIDTH + KV_WIDTH + kh * HEAD_DIM
                q_blocks.append(qkv[r0:r1, hh * HEAD_DIM:(hh + 1) * HEAD_DIM])
                k_blocks.append(qkv[r0:r1, kc:kc + HEAD_DIM])
                v_blocks.append(qkv[r0:r1, vc:vc + HEAD_DIM])
        qs = jnp.concatenate(q_blocks, axis=0)      # (STACK, D)
        ks = jnp.concatenate(k_blocks, axis=0)      # (STACK, D)
        vs = jnp.concatenate(v_blocks, axis=0)      # (STACK, D)

        # RoPE on ALL (batch, head) blocks at once: one slice+concat pair each.
        qs = qs * cos + _rotate_half(qs) * sin
        ks = ks * cos + _rotate_half(ks) * sin

        # Block-diagonal attention: one score matmul + one PV matmul per layer.
        s = jnp.dot(qs, ks.T,
                    preferred_element_type=jnp.float32) * SCALE + mask
        s = s - jnp.max(s, axis=-1, keepdims=True)
        p = jnp.exp(s)                               # off-block entries -> 0
        p = p * pl.reciprocal(jnp.sum(p, axis=-1, keepdims=True), approx=True)
        ctx = jnp.dot(p, vs,
                      preferred_element_type=jnp.float32)          # (STACK, D)

        # Un-stack back to (BS, N_HEADS*HEAD_DIM) for the o-projection.
        att_rows = []
        for b in range(B):
            cols = [ctx[(b * N_HEADS + hh) * S:(b * N_HEADS + hh + 1) * S, :]
                    for hh in range(N_HEADS)]
            att_rows.append(jnp.concatenate(cols, axis=-1))        # (S, 64)
        att = jnp.concatenate(att_rows, axis=0)                    # (BS, 64)

        # o-projection + fused residual add
        x = x + jnp.dot(att, wo_ref[li], preferred_element_type=jnp.float32)

        # ---- MLP block ----
        h = _rms(x, ln_post_ref[li])
        # fused gate/up: one 128-lane-wide MXU matmul
        gu = (jnp.dot(h, wgu_ref[li], preferred_element_type=jnp.float32)
              + bgu_ref[li])                                       # (BS, 128)
        g = gu[:, :INTER]
        u = gu[:, INTER:]
        act = _gelu_tanh(g) * u
        # down projection + fused residual add
        x = x + (jnp.dot(act, wd_ref[li], preferred_element_type=jnp.float32)
                 + bd_ref[li])

    o_ref[...] = _rms(x, final_ln_ref[...])


# ---------------- glue: rope tables ----------------
def rope_cos_sin(position_ids):
    inv_freq = 1.0 / (ROPE_THETA ** (jnp.arange(0, HEAD_DIM, 2, dtype=jnp.float32)
                                     / HEAD_DIM))
    freqs = position_ids[:, :, None].astype(jnp.float32) * inv_freq[None, None, :]
    emb = jnp.concatenate([freqs, freqs], axis=-1)      # (B, S, D)
    return jnp.cos(emb), jnp.sin(emb)


# ---------------- GemmaModel forward (single fused pallas_call) ----------------
@jax.jit
def gemma_forward(params, input_embeds, position_ids, attention_mask):
    cos, sin = rope_cos_sin(position_ids)                           # (B, S, D)
    layers = params["layers"]

    # --- host-side glue, folded by XLA under jit ---
    # Stacked cos/sin: row (b*N_HEADS + h)*S + s  uses cos/sin of (b, s).
    cos_stack = jnp.broadcast_to(cos[:, None], (B, N_HEADS, S, HEAD_DIM)
                                 ).reshape(STACK, HEAD_DIM)
    sin_stack = jnp.broadcast_to(sin[:, None], (B, N_HEADS, S, HEAD_DIM)
                                 ).reshape(STACK, HEAD_DIM)
    # Block-diagonal mask: causal mask on diagonal (b,h) blocks, -1e9 elsewhere.
    blk = jnp.arange(B * N_HEADS)
    same = (blk[:, None] == blk[None, :])
    same = jnp.repeat(jnp.repeat(same, S, axis=0), S, axis=1)       # (64, 64)
    big_mask = jnp.where(same,
                         jnp.tile(attention_mask.astype(jnp.float32),
                                  (B * N_HEADS, B * N_HEADS)),
                         jnp.float32(-1e9))

    # Stack / fuse per-layer weights.
    ln_in = jnp.stack([l["input_ln"].reshape(1, H) for l in layers])   # (L,1,H)
    ln_post = jnp.stack([l["post_ln"].reshape(1, H) for l in layers])
    wqkv = jnp.stack([jnp.concatenate([l["wq"], l["wk"], l["wv"]], axis=1)
                      for l in layers])                                # (L,H,128)
    wo = jnp.stack([l["wo"] for l in layers])                          # (L,64,H)
    wgu = jnp.stack([jnp.concatenate([l["wg"], l["wu"]], axis=1)
                     for l in layers])                                 # (L,H,128)
    bgu = jnp.stack([jnp.concatenate([l["bg"], l["bu"]]).reshape(1, GU_WIDTH)
                     for l in layers])                                 # (L,1,128)
    wd = jnp.stack([l["wd"] for l in layers])                          # (L,64,H)
    bd = jnp.stack([l["bd"].reshape(1, H) for l in layers])            # (L,1,H)
    final_ln = params["final_ln"].reshape(1, H)

    vmem = pl.BlockSpec(memory_space=pltpu.MemorySpace.VMEM)
    out = pl.pallas_call(
        _gemma_kernel,
        out_shape=jax.ShapeDtypeStruct((BS, H), jnp.float32),
        in_specs=[vmem] * 13,
        out_specs=vmem,
    )(input_embeds.reshape(BS, H).astype(jnp.float32),
      cos_stack, sin_stack, big_mask,
      ln_in, ln_post, wqkv, wo, wgu, bgu, wd, bd, final_ln)
    return out.reshape(B, S, H)


# ---------------- parameters ----------------
def init_params(key):
    def nrm(k, shape, scale=0.02):
        return (scale * jax.random.normal(k, shape)).astype(jnp.float32)

    layers = []
    for li in range(N_LAYERS):
        k = jax.random.fold_in(key, li)
        ks = jax.random.split(k, 10)
        layers.append(dict(
            input_ln=jnp.zeros((H,), jnp.float32),       # GemmaRMSNorm init: zeros
            post_ln=jnp.zeros((H,), jnp.float32),
            wq=nrm(ks[0], (H, N_HEADS * HEAD_DIM)),
            wk=nrm(ks[1], (H, N_KV_HEADS * HEAD_DIM)),
            wv=nrm(ks[2], (H, N_KV_HEADS * HEAD_DIM)),
            wo=nrm(ks[3], (N_HEADS * HEAD_DIM, H)),
            wg=nrm(ks[4], (H, INTER)), bg=nrm(ks[5], (INTER,)),
            wu=nrm(ks[6], (H, INTER)), bu=nrm(ks[7], (INTER,)),
            wd=nrm(ks[8], (INTER, H)), bd=nrm(ks[9], (H,)),
        ))
    return dict(layers=layers, final_ln=jnp.zeros((H,), jnp.float32))


# ---------------- pure-JAX reference for verification ----------------
def _ref_rmsnorm(x, w):
    var = jnp.mean(x * x, axis=-1, keepdims=True)
    return x * jax.lax.rsqrt(var + EPS) * (1.0 + w)


def _ref_rotate_half(x):
    half = x.shape[-1] // 2
    return jnp.concatenate([-x[..., half:], x[..., :half]], axis=-1)


def ref_forward(params, input_embeds, position_ids, attention_mask):
    hp = jax.lax.Precision.HIGHEST
    x = input_embeds * math.sqrt(H)
    cos, sin = rope_cos_sin(position_ids)
    for layer in params["layers"]:
        residual = x
        h = _ref_rmsnorm(x, layer["input_ln"])
        q = jnp.einsum("bsh,hd->bsd", h, layer["wq"], precision=hp)
        k = jnp.einsum("bsh,hd->bsd", h, layer["wk"], precision=hp)
        v = jnp.einsum("bsh,hd->bsd", h, layer["wv"], precision=hp)
        q = q.reshape(B, S, N_HEADS, HEAD_DIM).transpose(0, 2, 1, 3)
        k = k.reshape(B, S, N_KV_HEADS, HEAD_DIM).transpose(0, 2, 1, 3)
        v = v.reshape(B, S, N_KV_HEADS, HEAD_DIM).transpose(0, 2, 1, 3)
        c = cos[:, None]; s = sin[:, None]
        q = q * c + _ref_rotate_half(q) * s
        k = k * c + _ref_rotate_half(k) * s
        k = jnp.repeat(k, GROUP, axis=1)
        v = jnp.repeat(v, GROUP, axis=1)
        scores = jnp.einsum("bhqd,bhkd->bhqk", q, k, precision=hp) / math.sqrt(HEAD_DIM)
        scores = scores + attention_mask[None, None]
        p = jax.nn.softmax(scores, axis=-1)
        att = jnp.einsum("bhqk,bhkd->bhqd", p, v, precision=hp)
        att = att.transpose(0, 2, 1, 3).reshape(B, S, N_HEADS * HEAD_DIM)
        att_out = jnp.einsum("bsd,dh->bsh", att, layer["wo"], precision=hp)
        x = residual + att_out
        residual = x
        h = _ref_rmsnorm(x, layer["post_ln"])
        g = jnp.einsum("bsh,hi->bsi", h, layer["wg"], precision=hp) + layer["bg"]
        u = jnp.einsum("bsh,hi->bsi", h, layer["wu"], precision=hp) + layer["bu"]
        gact = 0.5 * g * (1.0 + jnp.tanh(GELU_C * (g + 0.044715 * g ** 3)))
        m = jnp.einsum("bsi,ih->bsh", gact * u, layer["wd"], precision=hp) + layer["bd"]
        x = residual + m
    return _ref_rmsnorm(x, params["final_ln"])


# ---------------- main ----------------
if __name__ == "__main__":
    key = jax.random.PRNGKey(0)
    k_emb, k_par = jax.random.split(key)

    params = init_params(k_par)
    input_embeds = jax.random.normal(k_emb, (B, S, H), dtype=jnp.float32)
    position_ids = jnp.broadcast_to(jnp.arange(S, dtype=jnp.int32)[None, :], (B, S))
    row = jnp.arange(S)[:, None]
    col = jnp.arange(S)[None, :]
    attention_mask = jnp.where(col <= row, 0.0, -1e9).astype(jnp.float32)  # causal

    out = gemma_forward(params, input_embeds, position_ids, attention_mask)
    out = jax.block_until_ready(out)

    ref = ref_forward(params, input_embeds, position_ids, attention_mask)
    assert out.shape == (B, S, H)
    assert jnp.allclose(out, ref, rtol=2e-2, atol=2e-2), (
        "mismatch vs reference: max abs err "
        f"{float(jnp.max(jnp.abs(out - ref)))}")

    print("KERNEL_OK")
</pallas_src>

<mosaic_0001>
module attributes {stable_mosaic.version = 11 : i64} {
  func.func @_gemma_kernel(%arg0: memref<16x32xf32, #tpu.memory_space<vmem>>, %arg1: memref<64x16xf32, #tpu.memory_space<vmem>>, %arg2: memref<64x16xf32, #tpu.memory_space<vmem>>, %arg3: memref<64x64xf32, #tpu.memory_space<vmem>>, %arg4: memref<2x1x32xf32, #tpu.memory_space<vmem>>, %arg5: memref<2x1x32xf32, #tpu.memory_space<vmem>>, %arg6: memref<2x32x128xf32, #tpu.memory_space<vmem>>, %arg7: memref<2x64x32xf32, #tpu.memory_space<vmem>>, %arg8: memref<2x32x128xf32, #tpu.memory_space<vmem>>, %arg9: memref<2x1x128xf32, #tpu.memory_space<vmem>>, %arg10: memref<2x64x32xf32, #tpu.memory_space<vmem>>, %arg11: memref<2x1x32xf32, #tpu.memory_space<vmem>>, %arg12: memref<1x32xf32, #tpu.memory_space<vmem>>, %arg13: memref<16x32xf32, #tpu.memory_space<vmem>>) attributes {dimension_semantics = [], scalar_prefetch = 0 : i64, scratch_operands = 0 : i64, tpu.core_type = #tpu.core_type<tc>} {
    %c0 = arith.constant 0 : index
    %c0_0 = arith.constant 0 : index
    %0 = vector.load %arg0[%c0, %c0_0] : memref<16x32xf32, #tpu.memory_space<vmem>>, vector<16x32xf32>
    %cst = arith.constant 5.65685415 : f32
    %1 = vector.broadcast %cst : f32 to vector<16x32xf32>
    %2 = arith.mulf %0, %1 : vector<16x32xf32>
    %c0_1 = arith.constant 0 : index
    %c0_2 = arith.constant 0 : index
    %3 = vector.load %arg1[%c0_1, %c0_2] : memref<64x16xf32, #tpu.memory_space<vmem>>, vector<64x16xf32>
    %c0_3 = arith.constant 0 : index
    %c0_4 = arith.constant 0 : index
    %4 = vector.load %arg2[%c0_3, %c0_4] : memref<64x16xf32, #tpu.memory_space<vmem>>, vector<64x16xf32>
    %c0_5 = arith.constant 0 : index
    %c0_6 = arith.constant 0 : index
    %5 = vector.load %arg3[%c0_5, %c0_6] : memref<64x64xf32, #tpu.memory_space<vmem>>, vector<64x64xf32>
    %c0_7 = arith.constant 0 : index
    %c0_8 = arith.constant 0 : index
    %c0_9 = arith.constant 0 : index
    %6 = vector.load %arg4[%c0_7, %c0_8, %c0_9] : memref<2x1x32xf32, #tpu.memory_space<vmem>>, vector<1x1x32xf32>
    %7 = vector.shape_cast %6 : vector<1x1x32xf32> to vector<1x32xf32>
    %8 = arith.mulf %2, %2 : vector<16x32xf32>
    %cst_10 = arith.constant dense<0.000000e+00> : vector<16xf32>
    %9 = vector.multi_reduction <add>, %8, %cst_10 [1] : vector<16x32xf32> to vector<16xf32>
    %10 = vector.shape_cast %9 : vector<16xf32> to vector<16x1xf32>
    %cst_11 = arith.constant 3.200000e+01 : f32
    %11 = vector.broadcast %cst_11 : f32 to vector<16x1xf32>
    %12 = arith.divf %10, %11 : vector<16x1xf32>
    %cst_12 = arith.constant 9.99999997E-7 : f32
    %13 = vector.broadcast %cst_12 : f32 to vector<16x1xf32>
    %14 = arith.addf %12, %13 : vector<16x1xf32>
    %15 = math.rsqrt %14 : vector<16x1xf32>
    %16 = vector.broadcast %15 : vector<16x1xf32> to vector<16x32xf32>
    %17 = arith.mulf %2, %16 : vector<16x32xf32>
    %cst_13 = arith.constant 1.000000e+00 : f32
    %18 = vector.broadcast %cst_13 : f32 to vector<1x32xf32>
    %19 = arith.addf %18, %7 : vector<1x32xf32>
    %20 = vector.broadcast %19 : vector<1x32xf32> to vector<16x32xf32>
    %21 = arith.mulf %17, %20 : vector<16x32xf32>
    %c0_14 = arith.constant 0 : index
    %c0_15 = arith.constant 0 : index
    %c0_16 = arith.constant 0 : index
    %22 = vector.load %arg6[%c0_14, %c0_15, %c0_16] : memref<2x32x128xf32, #tpu.memory_space<vmem>>, vector<1x32x128xf32>
    %23 = vector.shape_cast %22 : vector<1x32x128xf32> to vector<32x128xf32>
    %cst_17 = arith.constant dense<0.000000e+00> : vector<16x128xf32>
    %24 = tpu.matmul %21, %23, %cst_17 {dimension_numbers = #tpu.dot_dimension_numbers<[1], [0], [0], [1], [0, 0, 1, 1], [], []>} : vector<16x32xf32>, vector<32x128xf32>, vector<16x128xf32> -> vector<16x128xf32>
    %25 = vector.extract_strided_slice %24 {offsets = [0, 0], sizes = [8, 16], strides = [1, 1]} : vector<16x128xf32> to vector<8x16xf32>
    %26 = vector.extract_strided_slice %24 {offsets = [0, 64], sizes = [8, 16], strides = [1, 1]} : vector<16x128xf32> to vector<8x16xf32>
    %27 = vector.extract_strided_slice %24 {offsets = [0, 96], sizes = [8, 16], strides = [1, 1]} : vector<16x128xf32> to vector<8x16xf32>
    %28 = vector.extract_strided_slice %24 {offsets = [0, 16], sizes = [8, 16], strides = [1, 1]} : vector<16x128xf32> to vector<8x16xf32>
    %29 = vector.extract_strided_slice %24 {offsets = [0, 64], sizes = [8, 16], strides = [1, 1]} : vector<16x128xf32> to vector<8x16xf32>
    %30 = vector.extract_strided_slice %24 {offsets = [0, 96], sizes = [8, 16], strides = [1, 1]} : vector<16x128xf32> to vector<8x16xf32>
    %31 = vector.extract_strided_slice %24 {offsets = [0, 32], sizes = [8, 16], strides = [1, 1]} : vector<16x128xf32> to vector<8x16xf32>
    %32 = vector.extract_strided_slice %24 {offsets = [0, 80], sizes = [8, 16], strides = [1, 1]} : vector<16x128xf32> to vector<8x16xf32>
    %33 = vector.extract_strided_slice %24 {offsets = [0, 112], sizes = [8, 16], strides = [1, 1]} : vector<16x128xf32> to vector<8x16xf32>
    %34 = vector.extract_strided_slice %24 {offsets = [0, 48], sizes = [8, 16], strides = [1, 1]} : vector<16x128xf32> to vector<8x16xf32>
    %35 = vector.extract_strided_slice %24 {offsets = [0, 80], sizes = [8, 16], strides = [1, 1]} : vector<16x128xf32> to vector<8x16xf32>
    %36 = vector.extract_strided_slice %24 {offsets = [0, 112], sizes = [8, 16], strides = [1, 1]} : vector<16x128xf32> to vector<8x16xf32>
    %37 = vector.extract_strided_slice %24 {offsets = [8, 0], sizes = [8, 16], strides = [1, 1]} : vector<16x128xf32> to vector<8x16xf32>
    %38 = vector.extract_strided_slice %24 {offsets = [8, 64], sizes = [8, 16], strides = [1, 1]} : vector<16x128xf32> to vector<8x16xf32>
    %39 = vector.extract_strided_slice %24 {offsets = [8, 96], sizes = [8, 16], strides = [1, 1]} : vector<16x128xf32> to vector<8x16xf32>
    %40 = vector.extract_strided_slice %24 {offsets = [8, 16], sizes = [8, 16], strides = [1, 1]} : vector<16x128xf32> to vector<8x16xf32>
    %41 = vector.extract_strided_slice %24 {offsets = [8, 64], sizes = [8, 16], strides = [1, 1]} : vector<16x128xf32> to vector<8x16xf32>
    %42 = vector.extract_strided_slice %24 {offsets = [8, 96], sizes = [8, 16], strides = [1, 1]} : vector<16x128xf32> to vector<8x16xf32>
    %43 = vector.extract_strided_slice %24 {offsets = [8, 32], sizes = [8, 16], strides = [1, 1]} : vector<16x128xf32> to vector<8x16xf32>
    %44 = vector.extract_strided_slice %24 {offsets = [8, 80], sizes = [8, 16], strides = [1, 1]} : vector<16x128xf32> to vector<8x16xf32>
    %45 = vector.extract_strided_slice %24 {offsets = [8, 112], sizes = [8, 16], strides = [1, 1]} : vector<16x128xf32> to vector<8x16xf32>
    %46 = vector.extract_strided_slice %24 {offsets = [8, 48], sizes = [8, 16], strides = [1, 1]} : vector<16x128xf32> to vector<8x16xf32>
    %47 = vector.extract_strided_slice %24 {offsets = [8, 80], sizes = [8, 16], strides = [1, 1]} : vector<16x128xf32> to vector<8x16xf32>
    %48 = vector.extract_strided_slice %24 {offsets = [8, 112], sizes = [8, 16], strides = [1, 1]} : vector<16x128xf32> to vector<8x16xf32>
    %49 = tpu.concatenate %25, %28, %31, %34, %37, %40, %43, %46 in 0 : vector<8x16xf32>, vector<8x16xf32>, vector<8x16xf32>, vector<8x16xf32>, vector<8x16xf32>, vector<8x16xf32>, vector<8x16xf32>, vector<8x16xf32> -> vector<64x16xf32>
    %50 = tpu.concatenate %26, %29, %32, %35, %38, %41, %44, %47 in 0 : vector<8x16xf32>, vector<8x16xf32>, vector<8x16xf32>, vector<8x16xf32>, vector<8x16xf32>, vector<8x16xf32>, vector<8x16xf32>, vector<8x16xf32> -> vector<64x16xf32>
    %51 = tpu.concatenate %27, %30, %33, %36, %39, %42, %45, %48 in 0 : vector<8x16xf32>, vector<8x16xf32>, vector<8x16xf32>, vector<8x16xf32>, vector<8x16xf32>, vector<8x16xf32>, vector<8x16xf32>, vector<8x16xf32> -> vector<64x16xf32>
    %52 = arith.mulf %49, %3 : vector<64x16xf32>
    %53 = vector.extract_strided_slice %49 {offsets = [0, 8], sizes = [64, 8], strides = [1, 1]} : vector<64x16xf32> to vector<64x8xf32>
    %cst_18 = arith.constant 0.000000e+00 : f32
    %54 = vector.broadcast %cst_18 : f32 to vector<64x8xf32>
    %55 = arith.subf %54, %53 : vector<64x8xf32>
    %56 = vector.extract_strided_slice %49 {offsets = [0, 0], sizes = [64, 8], strides = [1, 1]} : vector<64x16xf32> to vector<64x8xf32>
    %57 = tpu.concatenate %55, %56 in 1 : vector<64x8xf32>, vector<64x8xf32> -> vector<64x16xf32>
    %58 = arith.mulf %57, %4 : vector<64x16xf32>
    %59 = arith.addf %52, %58 : vector<64x16xf32>
    %60 = arith.mulf %50, %3 : vector<64x16xf32>
    %61 = vector.extract_strided_slice %50 {offsets = [0, 8], sizes = [64, 8], strides = [1, 1]} : vector<64x16xf32> to vector<64x8xf32>
    %cst_19 = arith.constant 0.000000e+00 : f32
    %62 = vector.broadcast %cst_19 : f32 to vector<64x8xf32>
    %63 = arith.subf %62, %61 : vector<64x8xf32>
    %64 = vector.extract_strided_slice %50 {offsets = [0, 0], sizes = [64, 8], strides = [1, 1]} : vector<64x16xf32> to vector<64x8xf32>
    %65 = tpu.concatenate %63, %64 in 1 : vector<64x8xf32>, vector<64x8xf32> -> vector<64x16xf32>
    %66 = arith.mulf %65, %4 : vector<64x16xf32>
    %67 = arith.addf %60, %66 : vector<64x16xf32>
    %68 = tpu.transpose %67, [1, 0] : vector<64x16xf32> -> vector<16x64xf32>
    %cst_20 = arith.constant dense<0.000000e+00> : vector<64x64xf32>
    %69 = tpu.matmul %59, %68, %cst_20 {dimension_numbers = #tpu.dot_dimension_numbers<[1], [0], [0], [1], [0, 0, 1, 1], [], []>} : vector<64x16xf32>, vector<16x64xf32>, vector<64x64xf32> -> vector<64x64xf32>
    %cst_21 = arith.constant 2.500000e-01 : f32
    %70 = vector.broadcast %cst_21 : f32 to vector<64x64xf32>
    %71 = arith.mulf %69, %70 : vector<64x64xf32>
    %72 = arith.addf %71, %5 : vector<64x64xf32>
    %cst_22 = arith.constant dense<0xFF800000> : vector<64xf32>
    %73 = vector.multi_reduction <maximumf>, %72, %cst_22 [1] : vector<64x64xf32> to vector<64xf32>
    %74 = vector.shape_cast %73 : vector<64xf32> to vector<64x1xf32>
    %75 = vector.broadcast %74 : vector<64x1xf32> to vector<64x64xf32>
    %76 = arith.subf %72, %75 : vector<64x64xf32>
    %77 = math.exp %76 : vector<64x64xf32>
    %cst_23 = arith.constant dense<0.000000e+00> : vector<64xf32>
    %78 = vector.multi_reduction <add>, %77, %cst_23 [1] : vector<64x64xf32> to vector<64xf32>
    %79 = vector.shape_cast %78 : vector<64xf32> to vector<64x1xf32>
    %80 = tpu.reciprocal %79 {approx = true} : vector<64x1xf32> -> vector<64x1xf32>
    %81 = vector.broadcast %80 : vector<64x1xf32> to vector<64x64xf32>
    %82 = arith.mulf %77, %81 : vector<64x64xf32>
    %cst_24 = arith.constant dense<0.000000e+00> : vector<64x16xf32>
    %83 = tpu.matmul %82, %51, %cst_24 {dimension_numbers = #tpu.dot_dimension_numbers<[1], [0], [0], [1], [0, 0, 1, 1], [], []>} : vector<64x64xf32>, vector<64x16xf32>, vector<64x16xf32> -> vector<64x16xf32>
    %84 = vector.extract_strided_slice %83 {offsets = [0, 0], sizes = [8, 16], strides = [1, 1]} : vector<64x16xf32> to vector<8x16xf32>
    %85 = vector.extract_strided_slice %83 {offsets = [8, 0], sizes = [8, 16], strides = [1, 1]} : vector<64x16xf32> to vector<8x16xf32>
    %86 = vector.extract_strided_slice %83 {offsets = [16, 0], sizes = [8, 16], strides = [1, 1]} : vector<64x16xf32> to vector<8x16xf32>
    %87 = vector.extract_strided_slice %83 {offsets = [24, 0], sizes = [8, 16], strides = [1, 1]} : vector<64x16xf32> to vector<8x16xf32>
    %88 = tpu.concatenate %84, %85, %86, %87 in 1 : vector<8x16xf32>, vector<8x16xf32>, vector<8x16xf32>, vector<8x16xf32> -> vector<8x64xf32>
    %89 = vector.extract_strided_slice %83 {offsets = [32, 0], sizes = [8, 16], strides = [1, 1]} : vector<64x16xf32> to vector<8x16xf32>
    %90 = vector.extract_strided_slice %83 {offsets = [40, 0], sizes = [8, 16], strides = [1, 1]} : vector<64x16xf32> to vector<8x16xf32>
    %91 = vector.extract_strided_slice %83 {offsets = [48, 0], sizes = [8, 16], strides = [1, 1]} : vector<64x16xf32> to vector<8x16xf32>
    %92 = vector.extract_strided_slice %83 {offsets = [56, 0], sizes = [8, 16], strides = [1, 1]} : vector<64x16xf32> to vector<8x16xf32>
    %93 = tpu.concatenate %89, %90, %91, %92 in 1 : vector<8x16xf32>, vector<8x16xf32>, vector<8x16xf32>, vector<8x16xf32> -> vector<8x64xf32>
    %94 = tpu.concatenate %88, %93 in 0 : vector<8x64xf32>, vector<8x64xf32> -> vector<16x64xf32>
    %c0_25 = arith.constant 0 : index
    %c0_26 = arith.constant 0 : index
    %c0_27 = arith.constant 0 : index
    %95 = vector.load %arg7[%c0_25, %c0_26, %c0_27] : memref<2x64x32xf32, #tpu.memory_space<vmem>>, vector<1x64x32xf32>
    %96 = vector.shape_cast %95 : vector<1x64x32xf32> to vector<64x32xf32>
    %cst_28 = arith.constant dense<0.000000e+00> : vector<16x32xf32>
    %97 = tpu.matmul %94, %96, %cst_28 {dimension_numbers = #tpu.dot_dimension_numbers<[1], [0], [0], [1], [0, 0, 1, 1], [], []>} : vector<16x64xf32>, vector<64x32xf32>, vector<16x32xf32> -> vector<16x32xf32>
    %98 = arith.addf %2, %97 : vector<16x32xf32>
    %c0_29 = arith.constant 0 : index
    %c0_30 = arith.constant 0 : index
    %c0_31 = arith.constant 0 : index
    %99 = vector.load %arg5[%c0_29, %c0_30, %c0_31] : memref<2x1x32xf32, #tpu.memory_space<vmem>>, vector<1x1x32xf32>
    %100 = vector.shape_cast %99 : vector<1x1x32xf32> to vector<1x32xf32>
    %101 = arith.mulf %98, %98 : vector<16x32xf32>
    %cst_32 = arith.constant dense<0.000000e+00> : vector<16xf32>
    %102 = vector.multi_reduction <add>, %101, %cst_32 [1] : vector<16x32xf32> to vector<16xf32>
    %103 = vector.shape_cast %102 : vector<16xf32> to vector<16x1xf32>
    %cst_33 = arith.constant 3.200000e+01 : f32
    %104 = vector.broadcast %cst_33 : f32 to vector<16x1xf32>
    %105 = arith.divf %103, %104 : vector<16x1xf32>
    %cst_34 = arith.constant 9.99999997E-7 : f32
    %106 = vector.broadcast %cst_34 : f32 to vector<16x1xf32>
    %107 = arith.addf %105, %106 : vector<16x1xf32>
    %108 = math.rsqrt %107 : vector<16x1xf32>
    %109 = vector.broadcast %108 : vector<16x1xf32> to vector<16x32xf32>
    %110 = arith.mulf %98, %109 : vector<16x32xf32>
    %cst_35 = arith.constant 1.000000e+00 : f32
    %111 = vector.broadcast %cst_35 : f32 to vector<1x32xf32>
    %112 = arith.addf %111, %100 : vector<1x32xf32>
    %113 = vector.broadcast %112 : vector<1x32xf32> to vector<16x32xf32>
    %114 = arith.mulf %110, %113 : vector<16x32xf32>
    %c0_36 = arith.constant 0 : index
    %c0_37 = arith.constant 0 : index
    %c0_38 = arith.constant 0 : index
    %115 = vector.load %arg8[%c0_36, %c0_37, %c0_38] : memref<2x32x128xf32, #tpu.memory_space<vmem>>, vector<1x32x128xf32>
    %116 = vector.shape_cast %115 : vector<1x32x128xf32> to vector<32x128xf32>
    %cst_39 = arith.constant dense<0.000000e+00> : vector<16x128xf32>
    %117 = tpu.matmul %114, %116, %cst_39 {dimension_numbers = #tpu.dot_dimension_numbers<[1], [0], [0], [1], [0, 0, 1, 1], [], []>} : vector<16x32xf32>, vector<32x128xf32>, vector<16x128xf32> -> vector<16x128xf32>
    %c0_40 = arith.constant 0 : index
    %c0_41 = arith.constant 0 : index
    %c0_42 = arith.constant 0 : index
    %118 = vector.load %arg9[%c0_40, %c0_41, %c0_42] : memref<2x1x128xf32, #tpu.memory_space<vmem>>, vector<1x1x128xf32>
    %119 = vector.shape_cast %118 : vector<1x1x128xf32> to vector<1x128xf32>
    %120 = vector.broadcast %119 : vector<1x128xf32> to vector<16x128xf32>
    %121 = arith.addf %117, %120 : vector<16x128xf32>
    %122 = vector.extract_strided_slice %121 {offsets = [0, 0], sizes = [16, 64], strides = [1, 1]} : vector<16x128xf32> to vector<16x64xf32>
    %123 = vector.extract_strided_slice %121 {offsets = [0, 64], sizes = [16, 64], strides = [1, 1]} : vector<16x128xf32> to vector<16x64xf32>
    %cst_43 = arith.constant 5.000000e-01 : f32
    %124 = vector.broadcast %cst_43 : f32 to vector<16x64xf32>
    %125 = arith.mulf %124, %122 : vector<16x64xf32>
    %cst_44 = arith.constant 4.471500e-02 : f32
    %126 = vector.broadcast %cst_44 : f32 to vector<16x64xf32>
    %127 = arith.mulf %126, %122 : vector<16x64xf32>
    %128 = arith.mulf %127, %122 : vector<16x64xf32>
    %129 = arith.mulf %128, %122 : vector<16x64xf32>
    %130 = arith.addf %122, %129 : vector<16x64xf32>
    %cst_45 = arith.constant 0.797884583 : f32
    %131 = vector.broadcast %cst_45 : f32 to vector<16x64xf32>
    %132 = arith.mulf %131, %130 : vector<16x64xf32>
    %133 = math.tanh %132 : vector<16x64xf32>
    %cst_46 = arith.constant 1.000000e+00 : f32
    %134 = vector.broadcast %cst_46 : f32 to vector<16x64xf32>
    %135 = arith.addf %134, %133 : vector<16x64xf32>
    %136 = arith.mulf %125, %135 : vector<16x64xf32>
    %137 = arith.mulf %136, %123 : vector<16x64xf32>
    %c0_47 = arith.constant 0 : index
    %c0_48 = arith.constant 0 : index
    %c0_49 = arith.constant 0 : index
    %138 = vector.load %arg10[%c0_47, %c0_48, %c0_49] : memref<2x64x32xf32, #tpu.memory_space<vmem>>, vector<1x64x32xf32>
    %139 = vector.shape_cast %138 : vector<1x64x32xf32> to vector<64x32xf32>
    %cst_50 = arith.constant dense<0.000000e+00> : vector<16x32xf32>
    %140 = tpu.matmul %137, %139, %cst_50 {dimension_numbers = #tpu.dot_dimension_numbers<[1], [0], [0], [1], [0, 0, 1, 1], [], []>} : vector<16x64xf32>, vector<64x32xf32>, vector<16x32xf32> -> vector<16x32xf32>
    %c0_51 = arith.constant 0 : index
    %c0_52 = arith.constant 0 : index
    %c0_53 = arith.constant 0 : index
    %141 = vector.load %arg11[%c0_51, %c0_52, %c0_53] : memref<2x1x32xf32, #tpu.memory_space<vmem>>, vector<1x1x32xf32>
    %142 = vector.shape_cast %141 : vector<1x1x32xf32> to vector<1x32xf32>
    %143 = vector.broadcast %142 : vector<1x32xf32> to vector<16x32xf32>
    %144 = arith.addf %140, %143 : vector<16x32xf32>
    %145 = arith.addf %98, %144 : vector<16x32xf32>
    %c1 = arith.constant 1 : index
    %c0_54 = arith.constant 0 : index
    %c0_55 = arith.constant 0 : index
    %146 = vector.load %arg4[%c1, %c0_54, %c0_55] : memref<2x1x32xf32, #tpu.memory_space<vmem>>, vector<1x1x32xf32>
    %147 = vector.shape_cast %146 : vector<1x1x32xf32> to vector<1x32xf32>
    %148 = arith.mulf %145, %145 : vector<16x32xf32>
    %cst_56 = arith.constant dense<0.000000e+00> : vector<16xf32>
    %149 = vector.multi_reduction <add>, %148, %cst_56 [1] : vector<16x32xf32> to vector<16xf32>
    %150 = vector.shape_cast %149 : vector<16xf32> to vector<16x1xf32>
    %cst_57 = arith.constant 3.200000e+01 : f32
    %151 = vector.broadcast %cst_57 : f32 to vector<16x1xf32>
    %152 = arith.divf %150, %151 : vector<16x1xf32>
    %cst_58 = arith.constant 9.99999997E-7 : f32
    %153 = vector.broadcast %cst_58 : f32 to vector<16x1xf32>
    %154 = arith.addf %152, %153 : vector<16x1xf32>
    %155 = math.rsqrt %154 : vector<16x1xf32>
    %156 = vector.broadcast %155 : vector<16x1xf32> to vector<16x32xf32>
    %157 = arith.mulf %145, %156 : vector<16x32xf32>
    %cst_59 = arith.constant 1.000000e+00 : f32
    %158 = vector.broadcast %cst_59 : f32 to vector<1x32xf32>
    %159 = arith.addf %158, %147 : vector<1x32xf32>
    %160 = vector.broadcast %159 : vector<1x32xf32> to vector<16x32xf32>
    %161 = arith.mulf %157, %160 : vector<16x32xf32>
    %c1_60 = arith.constant 1 : index
    %c0_61 = arith.constant 0 : index
    %c0_62 = arith.constant 0 : index
    %162 = vector.load %arg6[%c1_60, %c0_61, %c0_62] : memref<2x32x128xf32, #tpu.memory_space<vmem>>, vector<1x32x128xf32>
    %163 = vector.shape_cast %162 : vector<1x32x128xf32> to vector<32x128xf32>
    %cst_63 = arith.constant dense<0.000000e+00> : vector<16x128xf32>
    %164 = tpu.matmul %161, %163, %cst_63 {dimension_numbers = #tpu.dot_dimension_numbers<[1], [0], [0], [1], [0, 0, 1, 1], [], []>} : vector<16x32xf32>, vector<32x128xf32>, vector<16x128xf32> -> vector<16x128xf32>
    %165 = vector.extract_strided_slice %164 {offsets = [0, 0], sizes = [8, 16], strides = [1, 1]} : vector<16x128xf32> to vector<8x16xf32>
    %166 = vector.extract_strided_slice %164 {offsets = [0, 64], sizes = [8, 16], strides = [1, 1]} : vector<16x128xf32> to vector<8x16xf32>
    %167 = vector.extract_strided_slice %164 {offsets = [0, 96], sizes = [8, 16], strides = [1, 1]} : vector<16x128xf32> to vector<8x16xf32>
    %168 = vector.extract_strided_slice %164 {offsets = [0, 16], sizes = [8, 16], strides = [1, 1]} : vector<16x128xf32> to vector<8x16xf32>
    %169 = vector.extract_strided_slice %164 {offsets = [0, 64], sizes = [8, 16], strides = [1, 1]} : vector<16x128xf32> to vector<8x16xf32>
    %170 = vector.extract_strided_slice %164 {offsets = [0, 96], sizes = [8, 16], strides = [1, 1]} : vector<16x128xf32> to vector<8x16xf32>
    %171 = vector.extract_strided_slice %164 {offsets = [0, 32], sizes = [8, 16], strides = [1, 1]} : vector<16x128xf32> to vector<8x16xf32>
    %172 = vector.extract_strided_slice %164 {offsets = [0, 80], sizes = [8, 16], strides = [1, 1]} : vector<16x128xf32> to vector<8x16xf32>
    %173 = vector.extract_strided_slice %164 {offsets = [0, 112], sizes = [8, 16], strides = [1, 1]} : vector<16x128xf32> to vector<8x16xf32>
    %174 = vector.extract_strided_slice %164 {offsets = [0, 48], sizes = [8, 16], strides = [1, 1]} : vector<16x128xf32> to vector<8x16xf32>
    %175 = vector.extract_strided_slice %164 {offsets = [0, 80], sizes = [8, 16], strides = [1, 1]} : vector<16x128xf32> to vector<8x16xf32>
    %176 = vector.extract_strided_slice %164 {offsets = [0, 112], sizes = [8, 16], strides = [1, 1]} : vector<16x128xf32> to vector<8x16xf32>
    %177 = vector.extract_strided_slice %164 {offsets = [8, 0], sizes = [8, 16], strides = [1, 1]} : vector<16x128xf32> to vector<8x16xf32>
    %178 = vector.extract_strided_slice %164 {offsets = [8, 64], sizes = [8, 16], strides = [1, 1]} : vector<16x128xf32> to vector<8x16xf32>
    %179 = vector.extract_strided_slice %164 {offsets = [8, 96], sizes = [8, 16], strides = [1, 1]} : vector<16x128xf32> to vector<8x16xf32>
    %180 = vector.extract_strided_slice %164 {offsets = [8, 16], sizes = [8, 16], strides = [1, 1]} : vector<16x128xf32> to vector<8x16xf32>
    %181 = vector.extract_strided_slice %164 {offsets = [8, 64], sizes = [8, 16], strides = [1, 1]} : vector<16x128xf32> to vector<8x16xf32>
    %182 = vector.extract_strided_slice %164 {offsets = [8, 96], sizes = [8, 16], strides = [1, 1]} : vector<16x128xf32> to vector<8x16xf32>
    %183 = vector.extract_strided_slice %164 {offsets = [8, 32], sizes = [8, 16], strides = [1, 1]} : vector<16x128xf32> to vector<8x16xf32>
    %184 = vector.extract_strided_slice %164 {offsets = [8, 80], sizes = [8, 16], strides = [1, 1]} : vector<16x128xf32> to vector<8x16xf32>
    %185 = vector.extract_strided_slice %164 {offsets = [8, 112], sizes = [8, 16], strides = [1, 1]} : vector<16x128xf32> to vector<8x16xf32>
    %186 = vector.extract_strided_slice %164 {offsets = [8, 48], sizes = [8, 16], strides = [1, 1]} : vector<16x128xf32> to vector<8x16xf32>
    %187 = vector.extract_strided_slice %164 {offsets = [8, 80], sizes = [8, 16], strides = [1, 1]} : vector<16x128xf32> to vector<8x16xf32>
    %188 = vector.extract_strided_slice %164 {offsets = [8, 112], sizes = [8, 16], strides = [1, 1]} : vector<16x128xf32> to vector<8x16xf32>
    %189 = tpu.concatenate %165, %168, %171, %174, %177, %180, %183, %186 in 0 : vector<8x16xf32>, vector<8x16xf32>, vector<8x16xf32>, vector<8x16xf32>, vector<8x16xf32>, vector<8x16xf32>, vector<8x16xf32>, vector<8x16xf32> -> vector<64x16xf32>
    %190 = tpu.concatenate %166, %169, %172, %175, %178, %181, %184, %187 in 0 : vector<8x16xf32>, vector<8x16xf32>, vector<8x16xf32>, vector<8x16xf32>, vector<8x16xf32>, vector<8x16xf32>, vector<8x16xf32>, vector<8x16xf32> -> vector<64x16xf32>
    %191 = tpu.concatenate %167, %170, %173, %176, %179, %182, %185, %188 in 0 : vector<8x16xf32>, vector<8x16xf32>, vector<8x16xf32>, vector<8x16xf32>, vector<8x16xf32>, vector<8x16xf32>, vector<8x16xf32>, vector<8x16xf32> -> vector<64x16xf32>
    %192 = arith.mulf %189, %3 : vector<64x16xf32>
    %193 = vector.extract_strided_slice %189 {offsets = [0, 8], sizes = [64, 8], strides = [1, 1]} : vector<64x16xf32> to vector<64x8xf32>
    %cst_64 = arith.constant 0.000000e+00 : f32
    %194 = vector.broadcast %cst_64 : f32 to vector<64x8xf32>
    %195 = arith.subf %194, %193 : vector<64x8xf32>
    %196 = vector.extract_strided_slice %189 {offsets = [0, 0], sizes = [64, 8], strides = [1, 1]} : vector<64x16xf32> to vector<64x8xf32>
    %197 = tpu.concatenate %195, %196 in 1 : vector<64x8xf32>, vector<64x8xf32> -> vector<64x16xf32>
    %198 = arith.mulf %197, %4 : vector<64x16xf32>
    %199 = arith.addf %192, %198 : vector<64x16xf32>
    %200 = arith.mulf %190, %3 : vector<64x16xf32>
    %201 = vector.extract_strided_slice %190 {offsets = [0, 8], sizes = [64, 8], strides = [1, 1]} : vector<64x16xf32> to vector<64x8xf32>
    %cst_65 = arith.constant 0.000000e+00 : f32
    %202 = vector.broadcast %cst_65 : f32 to vector<64x8xf32>
    %203 = arith.subf %202, %201 : vector<64x8xf32>
    %204 = vector.extract_strided_slice %190 {offsets = [0, 0], sizes = [64, 8], strides = [1, 1]} : vector<64x16xf32> to vector<64x8xf32>
    %205 = tpu.concatenate %203, %204 in 1 : vector<64x8xf32>, vector<64x8xf32> -> vector<64x16xf32>
    %206 = arith.mulf %205, %4 : vector<64x16xf32>
    %207 = arith.addf %200, %206 : vector<64x16xf32>
    %208 = tpu.transpose %207, [1, 0] : vector<64x16xf32> -> vector<16x64xf32>
    %cst_66 = arith.constant dense<0.000000e+00> : vector<64x64xf32>
    %209 = tpu.matmul %199, %208, %cst_66 {dimension_numbers = #tpu.dot_dimension_numbers<[1], [0], [0], [1], [0, 0, 1, 1], [], []>} : vector<64x16xf32>, vector<16x64xf32>, vector<64x64xf32> -> vector<64x64xf32>
    %cst_67 = arith.constant 2.500000e-01 : f32
    %210 = vector.broadcast %cst_67 : f32 to vector<64x64xf32>
    %211 = arith.mulf %209, %210 : vector<64x64xf32>
    %212 = arith.addf %211, %5 : vector<64x64xf32>
    %cst_68 = arith.constant dense<0xFF800000> : vector<64xf32>
    %213 = vector.multi_reduction <maximumf>, %212, %cst_68 [1] : vector<64x64xf32> to vector<64xf32>
    %214 = vector.shape_cast %213 : vector<64xf32> to vector<64x1xf32>
    %215 = vector.broadcast %214 : vector<64x1xf32> to vector<64x64xf32>
    %216 = arith.subf %212, %215 : vector<64x64xf32>
    %217 = math.exp %216 : vector<64x64xf32>
    %cst_69 = arith.constant dense<0.000000e+00> : vector<64xf32>
    %218 = vector.multi_reduction <add>, %217, %cst_69 [1] : vector<64x64xf32> to vector<64xf32>
    %219 = vector.shape_cast %218 : vector<64xf32> to vector<64x1xf32>
    %220 = tpu.reciprocal %219 {approx = true} : vector<64x1xf32> -> vector<64x1xf32>
    %221 = vector.broadcast %220 : vector<64x1xf32> to vector<64x64xf32>
    %222 = arith.mulf %217, %221 : vector<64x64xf32>
    %cst_70 = arith.constant dense<0.000000e+00> : vector<64x16xf32>
    %223 = tpu.matmul %222, %191, %cst_70 {dimension_numbers = #tpu.dot_dimension_numbers<[1], [0], [0], [1], [0, 0, 1, 1], [], []>} : vector<64x64xf32>, vector<64x16xf32>, vector<64x16xf32> -> vector<64x16xf32>
    %224 = vector.extract_strided_slice %223 {offsets = [0, 0], sizes = [8, 16], strides = [1, 1]} : vector<64x16xf32> to vector<8x16xf32>
    %225 = vector.extract_strided_slice %223 {offsets = [8, 0], sizes = [8, 16], strides = [1, 1]} : vector<64x16xf32> to vector<8x16xf32>
    %226 = vector.extract_strided_slice %223 {offsets = [16, 0], sizes = [8, 16], strides = [1, 1]} : vector<64x16xf32> to vector<8x16xf32>
    %227 = vector.extract_strided_slice %223 {offsets = [24, 0], sizes = [8, 16], strides = [1, 1]} : vector<64x16xf32> to vector<8x16xf32>
    %228 = tpu.concatenate %224, %225, %226, %227 in 1 : vector<8x16xf32>, vector<8x16xf32>, vector<8x16xf32>, vector<8x16xf32> -> vector<8x64xf32>
    %229 = vector.extract_strided_slice %223 {offsets = [32, 0], sizes = [8, 16], strides = [1, 1]} : vector<64x16xf32> to vector<8x16xf32>
    %230 = vector.extract_strided_slice %223 {offsets = [40, 0], sizes = [8, 16], strides = [1, 1]} : vector<64x16xf32> to vector<8x16xf32>
    %231 = vector.extract_strided_slice %223 {offsets = [48, 0], sizes = [8, 16], strides = [1, 1]} : vector<64x16xf32> to vector<8x16xf32>
    %232 = vector.extract_strided_slice %223 {offsets = [56, 0], sizes = [8, 16], strides = [1, 1]} : vector<64x16xf32> to vector<8x16xf32>
    %233 = tpu.concatenate %229, %230, %231, %232 in 1 : vector<8x16xf32>, vector<8x16xf32>, vector<8x16xf32>, vector<8x16xf32> -> vector<8x64xf32>
    %234 = tpu.concatenate %228, %233 in 0 : vector<8x64xf32>, vector<8x64xf32> -> vector<16x64xf32>
    %c1_71 = arith.constant 1 : index
    %c0_72 = arith.constant 0 : index
    %c0_73 = arith.constant 0 : index
    %235 = vector.load %arg7[%c1_71, %c0_72, %c0_73] : memref<2x64x32xf32, #tpu.memory_space<vmem>>, vector<1x64x32xf32>
    %236 = vector.shape_cast %235 : vector<1x64x32xf32> to vector<64x32xf32>
    %cst_74 = arith.constant dense<0.000000e+00> : vector<16x32xf32>
    %237 = tpu.matmul %234, %236, %cst_74 {dimension_numbers = #tpu.dot_dimension_numbers<[1], [0], [0], [1], [0, 0, 1, 1], [], []>} : vector<16x64xf32>, vector<64x32xf32>, vector<16x32xf32> -> vector<16x32xf32>
    %238 = arith.addf %145, %237 : vector<16x32xf32>
    %c1_75 = arith.constant 1 : index
    %c0_76 = arith.constant 0 : index
    %c0_77 = arith.constant 0 : index
    %239 = vector.load %arg5[%c1_75, %c0_76, %c0_77] : memref<2x1x32xf32, #tpu.memory_space<vmem>>, vector<1x1x32xf32>
    %240 = vector.shape_cast %239 : vector<1x1x32xf32> to vector<1x32xf32>
    %241 = arith.mulf %238, %238 : vector<16x32xf32>
    %cst_78 = arith.constant dense<0.000000e+00> : vector<16xf32>
    %242 = vector.multi_reduction <add>, %241, %cst_78 [1] : vector<16x32xf32> to vector<16xf32>
    %243 = vector.shape_cast %242 : vector<16xf32> to vector<16x1xf32>
    %cst_79 = arith.constant 3.200000e+01 : f32
    %244 = vector.broadcast %cst_79 : f32 to vector<16x1xf32>
    %245 = arith.divf %243, %244 : vector<16x1xf32>
    %cst_80 = arith.constant 9.99999997E-7 : f32
    %246 = vector.broadcast %cst_80 : f32 to vector<16x1xf32>
    %247 = arith.addf %245, %246 : vector<16x1xf32>
    %248 = math.rsqrt %247 : vector<16x1xf32>
    %249 = vector.broadcast %248 : vector<16x1xf32> to vector<16x32xf32>
    %250 = arith.mulf %238, %249 : vector<16x32xf32>
    %cst_81 = arith.constant 1.000000e+00 : f32
    %251 = vector.broadcast %cst_81 : f32 to vector<1x32xf32>
    %252 = arith.addf %251, %240 : vector<1x32xf32>
    %253 = vector.broadcast %252 : vector<1x32xf32> to vector<16x32xf32>
    %254 = arith.mulf %250, %253 : vector<16x32xf32>
    %c1_82 = arith.constant 1 : index
    %c0_83 = arith.constant 0 : index
    %c0_84 = arith.constant 0 : index
    %255 = vector.load %arg8[%c1_82, %c0_83, %c0_84] : memref<2x32x128xf32, #tpu.memory_space<vmem>>, vector<1x32x128xf32>
    %256 = vector.shape_cast %255 : vector<1x32x128xf32> to vector<32x128xf32>
    %cst_85 = arith.constant dense<0.000000e+00> : vector<16x128xf32>
    %257 = tpu.matmul %254, %256, %cst_85 {dimension_numbers = #tpu.dot_dimension_numbers<[1], [0], [0], [1], [0, 0, 1, 1], [], []>} : vector<16x32xf32>, vector<32x128xf32>, vector<16x128xf32> -> vector<16x128xf32>
    %c1_86 = arith.constant 1 : index
    %c0_87 = arith.constant 0 : index
    %c0_88 = arith.constant 0 : index
    %258 = vector.load %arg9[%c1_86, %c0_87, %c0_88] : memref<2x1x128xf32, #tpu.memory_space<vmem>>, vector<1x1x128xf32>
    %259 = vector.shape_cast %258 : vector<1x1x128xf32> to vector<1x128xf32>
    %260 = vector.broadcast %259 : vector<1x128xf32> to vector<16x128xf32>
    %261 = arith.addf %257, %260 : vector<16x128xf32>
    %262 = vector.extract_strided_slice %261 {offsets = [0, 0], sizes = [16, 64], strides = [1, 1]} : vector<16x128xf32> to vector<16x64xf32>
    %263 = vector.extract_strided_slice %261 {offsets = [0, 64], sizes = [16, 64], strides = [1, 1]} : vector<16x128xf32> to vector<16x64xf32>
    %cst_89 = arith.constant 5.000000e-01 : f32
    %264 = vector.broadcast %cst_89 : f32 to vector<16x64xf32>
    %265 = arith.mulf %264, %262 : vector<16x64xf32>
    %cst_90 = arith.constant 4.471500e-02 : f32
    %266 = vector.broadcast %cst_90 : f32 to vector<16x64xf32>
    %267 = arith.mulf %266, %262 : vector<16x64xf32>
    %268 = arith.mulf %267, %262 : vector<16x64xf32>
    %269 = arith.mulf %268, %262 : vector<16x64xf32>
    %270 = arith.addf %262, %269 : vector<16x64xf32>
    %cst_91 = arith.constant 0.797884583 : f32
    %271 = vector.broadcast %cst_91 : f32 to vector<16x64xf32>
    %272 = arith.mulf %271, %270 : vector<16x64xf32>
    %273 = math.tanh %272 : vector<16x64xf32>
    %cst_92 = arith.constant 1.000000e+00 : f32
    %274 = vector.broadcast %cst_92 : f32 to vector<16x64xf32>
    %275 = arith.addf %274, %273 : vector<16x64xf32>
    %276 = arith.mulf %265, %275 : vector<16x64xf32>
    %277 = arith.mulf %276, %263 : vector<16x64xf32>
    %c1_93 = arith.constant 1 : index
    %c0_94 = arith.constant 0 : index
    %c0_95 = arith.constant 0 : index
    %278 = vector.load %arg10[%c1_93, %c0_94, %c0_95] : memref<2x64x32xf32, #tpu.memory_space<vmem>>, vector<1x64x32xf32>
    %279 = vector.shape_cast %278 : vector<1x64x32xf32> to vector<64x32xf32>
    %cst_96 = arith.constant dense<0.000000e+00> : vector<16x32xf32>
    %280 = tpu.matmul %277, %279, %cst_96 {dimension_numbers = #tpu.dot_dimension_numbers<[1], [0], [0], [1], [0, 0, 1, 1], [], []>} : vector<16x64xf32>, vector<64x32xf32>, vector<16x32xf32> -> vector<16x32xf32>
    %c1_97 = arith.constant 1 : index
    %c0_98 = arith.constant 0 : index
    %c0_99 = arith.constant 0 : index
    %281 = vector.load %arg11[%c1_97, %c0_98, %c0_99] : memref<2x1x32xf32, #tpu.memory_space<vmem>>, vector<1x1x32xf32>
    %282 = vector.shape_cast %281 : vector<1x1x32xf32> to vector<1x32xf32>
    %283 = vector.broadcast %282 : vector<1x32xf32> to vector<16x32xf32>
    %284 = arith.addf %280, %283 : vector<16x32xf32>
    %285 = arith.addf %238, %284 : vector<16x32xf32>
    %c0_100 = arith.constant 0 : index
    %c0_101 = arith.constant 0 : index
    %286 = vector.load %arg12[%c0_100, %c0_101] : memref<1x32xf32, #tpu.memory_space<vmem>>, vector<1x32xf32>
    %287 = arith.mulf %285, %285 : vector<16x32xf32>
    %cst_102 = arith.constant dense<0.000000e+00> : vector<16xf32>
    %288 = vector.multi_reduction <add>, %287, %cst_102 [1] : vector<16x32xf32> to vector<16xf32>
    %289 = vector.shape_cast %288 : vector<16xf32> to vector<16x1xf32>
    %cst_103 = arith.constant 3.200000e+01 : f32
    %290 = vector.broadcast %cst_103 : f32 to vector<16x1xf32>
    %291 = arith.divf %289, %290 : vector<16x1xf32>
    %cst_104 = arith.constant 9.99999997E-7 : f32
    %292 = vector.broadcast %cst_104 : f32 to vector<16x1xf32>
    %293 = arith.addf %291, %292 : vector<16x1xf32>
    %294 = math.rsqrt %293 : vector<16x1xf32>
    %295 = vector.broadcast %294 : vector<16x1xf32> to vector<16x32xf32>
    %296 = arith.mulf %285, %295 : vector<16x32xf32>
    %cst_105 = arith.constant 1.000000e+00 : f32
    %297 = vector.broadcast %cst_105 : f32 to vector<1x32xf32>
    %298 = arith.addf %297, %286 : vector<1x32xf32>
    %299 = vector.broadcast %298 : vector<1x32xf32> to vector<16x32xf32>
    %300 = arith.mulf %296, %299 : vector<16x32xf32>
    %c0_106 = arith.constant 0 : index
    %c0_107 = arith.constant 0 : index
    %301 = vector.load %arg13[%c0_106, %c0_107] : memref<16x32xf32, #tpu.memory_space<vmem>>, vector<16x32xf32>
    tpu.vector_store %arg13[%c0_106, %c0_107], %300 {strides = array<i32>} : memref<16x32xf32, #tpu.memory_space<vmem>>, vector<16x32xf32>,
    return
  }
}

</mosaic_0001>

<llo_original>
// kernel: tile.8
$region0: #{tile.8}
  #allocation0 [shape = 's32[1]{0}', space=sflag, size = 0x4, scoped, tag = 'scoped memory for tile.8']
  %s0 = inlined_call_operand.vmem [shape: f32[8,8], index: 0, kind: input, shape index: {}]
  %s1 = inlined_call_operand.vmem [shape: f32[8,8,8,8], index: 1, kind: output, shape index: {}]
  // Predicated region
  $region2: #{tile.8} parent=0 // pred_check
    _
  $region3: #{tile.8} parent=0 // pred_check_branch
    %3 = sbr.rel (0) target = $region5
  $region4: #{tile.8} parent=0 // pred_region
    _
  $region5: #{tile.8} parent=0 // pred_fallthru
    _
  %v4 = vld [vmem:[%s0] ss:$0 sm:$0xff]
  %5 = vst [vmem:[%s1] sm:$0xff] %v4
  %s6 = scalar_lea.vmem %s1, 64
  %7 = vst [vmem:[%s6] sm:$0xff] %v4
  %s8 = scalar_lea.vmem %s1, 128
  %9 = vst [vmem:[%s8] sm:$0xff] %v4
  %s10 = scalar_lea.vmem %s1, 192
  %11 = vst [vmem:[%s10] sm:$0xff] %v4
  %s12 = scalar_lea.vmem %s1, 256
  %13 = vst [vmem:[%s12] sm:$0xff] %v4
  %s14 = scalar_lea.vmem %s1, 320
  %15 = vst [vmem:[%s14] sm:$0xff] %v4
  %s16 = scalar_lea.vmem %s1, 384
  %17 = vst [vmem:[%s16] sm:$0xff] %v4
  %s18 = scalar_lea.vmem %s1, 448
  %19 = vst [vmem:[%s18] sm:$0xff] %v4
  %s20 = scalar_lea.vmem %s0, 1
  %v21 = vld [vmem:[%s20] ss:$0 sm:$0xff]
  %s22 = scalar_lea.vmem %s1, 8
  %23 = vst [vmem:[%s22] sm:$0xff] %v21
  %s24 = scalar_lea.vmem %s1, 72
  %25 = vst [vmem:[%s24] sm:$0xff] %v21
  %s26 = scalar_lea.vmem %s1, 136
  %27 = vst [vmem:[%s26] sm:$0xff] %v21
  %s28 = scalar_lea.vmem %s1, 200
  %29 = vst [vmem:[%s28] sm:$0xff] %v21
  %s30 = scalar_lea.vmem %s1, 264
  %31 = vst [vmem:[%s30] sm:$0xff] %v21
  %s32 = scalar_lea.vmem %s1, 328
  %33 = vst [vmem:[%s32] sm:$0xff] %v21
  %s34 = scalar_lea.vmem %s1, 392
  %35 = vst [vmem:[%s34] sm:$0xff] %v21
  %s36 = scalar_lea.vmem %s1, 456
  %37 = vst [vmem:[%s36] sm:$0xff] %v21
  %s38 = scalar_lea.vmem %s0, 2
  %v39 = vld [vmem:[%s38] ss:$0 sm:$0xff]
  %s40 = scalar_lea.vmem %s1, 16
  %41 = vst [vmem:[%s40] sm:$0xff] %v39
  %s42 = scalar_lea.vmem %s1, 80
  %43 = vst [vmem:[%s42] sm:$0xff] %v39
  %s44 = scalar_lea.vmem %s1, 144
  %45 = vst [vmem:[%s44] sm:$0xff] %v39
  %s46 = scalar_lea.vmem %s1, 208
  %47 = vst [vmem:[%s46] sm:$0xff] %v39
  %s48 = scalar_lea.vmem %s1, 272
  %49 = vst [vmem:[%s48] sm:$0xff] %v39
  %s50 = scalar_lea.vmem %s1, 336
  %51 = vst [vmem:[%s50] sm:$0xff] %v39
  %s52 = scalar_lea.vmem %s1, 400
  %53 = vst [vmem:[%s52] sm:$0xff] %v39
  %s54 = scalar_lea.vmem %s1, 464
  %55 = vst [vmem:[%s54] sm:$0xff] %v39
  %s56 = scalar_lea.vmem %s0, 3
  %v57 = vld [vmem:[%s56] ss:$0 sm:$0xff]
  %s58 = scalar_lea.vmem %s1, 24
  %59 = vst [vmem:[%s58] sm:$0xff] %v57
  %s60 = scalar_lea.vmem %s1, 88
  %61 = vst [vmem:[%s60] sm:$0xff] %v57
  %s62 = scalar_lea.vmem %s1, 152
  %63 = vst [vmem:[%s62] sm:$0xff] %v57
  %s64 = scalar_lea.vmem %s1, 216
  %65 = vst [vmem:[%s64] sm:$0xff] %v57
  %s66 = scalar_lea.vmem %s1, 280
  %67 = vst [vmem:[%s66] sm:$0xff] %v57
  %s68 = scalar_lea.vmem %s1, 344
  %69 = vst [vmem:[%s68] sm:$0xff] %v57
  %s70 = scalar_lea.vmem %s1, 408
  %71 = vst [vmem:[%s70] sm:$0xff] %v57
  %s72 = scalar_lea.vmem %s1, 472
  %73 = vst [vmem:[%s72] sm:$0xff] %v57
  %s74 = scalar_lea.vmem %s0, 4
  %v75 = vld [vmem:[%s74] ss:$0 sm:$0xff]
  %s76 = scalar_lea.vmem %s1, 32
  %77 = vst [vmem:[%s76] sm:$0xff] %v75
  %s78 = scalar_lea.vmem %s1, 96
  %79 = vst [vmem:[%s78] sm:$0xff] %v75
  %s80 = scalar_lea.vmem %s1, 160
  %81 = vst [vmem:[%s80] sm:$0xff] %v75
  %s82 = scalar_lea.vmem %s1, 224
  %83 = vst [vmem:[%s82] sm:$0xff] %v75
  %s84 = scalar_lea.vmem %s1, 288
  %85 = vst [vmem:[%s84] sm:$0xff] %v75
  %s86 = scalar_lea.vmem %s1, 352
  %87 = vst [vmem:[%s86] sm:$0xff] %v75
  %s88 = scalar_lea.vmem %s1, 416
  %89 = vst [vmem:[%s88] sm:$0xff] %v75
  %s90 = scalar_lea.vmem %s1, 480
  %91 = vst [vmem:[%s90] sm:$0xff] %v75
  %s92 = scalar_lea.vmem %s0, 5
  %v93 = vld [vmem:[%s92] ss:$0 sm:$0xff]
  %s94 = scalar_lea.vmem %s1, 40
  %95 = vst [vmem:[%s94] sm:$0xff] %v93
  %s96 = scalar_lea.vmem %s1, 104
  %97 = vst [vmem:[%s96] sm:$0xff] %v93
  %s98 = scalar_lea.vmem %s1, 168
  %99 = vst [vmem:[%s98] sm:$0xff] %v93
  %s100 = scalar_lea.vmem %s1, 232
  %101 = vst [vmem:[%s100] sm:$0xff] %v93
  %s102 = scalar_lea.vmem %s1, 296
  %103 = vst [vmem:[%s102] sm:$0xff] %v93
  %s104 = scalar_lea.vmem %s1, 360
  %105 = vst [vmem:[%s104] sm:$0xff] %v93
  %s106 = scalar_lea.vmem %s1, 424
  %107 = vst [vmem:[%s106] sm:$0xff] %v93
  %s108 = scalar_lea.vmem %s1, 488
  %109 = vst [vmem:[%s108] sm:$0xff] %v93
  %s110 = scalar_lea.vmem %s0, 6
  %v111 = vld [vmem:[%s110] ss:$0 sm:$0xff]
  %s112 = scalar_lea.vmem %s1, 48
  %113 = vst [vmem:[%s112] sm:$0xff] %v111
  %s114 = scalar_lea.vmem %s1, 112
  %115 = vst [vmem:[%s114] sm:$0xff] %v111
  %s116 = scalar_lea.vmem %s1, 176
  %117 = vst [vmem:[%s116] sm:$0xff] %v111
  %s118 = scalar_lea.vmem %s1, 240
  %119 = vst [vmem:[%s118] sm:$0xff] %v111
  %s120 = scalar_lea.vmem %s1, 304
  %121 = vst [vmem:[%s120] sm:$0xff] %v111
  %s122 = scalar_lea.vmem %s1, 368
  %123 = vst [vmem:[%s122] sm:$0xff] %v111
  %s124 = scalar_lea.vmem %s1, 432
  %125 = vst [vmem:[%s124] sm:$0xff] %v111
  %s126 = scalar_lea.vmem %s1, 496
  %127 = vst [vmem:[%s126] sm:$0xff] %v111
  %s128 = scalar_lea.vmem %s0, 7
  %v129 = vld [vmem:[%s128] ss:$0 sm:$0xff]
  %s130 = scalar_lea.vmem %s1, 56
  %131 = vst [vmem:[%s130] sm:$0xff] %v129
  %s132 = scalar_lea.vmem %s1, 120
  %133 = vst [vmem:[%s132] sm:$0xff] %v129
  %s134 = scalar_lea.vmem %s1, 184
  %135 = vst [vmem:[%s134] sm:$0xff] %v129
  %s136 = scalar_lea.vmem %s1, 248
  %137 = vst [vmem:[%s136] sm:$0xff] %v129
  %s138 = scalar_lea.vmem %s1, 312
  %139 = vst [vmem:[%s138] sm:$0xff] %v129
  %s140 = scalar_lea.vmem %s1, 376
  %141 = vst [vmem:[%s140] sm:$0xff] %v129
  %s142 = scalar_lea.vmem %s1, 440
  %143 = vst [vmem:[%s142] sm:$0xff] %v129
  %s144 = scalar_lea.vmem %s1, 504
  %145 = vst [vmem:[%s144] sm:$0xff] %v129

// kernel: tile.9
$region0: #{tile.9}
  %s0 = inlined_call_operand.vmem [shape: f32[8,8,8,8], index: 0, kind: input, shape index: {}]
  %s1 = inlined_call_operand.vmem [shape: f32[64,64], index: 1, kind: output, shape index: {}]
  %v2 = vld [vmem:[%s0] ss:$8 sm:$0xf]
  %v3 = vld [vmem:[%s0] ss:$8 sm:$0xf0]
  %vm4 = vcmask 1047556
  %v5 = vsel %vm4, %v3, %v2
  %vm6 = vcmask 64512
  %7 = vst.msk [vmem:[%s1] sm:$0xff] %vm6, %v5
  %s8 = scalar_lea.vmem %s0, 64
  %v9 = vld [vmem:[%s8] ss:$8 sm:$0xf]
  %s10 = scalar_lea.vmem %s0, 64
  %v11 = vld [vmem:[%s10] ss:$8 sm:$0xf0]
  %vm12 = vcmask 1047556
  %v13 = vsel %vm12, %v11, %v9
  %vm14 = vcmask 64512
  %s15 = scalar_lea.vmem %s1, 8
  %16 = vst.msk [vmem:[%s15] sm:$0xff] %vm14, %v13
  %s17 = scalar_lea.vmem %s0, 128
  %v18 = vld [vmem:[%s17] ss:$8 sm:$0xf]
  %s19 = scalar_lea.vmem %s0, 128
  %v20 = vld [vmem:[%s19] ss:$8 sm:$0xf0]
  %vm21 = vcmask 1047556
  %v22 = vsel %vm21, %v20, %v18
  %vm23 = vcmask 64512
  %s24 = scalar_lea.vmem %s1, 16
  %25 = vst.msk [vmem:[%s24] sm:$0xff] %vm23, %v22
  %s26 = scalar_lea.vmem %s0, 192
  %v27 = vld [vmem:[%s26] ss:$8 sm:$0xf]
  %s28 = scalar_lea.vmem %s0, 192
  %v29 = vld [vmem:[%s28] ss:$8 sm:$0xf0]
  %vm30 = vcmask 1047556
  %v31 = vsel %vm30, %v29, %v27
  %vm32 = vcmask 64512
  %s33 = scalar_lea.vmem %s1, 24
  %34 = vst.msk [vmem:[%s33] sm:$0xff] %vm32, %v31
  %s35 = scalar_lea.vmem %s0, 256
  %v36 = vld [vmem:[%s35] ss:$8 sm:$0xf]
  %s37 = scalar_lea.vmem %s0, 256
  %v38 = vld [vmem:[%s37] ss:$8 sm:$0xf0]
  %vm39 = vcmask 1047556
  %v40 = vsel %vm39, %v38, %v36
  %vm41 = vcmask 64512
  %s42 = scalar_lea.vmem %s1, 32
  %43 = vst.msk [vmem:[%s42] sm:$0xff] %vm41, %v40
  %s44 = scalar_lea.vmem %s0, 320
  %v45 = vld [vmem:[%s44] ss:$8 sm:$0xf]
  %s46 = scalar_lea.vmem %s0, 320
  %v47 = vld [vmem:[%s46] ss:$8 sm:$0xf0]
  %vm48 = vcmask 1047556
  %v49 = vsel %vm48, %v47, %v45
  %vm50 = vcmask 64512
  %s51 = scalar_lea.vmem %s1, 40
  %52 = vst.msk [vmem:[%s51] sm:$0xff] %vm50, %v49
  %s53 = scalar_lea.vmem %s0, 384
  %v54 = vld [vmem:[%s53] ss:$8 sm:$0xf]
  %s55 = scalar_lea.vmem %s0, 384
  %v56 = vld [vmem:[%s55] ss:$8 sm:$0xf0]
  %vm57 = vcmask 1047556
  %v58 = vsel %vm57, %v56, %v54
  %vm59 = vcmask 64512
  %s60 = scalar_lea.vmem %s1, 48
  %61 = vst.msk [vmem:[%s60] sm:$0xff] %vm59, %v58
  %s62 = scalar_lea.vmem %s0, 448
  %v63 = vld [vmem:[%s62] ss:$8 sm:$0xf]
  %s64 = scalar_lea.vmem %s0, 448
  %v65 = vld [vmem:[%s64] ss:$8 sm:$0xf0]
  %vm66 = vcmask 1047556
  %v67 = vsel %vm66, %v65, %v63
  %vm68 = vcmask 64512
  %s69 = scalar_lea.vmem %s1, 56
  %70 = vst.msk [vmem:[%s69] sm:$0xff] %vm68, %v67
  %s71 = scalar_lea.vmem %s0, 7
  %v72 = vld [vmem:[%s71] ss:$8 sm:$0xf]
  %s73 = scalar_lea.vmem %s0, 7
  %v74 = vld [vmem:[%s73] ss:$8 sm:$0xf0]
  %vm75 = vcmask 1047556
  %v76 = vsel %vm75, %v74, %v72
  %77 = vrot.lane.b32.xlu0 %v76, 56
  %v78 = vpop.permute.xlu0 %77
  %vm79 = vcmask 523712
  %80 = vst.msk [vmem:[%s1] sm:$0xff] %vm79, %v78
  %s81 = scalar_lea.vmem %s0, 263
  %v82 = vld [vmem:[%s81] ss:$8 sm:$0xf]
  %s83 = scalar_lea.vmem %s0, 263
  %v84 = vld [vmem:[%s83] ss:$8 sm:$0xf0]
  %vm85 = vcmask 1047556
  %v86 = vsel %vm85, %v84, %v82
  %87 = vrot.lane.b32.xlu0 %v86, 56
  %v88 = vpop.permute.xlu0 %87
  %vm89 = vcmask 523712
  %s90 = scalar_lea.vmem %s1, 32
  %91 = vst.msk [vmem:[%s90] sm:$0xff] %vm89, %v88
  %s92 = scalar_lea.vmem %s0, 71
  %v93 = vld [vmem:[%s92] ss:$8 sm:$0xf]
  %s94 = scalar_lea.vmem %s0, 71
  %v95 = vld [vmem:[%s94] ss:$8 sm:$0xf0]
  %vm96 = vcmask 1047556
  %v97 = vsel %vm96, %v95, %v93
  %98 = vrot.lane.b32.xlu0 %v97, 56
  %v99 = vpop.permute.xlu0 %98
  %vm100 = vcmask 523712
  %s101 = scalar_lea.vmem %s1, 8
  %102 = vst.msk [vmem:[%s101] sm:$0xff] %vm100, %v99
  %s103 = scalar_lea.vmem %s0, 327
  %v104 = vld [vmem:[%s103] ss:$8 sm:$0xf]
  %s105 = scalar_lea.vmem %s0, 327
  %v106 = vld [vmem:[%s105] ss:$8 sm:$0xf0]
  %vm107 = vcmask 1047556
  %v108 = vsel %vm107, %v106, %v104
  %109 = vrot.lane.b32.xlu0 %v108, 56
  %v110 = vpop.permute.xlu0 %109
  %vm111 = vcmask 523712
  %s112 = scalar_lea.vmem %s1, 40
  %113 = vst.msk [vmem:[%s112] sm:$0xff] %vm111, %v110
  %s114 = scalar_lea.vmem %s0, 135
  %v115 = vld [vmem:[%s114] ss:$8 sm:$0xf]
  %s116 = scalar_lea.vmem %s0, 135
  %v117 = vld [vmem:[%s116] ss:$8 sm:$0xf0]
  %vm118 = vcmask 1047556
  %v119 = vsel %vm118, %v117, %v115
  %120 = vrot.lane.b32.xlu0 %v119, 56
  %v121 = vpop.permute.xlu0 %120
  %vm122 = vcmask 523712
  %s123 = scalar_lea.vmem %s1, 16
  %124 = vst.msk [vmem:[%s123] sm:$0xff] %vm122, %v121
  %s125 = scalar_lea.vmem %s0, 391
  %v126 = vld [vmem:[%s125] ss:$8 sm:$0xf]
  %s127 = scalar_lea.vmem %s0, 391
  %v128 = vld [vmem:[%s127] ss:$8 sm:$0xf0]
  %vm129 = vcmask 1047556
  %v130 = vsel %vm129, %v128, %v126
  %131 = vrot.lane.b32.xlu0 %v130, 56
  %v132 = vpop.permute.xlu0 %131
  %vm133 = vcmask 523712
  %s134 = scalar_lea.vmem %s1, 48
  %135 = vst.msk [vmem:[%s134] sm:$0xff] %vm133, %v132
  %s136 = scalar_lea.vmem %s0, 199
  %v137 = vld [vmem:[%s136] ss:$8 sm:$0xf]
  %s138 = scalar_lea.vmem %s0, 199
  %v139 = vld [vmem:[%s138] ss:$8 sm:$0xf0]
  %vm140 = vcmask 1047556
  %v141 = vsel %vm140, %v139, %v137
  %142 = vrot.lane.b32.xlu0 %v141, 56
  %v143 = vpop.permute.xlu0 %142
  %vm144 = vcmask 523712
  %s145 = scalar_lea.vmem %s1, 24
  %146 = vst.msk [vmem:[%s145] sm:$0xff] %vm144, %v143
  %s147 = scalar_lea.vmem %s0, 455
  %v148 = vld [vmem:[%s147] ss:$8 sm:$0xf]
  %s149 = scalar_lea.vmem %s0, 455
  %v150 = vld [vmem:[%s149] ss:$8 sm:$0xf0]
  %vm151 = vcmask 1047556
  %v152 = vsel %vm151, %v150, %v148
  %153 = vrot.lane.b32.xlu0 %v152, 56
  %v154 = vpop.permute.xlu0 %153
  %vm155 = vcmask 523712
  %s156 = scalar_lea.vmem %s1, 56
  %157 = vst.msk [vmem:[%s156] sm:$0xff] %vm155, %v154
  %s158 = scalar_lea.vmem %s0, 6
  %v159 = vld [vmem:[%s158] ss:$8 sm:$0xf]
  %s160 = scalar_lea.vmem %s0, 6
  %v161 = vld [vmem:[%s160] ss:$8 sm:$0xf0]
  %vm162 = vcmask 1047556
  %v163 = vsel %vm162, %v161, %v159
  %164 = vrot.lane.b32.xlu0 %v163, 48
  %v165 = vpop.permute.xlu0 %164
  %vm166 = vcmask 458112
  %167 = vst.msk [vmem:[%s1] sm:$0xff] %vm166, %v165
  %s168 = scalar_lea.vmem %s0, 262
  %v169 = vld [vmem:[%s168] ss:$8 sm:$0xf]
  %s170 = scalar_lea.vmem %s0, 262
  %v171 = vld [vmem:[%s170] ss:$8 sm:$0xf0]
  %vm172 = vcmask 1047556
  %v173 = vsel %vm172, %v171, %v169
  %174 = vrot.lane.b32.xlu0 %v173, 48
  %v175 = vpop.permute.xlu0 %174
  %vm176 = vcmask 458112
  %s177 = scalar_lea.vmem %s1, 32
  %178 = vst.msk [vmem:[%s177] sm:$0xff] %vm176, %v175
  %s179 = scalar_lea.vmem %s0, 70
  %v180 = vld [vmem:[%s179] ss:$8 sm:$0xf]
  %s181 = scalar_lea.vmem %s0, 70
  %v182 = vld [vmem:[%s181] ss:$8 sm:$0xf0]
  %vm183 = vcmask 1047556
  %v184 = vsel %vm183, %v182, %v180
  %185 = vrot.lane.b32.xlu0 %v184, 48
  %v186 = vpop.permute.xlu0 %185
  %vm187 = vcmask 458112
  %s188 = scalar_lea.vmem %s1, 8
  %189 = vst.msk [vmem:[%s188] sm:$0xff] %vm187, %v186
  %s190 = scalar_lea.vmem %s0, 326
  %v191 = vld [vmem:[%s190] ss:$8 sm:$0xf]
  %s192 = scalar_lea.vmem %s0, 326
  %v193 = vld [vmem:[%s192] ss:$8 sm:$0xf0]
  %vm194 = vcmask 1047556
  %v195 = vsel %vm194, %v193, %v191
  %196 = vrot.lane.b32.xlu0 %v195, 48
  %v197 = vpop.permute.xlu0 %196
  %vm198 = vcmask 458112
  %s199 = scalar_lea.vmem %s1, 40
  %200 = vst.msk [vmem:[%s199] sm:$0xff] %vm198, %v197
  %s201 = scalar_lea.vmem %s0, 134
  %v202 = vld [vmem:[%s201] ss:$8 sm:$0xf]
  %s203 = scalar_lea.vmem %s0, 134
  %v204 = vld [vmem:[%s203] ss:$8 sm:$0xf0]
  %vm205 = vcmask 1047556
  %v206 = vsel %vm205, %v204, %v202
  %207 = vrot.lane.b32.xlu0 %v206, 48
  %v208 = vpop.permute.xlu0 %207
  %vm209 = vcmask 458112
  %s210 = scalar_lea.vmem %s1, 16
  %211 = vst.msk [vmem:[%s210] sm:$0xff] %vm209, %v208
  %s212 = scalar_lea.vmem %s0, 390
  %v213 = vld [vmem:[%s212] ss:$8 sm:$0xf]
  %s214 = scalar_lea.vmem %s0, 390
  %v215 = vld [vmem:[%s214] ss:$8 sm:$0xf0]
  %vm216 = vcmask 1047556
  %v217 = vsel %vm216, %v215, %v213
  %218 = vrot.lane.b32.xlu0 %v217, 48
  %v219 = vpop.permute.xlu0 %218
  %vm220 = vcmask 458112
  %s221 = scalar_lea.vmem %s1, 48
  %222 = vst.msk [vmem:[%s221] sm:$0xff] %vm220, %v219
  %s223 = scalar_lea.vmem %s0, 198
  %v224 = vld [vmem:[%s223] ss:$8 sm:$0xf]
  %s225 = scalar_lea.vmem %s0, 198
  %v226 = vld [vmem:[%s225] ss:$8 sm:$0xf0]
  %vm227 = vcmask 1047556
  %v228 = vsel %vm227, %v226, %v224
  %229 = vrot.lane.b32.xlu0 %v228, 48
  %v230 = vpop.permute.xlu0 %229
  %vm231 = vcmask 458112
  %s232 = scalar_lea.vmem %s1, 24
  %233 = vst.msk [vmem:[%s232] sm:$0xff] %vm231, %v230
  %s234 = scalar_lea.vmem %s0, 454
  %v235 = vld [vmem:[%s234] ss:$8 sm:$0xf]
  %s236 = scalar_lea.vmem %s0, 454
  %v237 = vld [vmem:[%s236] ss:$8 sm:$0xf0]
  %vm238 = vcmask 1047556
  %v239 = vsel %vm238, %v237, %v235
  %240 = vrot.lane.b32.xlu0 %v239, 48
  %v241 = vpop.permute.xlu0 %240
  %vm242 = vcmask 458112
  %s243 = scalar_lea.vmem %s1, 56
  %244 = vst.msk [vmem:[%s243] sm:$0xff] %vm242, %v241
  %s245 = scalar_lea.vmem %s0, 5
  %v246 = vld [vmem:[%s245] ss:$8 sm:$0xf]
  %s247 = scalar_lea.vmem %s0, 5
  %v248 = vld [vmem:[%s247] ss:$8 sm:$0xf0]
  %vm249 = vcmask 1047556
  %v250 = vsel %vm249, %v248, %v246
  %251 = vrot.lane.b32.xlu0 %v250, 40
  %v252 = vpop.permute.xlu0 %251
  %vm253 = vcmask 392512
  %254 = vst.msk [vmem:[%s1] sm:$0xff] %vm253, %v252
  %s255 = scalar_lea.vmem %s0, 261
  %v256 = vld [vmem:[%s255] ss:$8 sm:$0xf]
  %s257 = scalar_lea.vmem %s0, 261
  %v258 = vld [vmem:[%s257] ss:$8 sm:$0xf0]
  %vm259 = vcmask 1047556
  %v260 = vsel %vm259, %v258, %v256
  %261 = vrot.lane.b32.xlu0 %v260, 40
  %v262 = vpop.permute.xlu0 %261
  %vm263 = vcmask 392512
  %s264 = scalar_lea.vmem %s1, 32
  %265 = vst.msk [vmem:[%s264] sm:$0xff] %vm263, %v262
  %s266 = scalar_lea.vmem %s0, 69
  %v267 = vld [vmem:[%s266] ss:$8 sm:$0xf]
  %s268 = scalar_lea.vmem %s0, 69
  %v269 = vld [vmem:[%s268] ss:$8 sm:$0xf0]
  %vm270 = vcmask 1047556
  %v271 = vsel %vm270, %v269, %v267
  %272 = vrot.lane.b32.xlu0 %v271, 40
  %v273 = vpop.permute.xlu0 %272
  %vm274 = vcmask 392512
  %s275 = scalar_lea.vmem %s1, 8
  %276 = vst.msk [vmem:[%s275] sm:$0xff] %vm274, %v273
  %s277 = scalar_lea.vmem %s0, 325
  %v278 = vld [vmem:[%s277] ss:$8 sm:$0xf]
  %s279 = scalar_lea.vmem %s0, 325
  %v280 = vld [vmem:[%s279] ss:$8 sm:$0xf0]
  %vm281 = vcmask 1047556
  %v282 = vsel %vm281, %v280, %v278
  %283 = vrot.lane.b32.xlu0 %v282, 40
  %v284 = vpop.permute.xlu0 %283
  %vm285 = vcmask 392512
  %s286 = scalar_lea.vmem %s1, 40
  %287 = vst.msk [vmem:[%s286] sm:$0xff] %vm285, %v284
  %s288 = scalar_lea.vmem %s0, 133
  %v289 = vld [vmem:[%s288] ss:$8 sm:$0xf]
  %s290 = scalar_lea.vmem %s0, 133
  %v291 = vld [vmem:[%s290] ss:$8 sm:$0xf0]
  %vm292 = vcmask 1047556
  %v293 = vsel %vm292, %v291, %v289
  %294 = vrot.lane.b32.xlu0 %v293, 40
  %v295 = vpop.permute.xlu0 %294
  %vm296 = vcmask 392512
  %s297 = scalar_lea.vmem %s1, 16
  %298 = vst.msk [vmem:[%s297] sm:$0xff] %vm296, %v295
  %s299 = scalar_lea.vmem %s0, 389
  %v300 = vld [vmem:[%s299] ss:$8 sm:$0xf]
  %s301 = scalar_lea.vmem %s0, 389
  %v302 = vld [vmem:[%s301] ss:$8 sm:$0xf0]
  %vm303 = vcmask 1047556
  %v304 = vsel %vm303, %v302, %v300
  %305 = vrot.lane.b32.xlu0 %v304, 40
  %v306 = vpop.permute.xlu0 %305
  %vm307 = vcmask 392512
  %s308 = scalar_lea.vmem %s1, 48
  %309 = vst.msk [vmem:[%s308] sm:$0xff] %vm307, %v306
  %s310 = scalar_lea.vmem %s0, 197
  %v311 = vld [vmem:[%s310] ss:$8 sm:$0xf]
  %s312 = scalar_lea.vmem %s0, 197
  %v313 = vld [vmem:[%s312] ss:$8 sm:$0xf0]
  %vm314 = vcmask 1047556
  %v315 = vsel %vm314, %v313, %v311
  %316 = vrot.lane.b32.xlu0 %v315, 40
  %v317 = vpop.permute.xlu0 %316
  %vm318 = vcmask 392512
  %s319 = scalar_lea.vmem %s1, 24
  %320 = vst.msk [vmem:[%s319] sm:$0xff] %vm318, %v317
  %s321 = scalar_lea.vmem %s0, 453
  %v322 = vld [vmem:[%s321] ss:$8 sm:$0xf]
  %s323 = scalar_lea.vmem %s0, 453
  %v324 = vld [vmem:[%s323] ss:$8 sm:$0xf0]
  %vm325 = vcmask 1047556
  %v326 = vsel %vm325, %v324, %v322
  %327 = vrot.lane.b32.xlu0 %v326, 40
  %v328 = vpop.permute.xlu0 %327
  %vm329 = vcmask 392512
  %s330 = scalar_lea.vmem %s1, 56
  %331 = vst.msk [vmem:[%s330] sm:$0xff] %vm329, %v328
  %s332 = scalar_lea.vmem %s0, 4
  %v333 = vld [vmem:[%s332] ss:$8 sm:$0xf]
  %s334 = scalar_lea.vmem %s0, 4
  %v335 = vld [vmem:[%s334] ss:$8 sm:$0xf0]
  %vm336 = vcmask 1047556
  %v337 = vsel %vm336, %v335, %v333
  %338 = vrot.lane.b32.xlu0 %v337, 32
  %v339 = vpop.permute.xlu0 %338
  %vm340 = vcmask 326912
  %341 = vst.msk [vmem:[%s1] sm:$0xff] %vm340, %v339
  %s342 = scalar_lea.vmem %s0, 260
  %v343 = vld [vmem:[%s342] ss:$8 sm:$0xf]
  %s344 = scalar_lea.vmem %s0, 260
  %v345 = vld [vmem:[%s344] ss:$8 sm:$0xf0]
  %vm346 = vcmask 1047556
  %v347 = vsel %vm346, %v345, %v343
  %348 = vrot.lane.b32.xlu0 %v347, 32
  %v349 = vpop.permute.xlu0 %348
  %vm350 = vcmask 326912
  %s351 = scalar_lea.vmem %s1, 32
  %352 = vst.msk [vmem:[%s351] sm:$0xff] %vm350, %v349
  %s353 = scalar_lea.vmem %s0, 68
  %v354 = vld [vmem:[%s353] ss:$8 sm:$0xf]
  %s355 = scalar_lea.vmem %s0, 68
  %v356 = vld [vmem:[%s355] ss:$8 sm:$0xf0]
  %vm357 = vcmask 1047556
  %v358 = vsel %vm357, %v356, %v354
  %359 = vrot.lane.b32.xlu0 %v358, 32
  %v360 = vpop.permute.xlu0 %359
  %vm361 = vcmask 326912
  %s362 = scalar_lea.vmem %s1, 8
  %363 = vst.msk [vmem:[%s362] sm:$0xff] %vm361, %v360
  %s364 = scalar_lea.vmem %s0, 324
  %v365 = vld [vmem:[%s364] ss:$8 sm:$0xf]
  %s366 = scalar_lea.vmem %s0, 324
  %v367 = vld [vmem:[%s366] ss:$8 sm:$0xf0]
  %vm368 = vcmask 1047556
  %v369 = vsel %vm368, %v367, %v365
  %370 = vrot.lane.b32.xlu0 %v369, 32
  %v371 = vpop.permute.xlu0 %370
  %vm372 = vcmask 326912
  %s373 = scalar_lea.vmem %s1, 40
  %374 = vst.msk [vmem:[%s373] sm:$0xff] %vm372, %v371
  %s375 = scalar_lea.vmem %s0, 132
  %v376 = vld [vmem:[%s375] ss:$8 sm:$0xf]
  %s377 = scalar_lea.vmem %s0, 132
  %v378 = vld [vmem:[%s377] ss:$8 sm:$0xf0]
  %vm379 = vcmask 1047556
  %v380 = vsel %vm379, %v378, %v376
  %381 = vrot.lane.b32.xlu0 %v380, 32
  %v382 = vpop.permute.xlu0 %381
  %vm383 = vcmask 326912
  %s384 = scalar_lea.vmem %s1, 16
  %385 = vst.msk [vmem:[%s384] sm:$0xff] %vm383, %v382
  %s386 = scalar_lea.vmem %s0, 388
  %v387 = vld [vmem:[%s386] ss:$8 sm:$0xf]
  %s388 = scalar_lea.vmem %s0, 388
  %v389 = vld [vmem:[%s388] ss:$8 sm:$0xf0]
  %vm390 = vcmask 1047556
  %v391 = vsel %vm390, %v389, %v387
  %392 = vrot.lane.b32.xlu0 %v391, 32
  %v393 = vpop.permute.xlu0 %392
  %vm394 = vcmask 326912
  %s395 = scalar_lea.vmem %s1, 48
  %396 = vst.msk [vmem:[%s395] sm:$0xff] %vm394, %v393
  %s397 = scalar_lea.vmem %s0, 196
  %v398 = vld [vmem:[%s397] ss:$8 sm:$0xf]
  %s399 = scalar_lea.vmem %s0, 196
  %v400 = vld [vmem:[%s399] ss:$8 sm:$0xf0]
  %vm401 = vcmask 1047556
  %v402 = vsel %vm401, %v400, %v398
  %403 = vrot.lane.b32.xlu0 %v402, 32
  %v404 = vpop.permute.xlu0 %403
  %vm405 = vcmask 326912
  %s406 = scalar_lea.vmem %s1, 24
  %407 = vst.msk [vmem:[%s406] sm:$0xff] %vm405, %v404
  %s408 = scalar_lea.vmem %s0, 452
  %v409 = vld [vmem:[%s408] ss:$8 sm:$0xf]
  %s410 = scalar_lea.vmem %s0, 452
  %v411 = vld [vmem:[%s410] ss:$8 sm:$0xf0]
  %vm412 = vcmask 1047556
  %v413 = vsel %vm412, %v411, %v409
  %414 = vrot.lane.b32.xlu0 %v413, 32
  %v415 = vpop.permute.xlu0 %414
  %vm416 = vcmask 326912
  %s417 = scalar_lea.vmem %s1, 56
  %418 = vst.msk [vmem:[%s417] sm:$0xff] %vm416, %v415
  %s419 = scalar_lea.vmem %s0, 3
  %v420 = vld [vmem:[%s419] ss:$8 sm:$0xf]
  %s421 = scalar_lea.vmem %s0, 3
  %v422 = vld [vmem:[%s421] ss:$8 sm:$0xf0]
  %vm423 = vcmask 1047556
  %v424 = vsel %vm423, %v422, %v420
  %425 = vrot.lane.b32.xlu0 %v424, 24
  %v426 = vpop.permute.xlu0 %425
  %vm427 = vcmask 261312
  %428 = vst.msk [vmem:[%s1] sm:$0xff] %vm427, %v426
  %s429 = scalar_lea.vmem %s0, 259
  %v430 = vld [vmem:[%s429] ss:$8 sm:$0xf]
  %s431 = scalar_lea.vmem %s0, 259
  %v432 = vld [vmem:[%s431] ss:$8 sm:$0xf0]
  %vm433 = vcmask 1047556
  %v434 = vsel %vm433, %v432, %v430
  %435 = vrot.lane.b32.xlu0 %v434, 24
  %v436 = vpop.permute.xlu0 %435
  %vm437 = vcmask 261312
  %s438 = scalar_lea.vmem %s1, 32
  %439 = vst.msk [vmem:[%s438] sm:$0xff] %vm437, %v436
  %s440 = scalar_lea.vmem %s0, 67
  %v441 = vld [vmem:[%s440] ss:$8 sm:$0xf]
  %s442 = scalar_lea.vmem %s0, 67
  %v443 = vld [vmem:[%s442] ss:$8 sm:$0xf0]
  %vm444 = vcmask 1047556
  %v445 = vsel %vm444, %v443, %v441
  %446 = vrot.lane.b32.xlu0 %v445, 24
  %v447 = vpop.permute.xlu0 %446
  %vm448 = vcmask 261312
  %s449 = scalar_lea.vmem %s1, 8
  %450 = vst.msk [vmem:[%s449] sm:$0xff] %vm448, %v447
  %s451 = scalar_lea.vmem %s0, 323
  %v452 = vld [vmem:[%s451] ss:$8 sm:$0xf]
  %s453 = scalar_lea.vmem %s0, 323
  %v454 = vld [vmem:[%s453] ss:$8 sm:$0xf0]
  %vm455 = vcmask 1047556
  %v456 = vsel %vm455, %v454, %v452
  %457 = vrot.lane.b32.xlu0 %v456, 24
  %v458 = vpop.permute.xlu0 %457
  %vm459 = vcmask 261312
  %s460 = scalar_lea.vmem %s1, 40
  %461 = vst.msk [vmem:[%s460] sm:$0xff] %vm459, %v458
  %s462 = scalar_lea.vmem %s0, 131
  %v463 = vld [vmem:[%s462] ss:$8 sm:$0xf]
  %s464 = scalar_lea.vmem %s0, 131
  %v465 = vld [vmem:[%s464] ss:$8 sm:$0xf0]
  %vm466 = vcmask 1047556
  %v467 = vsel %vm466, %v465, %v463
  %468 = vrot.lane.b32.xlu0 %v467, 24
  %v469 = vpop.permute.xlu0 %468
  %vm470 = vcmask 261312
  %s471 = scalar_lea.vmem %s1, 16
  %472 = vst.msk [vmem:[%s471] sm:$0xff] %vm470, %v469
  %s473 = scalar_lea.vmem %s0, 387
  %v474 = vld [vmem:[%s473] ss:$8 sm:$0xf]
  %s475 = scalar_lea.vmem %s0, 387
  %v476 = vld [vmem:[%s475] ss:$8 sm:$0xf0]
  %vm477 = vcmask 1047556
  %v478 = vsel %vm477, %v476, %v474
  %479 = vrot.lane.b32.xlu0 %v478, 24
  %v480 = vpop.permute.xlu0 %479
  %vm481 = vcmask 261312
  %s482 = scalar_lea.vmem %s1, 48
  %483 = vst.msk [vmem:[%s482] sm:$0xff] %vm481, %v480
  %s484 = scalar_lea.vmem %s0, 195
  %v485 = vld [vmem:[%s484] ss:$8 sm:$0xf]
  %s486 = scalar_lea.vmem %s0, 195
  %v487 = vld [vmem:[%s486] ss:$8 sm:$0xf0]
  %vm488 = vcmask 1047556
  %v489 = vsel %vm488, %v487, %v485
  %490 = vrot.lane.b32.xlu0 %v489, 24
  %v491 = vpop.permute.xlu0 %490
  %vm492 = vcmask 261312
  %s493 = scalar_lea.vmem %s1, 24
  %494 = vst.msk [vmem:[%s493] sm:$0xff] %vm492, %v491
  %s495 = scalar_lea.vmem %s0, 451
  %v496 = vld [vmem:[%s495] ss:$8 sm:$0xf]
  %s497 = scalar_lea.vmem %s0, 451
  %v498 = vld [vmem:[%s497] ss:$8 sm:$0xf0]
  %vm499 = vcmask 1047556
  %v500 = vsel %vm499, %v498, %v496
  %501 = vrot.lane.b32.xlu0 %v500, 24
  %v502 = vpop.permute.xlu0 %501
  %vm503 = vcmask 261312
  %s504 = scalar_lea.vmem %s1, 56
  %505 = vst.msk [vmem:[%s504] sm:$0xff] %vm503, %v502
  %s506 = scalar_lea.vmem %s0, 2
  %v507 = vld [vmem:[%s506] ss:$8 sm:$0xf]
  %s508 = scalar_lea.vmem %s0, 2
  %v509 = vld [vmem:[%s508] ss:$8 sm:$0xf0]
  %vm510 = vcmask 1047556
  %v511 = vsel %vm510, %v509, %v507
  %512 = vrot.lane.b32.xlu0 %v511, 16
  %v513 = vpop.permute.xlu0 %512
  %vm514 = vcmask 195712
  %515 = vst.msk [vmem:[%s1] sm:$0xff] %vm514, %v513
  %s516 = scalar_lea.vmem %s0, 258
  %v517 = vld [vmem:[%s516] ss:$8 sm:$0xf]
  %s518 = scalar_lea.vmem %s0, 258
  %v519 = vld [vmem:[%s518] ss:$8 sm:$0xf0]
  %vm520 = vcmask 1047556
  %v521 = vsel %vm520, %v519, %v517
  %522 = vrot.lane.b32.xlu0 %v521, 16
  %v523 = vpop.permute.xlu0 %522
  %vm524 = vcmask 195712
  %s525 = scalar_lea.vmem %s1, 32
  %526 = vst.msk [vmem:[%s525] sm:$0xff] %vm524, %v523
  %s527 = scalar_lea.vmem %s0, 66
  %v528 = vld [vmem:[%s527] ss:$8 sm:$0xf]
  %s529 = scalar_lea.vmem %s0, 66
  %v530 = vld [vmem:[%s529] ss:$8 sm:$0xf0]
  %vm531 = vcmask 1047556
  %v532 = vsel %vm531, %v530, %v528
  %533 = vrot.lane.b32.xlu0 %v532, 16
  %v534 = vpop.permute.xlu0 %533
  %vm535 = vcmask 195712
  %s536 = scalar_lea.vmem %s1, 8
  %537 = vst.msk [vmem:[%s536] sm:$0xff] %vm535, %v534
  %s538 = scalar_lea.vmem %s0, 322
  %v539 = vld [vmem:[%s538] ss:$8 sm:$0xf]
  %s540 = scalar_lea.vmem %s0, 322
  %v541 = vld [vmem:[%s540] ss:$8 sm:$0xf0]
  %vm542 = vcmask 1047556
  %v543 = vsel %vm542, %v541, %v539
  %544 = vrot.lane.b32.xlu0 %v543, 16
  %v545 = vpop.permute.xlu0 %544
  %vm546 = vcmask 195712
  %s547 = scalar_lea.vmem %s1, 40
  %548 = vst.msk [vmem:[%s547] sm:$0xff] %vm546, %v545
  %s549 = scalar_lea.vmem %s0, 130
  %v550 = vld [vmem:[%s549] ss:$8 sm:$0xf]
  %s551 = scalar_lea.vmem %s0, 130
  %v552 = vld [vmem:[%s551] ss:$8 sm:$0xf0]
  %vm553 = vcmask 1047556
  %v554 = vsel %vm553, %v552, %v550
  %555 = vrot.lane.b32.xlu0 %v554, 16
  %v556 = vpop.permute.xlu0 %555
  %vm557 = vcmask 195712
  %s558 = scalar_lea.vmem %s1, 16
  %559 = vst.msk [vmem:[%s558] sm:$0xff] %vm557, %v556
  %s560 = scalar_lea.vmem %s0, 386
  %v561 = vld [vmem:[%s560] ss:$8 sm:$0xf]
  %s562 = scalar_lea.vmem %s0, 386
  %v563 = vld [vmem:[%s562] ss:$8 sm:$0xf0]
  %vm564 = vcmask 1047556
  %v565 = vsel %vm564, %v563, %v561
  %566 = vrot.lane.b32.xlu0 %v565, 16
  %v567 = vpop.permute.xlu0 %566
  %vm568 = vcmask 195712
  %s569 = scalar_lea.vmem %s1, 48
  %570 = vst.msk [vmem:[%s569] sm:$0xff] %vm568, %v567
  %s571 = scalar_lea.vmem %s0, 194
  %v572 = vld [vmem:[%s571] ss:$8 sm:$0xf]
  %s573 = scalar_lea.vmem %s0, 194
  %v574 = vld [vmem:[%s573] ss:$8 sm:$0xf0]
  %vm575 = vcmask 1047556
  %v576 = vsel %vm575, %v574, %v572
  %577 = vrot.lane.b32.xlu0 %v576, 16
  %v578 = vpop.permute.xlu0 %577
  %vm579 = vcmask 195712
  %s580 = scalar_lea.vmem %s1, 24
  %581 = vst.msk [vmem:[%s580] sm:$0xff] %vm579, %v578
  %s582 = scalar_lea.vmem %s0, 450
  %v583 = vld [vmem:[%s582] ss:$8 sm:$0xf]
  %s584 = scalar_lea.vmem %s0, 450
  %v585 = vld [vmem:[%s584] ss:$8 sm:$0xf0]
  %vm586 = vcmask 1047556
  %v587 = vsel %vm586, %v585, %v583
  %588 = vrot.lane.b32.xlu0 %v587, 16
  %v589 = vpop.permute.xlu0 %588
  %vm590 = vcmask 195712
  %s591 = scalar_lea.vmem %s1, 56
  %592 = vst.msk [vmem:[%s591] sm:$0xff] %vm590, %v589
  %s593 = scalar_lea.vmem %s0, 1
  %v594 = vld [vmem:[%s593] ss:$8 sm:$0xf]
  %s595 = scalar_lea.vmem %s0, 1
  %v596 = vld [vmem:[%s595] ss:$8 sm:$0xf0]
  %vm597 = vcmask 1047556
  %v598 = vsel %vm597, %v596, %v594
  %599 = vrot.lane.b32.xlu0 %v598, 8
  %v600 = vpop.permute.xlu0 %599
  %vm601 = vcmask 130112
  %602 = vst.msk [vmem:[%s1] sm:$0xff] %vm601, %v600
  %s603 = scalar_lea.vmem %s0, 257
  %v604 = vld [vmem:[%s603] ss:$8 sm:$0xf]
  %s605 = scalar_lea.vmem %s0, 257
  %v606 = vld [vmem:[%s605] ss:$8 sm:$0xf0]
  %vm607 = vcmask 1047556
  %v608 = vsel %vm607, %v606, %v604
  %609 = vrot.lane.b32.xlu0 %v608, 8
  %v610 = vpop.permute.xlu0 %609
  %vm611 = vcmask 130112
  %s612 = scalar_lea.vmem %s1, 32
  %613 = vst.msk [vmem:[%s612] sm:$0xff] %vm611, %v610
  %s614 = scalar_lea.vmem %s0, 65
  %v615 = vld [vmem:[%s614] ss:$8 sm:$0xf]
  %s616 = scalar_lea.vmem %s0, 65
  %v617 = vld [vmem:[%s616] ss:$8 sm:$0xf0]
  %vm618 = vcmask 1047556
  %v619 = vsel %vm618, %v617, %v615
  %620 = vrot.lane.b32.xlu0 %v619, 8
  %v621 = vpop.permute.xlu0 %620
  %vm622 = vcmask 130112
  %s623 = scalar_lea.vmem %s1, 8
  %624 = vst.msk [vmem:[%s623] sm:$0xff] %vm622, %v621
  %s625 = scalar_lea.vmem %s0, 321
  %v626 = vld [vmem:[%s625] ss:$8 sm:$0xf]
  %s627 = scalar_lea.vmem %s0, 321
  %v628 = vld [vmem:[%s627] ss:$8 sm:$0xf0]
  %vm629 = vcmask 1047556
  %v630 = vsel %vm629, %v628, %v626
  %631 = vrot.lane.b32.xlu0 %v630, 8
  %v632 = vpop.permute.xlu0 %631
  %vm633 = vcmask 130112
  %s634 = scalar_lea.vmem %s1, 40
  %635 = vst.msk [vmem:[%s634] sm:$0xff] %vm633, %v632
  %s636 = scalar_lea.vmem %s0, 129
  %v637 = vld [vmem:[%s636] ss:$8 sm:$0xf]
  %s638 = scalar_lea.vmem %s0, 129
  %v639 = vld [vmem:[%s638] ss:$8 sm:$0xf0]
  %vm640 = vcmask 1047556
  %v641 = vsel %vm640, %v639, %v637
  %642 = vrot.lane.b32.xlu0 %v641, 8
  %v643 = vpop.permute.xlu0 %642
  %vm644 = vcmask 130112
  %s645 = scalar_lea.vmem %s1, 16
  %646 = vst.msk [vmem:[%s645] sm:$0xff] %vm644, %v643
  %s647 = scalar_lea.vmem %s0, 385
  %v648 = vld [vmem:[%s647] ss:$8 sm:$0xf]
  %s649 = scalar_lea.vmem %s0, 385
  %v650 = vld [vmem:[%s649] ss:$8 sm:$0xf0]
  %vm651 = vcmask 1047556
  %v652 = vsel %vm651, %v650, %v648
  %653 = vrot.lane.b32.xlu0 %v652, 8
  %v654 = vpop.permute.xlu0 %653
  %vm655 = vcmask 130112
  %s656 = scalar_lea.vmem %s1, 48
  %657 = vst.msk [vmem:[%s656] sm:$0xff] %vm655, %v654
  %s658 = scalar_lea.vmem %s0, 193
  %v659 = vld [vmem:[%s658] ss:$8 sm:$0xf]
  %s660 = scalar_lea.vmem %s0, 193
  %v661 = vld [vmem:[%s660] ss:$8 sm:$0xf0]
  %vm662 = vcmask 1047556
  %v663 = vsel %vm662, %v661, %v659
  %664 = vrot.lane.b32.xlu0 %v663, 8
  %v665 = vpop.permute.xlu0 %664
  %vm666 = vcmask 130112
  %s667 = scalar_lea.vmem %s1, 24
  %668 = vst.msk [vmem:[%s667] sm:$0xff] %vm666, %v665
  %s669 = scalar_lea.vmem %s0, 449
  %v670 = vld [vmem:[%s669] ss:$8 sm:$0xf]
  %s671 = scalar_lea.vmem %s0, 449
  %v672 = vld [vmem:[%s671] ss:$8 sm:$0xf0]
  %vm673 = vcmask 1047556
  %v674 = vsel %vm673, %v672, %v670
  %675 = vrot.lane.b32.xlu0 %v674, 8
  %v676 = vpop.permute.xlu0 %675
  %vm677 = vcmask 130112
  %s678 = scalar_lea.vmem %s1, 56
  %679 = vst.msk [vmem:[%s678] sm:$0xff] %vm677, %v676

// kernel: gemma_forward.1
$region0: #{gemma_forward.1}
  #allocation0 [shape = 'u32[]', space=smem, size = 0x4, offset = 0x4, fixed_abs, tag = 'smem constant byte address 0x4 - core index']
  #allocation1 [shape = 'u32[144,128]{1,0:T(1,128)}', space=vmem, size = 0x12000, scoped, tag = 'internal scratch']
  %s0 = inlined_call_operand.vmem [shape: f32[16,32], index: 0, kind: input, shape index: {}]
  %s1 = inlined_call_operand.vmem [shape: f32[64,16], index: 1, kind: input, shape index: {}]
  %s2 = inlined_call_operand.vmem [shape: f32[64,16], index: 2, kind: input, shape index: {}]
  %s3 = inlined_call_operand.vmem [shape: f32[64,64], index: 3, kind: input, shape index: {}]
  %s4 = inlined_call_operand.vmem [shape: f32[2,1,32], index: 4, kind: input, shape index: {}]
  %s5 = inlined_call_operand.vmem [shape: f32[2,1,32], index: 5, kind: input, shape index: {}]
  %s6 = inlined_call_operand.vmem [shape: f32[2,32,128], index: 6, kind: input, shape index: {}]
  %s7 = inlined_call_operand.vmem [shape: f32[2,64,32], index: 7, kind: input, shape index: {}]
  %s8 = inlined_call_operand.vmem [shape: f32[2,32,128], index: 8, kind: input, shape index: {}]
  %s9 = inlined_call_operand.vmem [shape: f32[2,1,128], index: 9, kind: input, shape index: {}]
  %s10 = inlined_call_operand.vmem [shape: f32[2,64,32], index: 10, kind: input, shape index: {}]
  %s11 = inlined_call_operand.vmem [shape: f32[2,1,32], index: 11, kind: input, shape index: {}]
  %s12 = inlined_call_operand.vmem [shape: f32[1,32], index: 12, kind: input, shape index: {}]
  %s13 = inlined_call_operand.hbm [shape: f32[16,32], index: 13, kind: output, shape index: {}]
  %s14 = sld [smem:[#allocation0]]
  $region62: #{gemma_forward.1} parent=0
    _
  %s16 = ssub.s32 1, %s14
  %s17 = scalar_select 0, %s16, %s14
  $region1: #{gemma_forward.1} parent=0
    #allocation2 [shape = 'u8[8192]{0}', space=vmem, size = 0x2000, scoped, tag = 'output window, operand 0, single buffered']
    #allocation3 [shape = 's32[1]{0}', space=sflag, size = 0x4, scoped, tag = 'scoped memory for gemma_forward.1']
    %18 = vsyncpa [#allocation3], 0
    // Predicated region
    $region2: #{gemma_forward.1} parent=1 // pred_check
      _
    $region3: #{gemma_forward.1} parent=1 // pred_check_branch
      %20 = sbr.rel (0) target = $region5
    $region4: #{gemma_forward.1} parent=1 // pred_region
      _
    $region5: #{gemma_forward.1} parent=1 // pred_fallthru
      _
    // Predicated region
    $region6: #{gemma_forward.1} parent=1 // pred_check
      _
    $region7: #{gemma_forward.1} parent=1 // pred_check_branch
      %22 = sbr.rel (0) target = $region9
    $region8: #{gemma_forward.1} parent=1 // pred_region
      _
    $region9: #{gemma_forward.1} parent=1 // pred_fallthru
      _
    // Predicated region
    $region10: #{gemma_forward.1} parent=1 // pred_check
      _
    $region11: #{gemma_forward.1} parent=1 // pred_check_branch
      %24 = sbr.rel (0) target = $region13
    $region12: #{gemma_forward.1} parent=1 // pred_region
      _
    $region13: #{gemma_forward.1} parent=1 // pred_fallthru
      _
    // Predicated region
    $region14: #{gemma_forward.1} parent=1 // pred_check
      _
    $region15: #{gemma_forward.1} parent=1 // pred_check_branch
      %26 = sbr.rel (0) target = $region17
    $region16: #{gemma_forward.1} parent=1 // pred_region
      _
    $region17: #{gemma_forward.1} parent=1 // pred_fallthru
      _
    // Predicated region
    $region18: #{gemma_forward.1} parent=1 // pred_check
      _
    $region19: #{gemma_forward.1} parent=1 // pred_check_branch
      %28 = sbr.rel (0) target = $region21
    $region20: #{gemma_forward.1} parent=1 // pred_region
      _
    $region21: #{gemma_forward.1} parent=1 // pred_fallthru
      _
    // Predicated region
    $region22: #{gemma_forward.1} parent=1 // pred_check
      _
    $region23: #{gemma_forward.1} parent=1 // pred_check_branch
      %30 = sbr.rel (0) target = $region25
    $region24: #{gemma_forward.1} parent=1 // pred_region
      _
    $region25: #{gemma_forward.1} parent=1 // pred_fallthru
      _
    // Predicated region
    $region26: #{gemma_forward.1} parent=1 // pred_check
      _
    $region27: #{gemma_forward.1} parent=1 // pred_check_branch
      %32 = sbr.rel (0) target = $region29
    $region28: #{gemma_forward.1} parent=1 // pred_region
      _
    $region29: #{gemma_forward.1} parent=1 // pred_fallthru
      _
    // Predicated region
    $region30: #{gemma_forward.1} parent=1 // pred_check
      _
    $region31: #{gemma_forward.1} parent=1 // pred_check_branch
      %34 = sbr.rel (0) target = $region33
    $region32: #{gemma_forward.1} parent=1 // pred_region
      _
    $region33: #{gemma_forward.1} parent=1 // pred_fallthru
      _
    // Predicated region
    $region34: #{gemma_forward.1} parent=1 // pred_check
      _
    $region35: #{gemma_forward.1} parent=1 // pred_check_branch
      %36 = sbr.rel (0) target = $region37
    $region36: #{gemma_forward.1} parent=1 // pred_region
      _
    $region37: #{gemma_forward.1} parent=1 // pred_fallthru
      _
    // Predicated region
    $region38: #{gemma_forward.1} parent=1 // pred_check
      _
    $region39: #{gemma_forward.1} parent=1 // pred_check_branch
      %38 = sbr.rel (0) target = $region41
    $region40: #{gemma_forward.1} parent=1 // pred_region
      _
    $region41: #{gemma_forward.1} parent=1 // pred_fallthru
      _
    // Predicated region
    $region42: #{gemma_forward.1} parent=1 // pred_check
      _
    $region43: #{gemma_forward.1} parent=1 // pred_check_branch
      %40 = sbr.rel (0) target = $region45
    $region44: #{gemma_forward.1} parent=1 // pred_region
      _
    $region45: #{gemma_forward.1} parent=1 // pred_fallthru
      _
    // Predicated region
    $region46: #{gemma_forward.1} parent=1 // pred_check
      _
    $region47: #{gemma_forward.1} parent=1 // pred_check_branch
      %42 = sbr.rel (0) target = $region49
    $region48: #{gemma_forward.1} parent=1 // pred_region
      _
    $region49: #{gemma_forward.1} parent=1 // pred_fallthru
      _
    // Predicated region
    $region50: #{gemma_forward.1} parent=1 // pred_check
      _
    $region51: #{gemma_forward.1} parent=1 // pred_check_branch
      %44 = sbr.rel (0) target = $region53
    $region52: #{gemma_forward.1} parent=1 // pred_region
      _
    $region53: #{gemma_forward.1} parent=1 // pred_fallthru
      _
    %v45 = vld [vmem:[%s0] sm:$0xff]
    %v46 = vld [vmem:[%s0 + $0x8] sm:$0xff]
    %v47 = vmul.f32 %v45, 5.656854
    %v48 = vmul.f32 %v46, 5.656854
    %v49 = vld [vmem:[%s1] sm:$0xff]
    %v50 = vld [vmem:[%s1 + $0x8] sm:$0xff]
    %v51 = vld [vmem:[%s1 + $0x10] sm:$0xff]
    %v52 = vld [vmem:[%s1 + $0x18] sm:$0xff]
    %v53 = vld [vmem:[%s1 + $0x20] sm:$0xff]
    %v54 = vld [vmem:[%s1 + $0x28] sm:$0xff]
    %v55 = vld [vmem:[%s1 + $0x30] sm:$0xff]
    %v56 = vld [vmem:[%s1 + $0x38] sm:$0xff]
    %v57 = vld [vmem:[%s2] sm:$0xff]
    %v58 = vld [vmem:[%s2 + $0x8] sm:$0xff]
    %v59 = vld [vmem:[%s2 + $0x10] sm:$0xff]
    %v60 = vld [vmem:[%s2 + $0x18] sm:$0xff]
    %v61 = vld [vmem:[%s2 + $0x20] sm:$0xff]
    %v62 = vld [vmem:[%s2 + $0x28] sm:$0xff]
    %v63 = vld [vmem:[%s2 + $0x30] sm:$0xff]
    %v64 = vld [vmem:[%s2 + $0x38] sm:$0xff]
    %v65 = vld [vmem:[%s3] sm:$0xff]
    %v66 = vld [vmem:[%s3 + $0x8] sm:$0xff]
    %v67 = vld [vmem:[%s3 + $0x10] sm:$0xff]
    %v68 = vld [vmem:[%s3 + $0x18] sm:$0xff]
    %v69 = vld [vmem:[%s3 + $0x20] sm:$0xff]
    %v70 = vld [vmem:[%s3 + $0x28] sm:$0xff]
    %v71 = vld [vmem:[%s3 + $0x30] sm:$0xff]
    %v72 = vld [vmem:[%s3 + $0x38] sm:$0xff]
    %v73 = vld [vmem:[%s4] sm:$0x1]
    %v74 = vmul.f32 %v47, %v47
    %v75 = vmul.f32 %v48, %v48
    %vm76 = vcmask 261120
    %v77 = vsel %vm76, %v74, 0.0
    %78 = vadd.xlane.f32.xlu0 %v77
    %v79 = vpop.xlane.xlu0 %78
    %v80 = vsel %vm76, %v75, 0.0
    %81 = vadd.xlane.f32.xlu0 %v80
    %v82 = vpop.xlane.xlu0 %81
    %v83 = vrcp.pop 32.0
    %v84 = vmul.f32 %v79, %v83
    %v85 = vmul.f32 %v82, %v83
    %v86 = vadd.f32 %v84, 1e-06
    %v87 = vadd.f32 %v85, 1e-06
    %v88 = vrsqrt.pop %v86
    %v89 = vrsqrt.pop %v87
    %v90 = vmul.f32 %v47, %v88
    %v91 = vmul.f32 %v48, %v89
    %v92 = vadd.f32 %v73, 1.0
    %v94 = vlaneseq
    %v95 = vshrl.u32 %v94, 7
    %v96 = vsub.s32 0, %v95
    %v97 = vrot.slane %v92, %v96
    %v99 = vmul.f32 %v90, %v97
    %v100 = vmul.f32 %v91, %v97
    %v101 = vld [vmem:[%s6] sm:$0xff]
    %v102 = vld [vmem:[%s6 + $0x8] sm:$0xff]
    %v103 = vld [vmem:[%s6 + $0x10] sm:$0xff]
    %v104 = vld [vmem:[%s6 + $0x18] sm:$0xff]
    %v106 = vsel %vm76, %v99, 0
    %v109 = vsel %vm76, %v100, 0
    %111 = vmatprep.subr.mxu0 0.0
    %112 = vmatpush1.msra.mxu0 %v101
    %113 = vmatprep.subr.mxu0 0.0
    %114 = vmatpush1.msra.mxu0 %v102
    %115 = vmatprep.subr.mxu0 0.0
    %116 = vmatpush1.msra.mxu0 %v103
    %117 = vmatprep.subr.mxu0 0.0
    %118 = vmatpush1.msra.mxu0 %v104
    %119 = vmatprep.subr.mxu0 0.0
    %120 = vmatpush1.msra.mxu0 0.0
    %121 = vmatprep.subr.mxu0 0.0
    %122 = vmatpush1.msra.mxu0 0.0
    %123 = vmatprep.subr.mxu0 0.0
    %124 = vmatpush1.msra.mxu0 0.0
    %125 = vmatprep.subr.mxu0 0.0
    %126 = vmatpush1.msra.mxu0 0.0
    %127 = vmatprep.subr.mxu0 0.0
    %128 = vmatpush1.msra.mxu0 0.0
    %129 = vmatprep.subr.mxu0 0.0
    %130 = vmatpush1.msra.mxu0 0.0
    %131 = vmatprep.subr.mxu0 0.0
    %132 = vmatpush1.msra.mxu0 0.0
    %133 = vmatprep.subr.mxu0 0.0
    %134 = vmatpush1.msra.mxu0 0.0
    %135 = vmatprep.subr.mxu0 0.0
    %136 = vmatpush1.msra.mxu0 0.0
    %137 = vmatprep.subr.mxu0 0.0
    %138 = vmatpush1.msra.mxu0 0.0
    %139 = vmatprep.subr.mxu0 0.0
    %140 = vmatpush1.msra.mxu0 0.0
    %141 = vmatprep.subr.mxu0 0.0
    %142 = vmatpush1.msra.mxu0 0.0
    %143 = vmatprep.subr.mxu0 0.0
    %144 = vmatpush1.msra.mxu0 0.0
    %145 = vmatprep.subr.mxu0 0.0
    %146 = vmatpush1.msra.mxu0 0.0
    %147 = vmatprep.subr.mxu0 0.0
    %148 = vmatpush1.msra.mxu0 0.0
    %149 = vmatprep.subr.mxu0 0.0
    %150 = vmatpush1.msra.mxu0 0.0
    %151 = vmatprep.subr.mxu0 0.0
    %152 = vmatpush1.msra.mxu0 0.0
    %153 = vmatprep.subr.mxu0 0.0
    %154 = vmatpush1.msra.mxu0 0.0
    %155 = vmatprep.subr.mxu0 0.0
    %156 = vmatpush1.msra.mxu0 0.0
    %157 = vmatprep.subr.mxu0 0.0
    %158 = vmatpush1.msra.mxu0 0.0
    %159 = vmatprep.subr.mxu0 0.0
    %160 = vmatpush1.msra.mxu0 0.0
    %161 = vmatprep.subr.mxu0 0.0
    %162 = vmatpush1.msra.mxu0 0.0
    %163 = vmatprep.subr.mxu0 0.0
    %164 = vmatpush1.msra.mxu0 0.0
    %165 = vmatprep.subr.mxu0 0.0
    %166 = vmatpush1.msra.mxu0 0.0
    %167 = vmatprep.subr.mxu0 0.0
    %168 = vmatpush1.msra.mxu0 0.0
    %169 = vmatprep.subr.mxu0 0.0
    %170 = vmatpush1.msra.mxu0 0.0
    %171 = vmatprep.subr.mxu0 0.0
    %172 = vmatpush1.msra.mxu0 0.0
    %173 = vmatprep.subr.mxu0 0.0
    %174 = vmatpush1.msra.mxu0 0.0
    %175 = vmatprep.mubr.f32.mxu0 0.0
    %176 = vmatmul.mubr.f32.gmra.mrb[0].mxu0 %v106
    %v177 = vpop.f32.mrb[0].mxu0
    %v178 = vadd.f32 0.0, %v177
    %v179 = vpop.f32.mrb[0].mxu0
    %180 = vmatprep.mubr.f32.mxu0 0.0
    %181 = vmatmul.mubr.f32.gmra.mrb[0].mxu0 %v109
    %v182 = vpop.f32.mrb[0].mxu0
    %v183 = vadd.f32 0.0, %v182
    %v184 = vpop.f32.mrb[0].mxu0
    %185 = vdwg.mxu0
    %187 = vrot.lane.b32.xlu0 %v178, 112
    %v188 = vpop.permute.xlu0 %187
    %190 = vrot.lane.b32.xlu0 %v178, 96
    %v191 = vpop.permute.xlu0 %190
    %193 = vrot.lane.b32.xlu0 %v178, 80
    %v194 = vpop.permute.xlu0 %193
    %197 = vrot.lane.b32.xlu0 %v183, 112
    %v198 = vpop.permute.xlu0 %197
    %200 = vrot.lane.b32.xlu0 %v183, 96
    %v201 = vpop.permute.xlu0 %200
    %203 = vrot.lane.b32.xlu0 %v183, 80
    %v204 = vpop.permute.xlu0 %203
    %v206 = vmul.f32 %v178, %v49
    %v207 = vmul.f32 %v188, %v50
    %v208 = vmul.f32 %v191, %v51
    %v209 = vmul.f32 %v194, %v52
    %v210 = vmul.f32 %v183, %v53
    %v211 = vmul.f32 %v198, %v54
    %v212 = vmul.f32 %v201, %v55
    %v213 = vmul.f32 %v204, %v56
    %v214 = vsub.f32 0.0, %v178
    %v215 = vsub.f32 0.0, %v188
    %v216 = vsub.f32 0.0, %v191
    %v217 = vsub.f32 0.0, %v194
    %v218 = vsub.f32 0.0, %v183
    %v219 = vsub.f32 0.0, %v198
    %v220 = vsub.f32 0.0, %v201
    %v221 = vsub.f32 0.0, %v204
    %230 = vrot.lane.b32.xlu0 %v214, 120
    %v231 = vpop.permute.xlu0 %230
    %232 = vrot.lane.b32.xlu0 %v215, 120
    %v233 = vpop.permute.xlu0 %232
    %234 = vrot.lane.b32.xlu0 %v216, 120
    %v235 = vpop.permute.xlu0 %234
    %236 = vrot.lane.b32.xlu0 %v217, 120
    %v237 = vpop.permute.xlu0 %236
    %238 = vrot.lane.b32.xlu0 %v218, 120
    %v239 = vpop.permute.xlu0 %238
    %240 = vrot.lane.b32.xlu0 %v219, 120
    %v241 = vpop.permute.xlu0 %240
    %242 = vrot.lane.b32.xlu0 %v220, 120
    %v243 = vpop.permute.xlu0 %242
    %244 = vrot.lane.b32.xlu0 %v221, 120
    %v245 = vpop.permute.xlu0 %244
    %254 = vrot.lane.b32.xlu0 %v178, 8
    %v255 = vpop.permute.xlu0 %254
    %256 = vrot.lane.b32.xlu0 %v188, 8
    %v257 = vpop.permute.xlu0 %256
    %258 = vrot.lane.b32.xlu0 %v191, 8
    %v259 = vpop.permute.xlu0 %258
    %260 = vrot.lane.b32.xlu0 %v194, 8
    %v261 = vpop.permute.xlu0 %260
    %262 = vrot.lane.b32.xlu0 %v183, 8
    %v263 = vpop.permute.xlu0 %262
    %264 = vrot.lane.b32.xlu0 %v198, 8
    %v265 = vpop.permute.xlu0 %264
    %266 = vrot.lane.b32.xlu0 %v201, 8
    %v267 = vpop.permute.xlu0 %266
    %268 = vrot.lane.b32.xlu0 %v204, 8
    %v269 = vpop.permute.xlu0 %268
    %vm278 = vcmask 64512
    %v279 = vsel %vm278, %v231, %v255
    %v280 = vsel %vm278, %v233, %v257
    %v281 = vsel %vm278, %v235, %v259
    %v282 = vsel %vm278, %v237, %v261
    %v283 = vsel %vm278, %v239, %v263
    %v284 = vsel %vm278, %v241, %v265
    %v285 = vsel %vm278, %v243, %v267
    %v286 = vsel %vm278, %v245, %v269
    %v287 = vmul.f32 %v279, %v57
    %v288 = vmul.f32 %v280, %v58
    %v289 = vmul.f32 %v281, %v59
    %v290 = vmul.f32 %v282, %v60
    %v291 = vmul.f32 %v283, %v61
    %v292 = vmul.f32 %v284, %v62
    %v293 = vmul.f32 %v285, %v63
    %v294 = vmul.f32 %v286, %v64
    %v295 = vadd.f32 %v206, %v287
    %v296 = vadd.f32 %v207, %v288
    %v297 = vadd.f32 %v208, %v289
    %v298 = vadd.f32 %v209, %v290
    %v299 = vadd.f32 %v210, %v291
    %v300 = vadd.f32 %v211, %v292
    %v301 = vadd.f32 %v212, %v293
    %v302 = vadd.f32 %v213, %v294
    %311 = vrot.lane.b32.xlu0 %v49, 64
    %v312 = vpop.permute.xlu0 %311
    %313 = vrot.lane.b32.xlu0 %v50, 64
    %v314 = vpop.permute.xlu0 %313
    %315 = vrot.lane.b32.xlu0 %v51, 64
    %v316 = vpop.permute.xlu0 %315
    %317 = vrot.lane.b32.xlu0 %v52, 64
    %v318 = vpop.permute.xlu0 %317
    %319 = vrot.lane.b32.xlu0 %v53, 64
    %v320 = vpop.permute.xlu0 %319
    %321 = vrot.lane.b32.xlu0 %v54, 64
    %v322 = vpop.permute.xlu0 %321
    %323 = vrot.lane.b32.xlu0 %v55, 64
    %v324 = vpop.permute.xlu0 %323
    %325 = vrot.lane.b32.xlu0 %v56, 64
    %v326 = vpop.permute.xlu0 %325
    %v335 = vmul.f32 %v178, %v312
    %v336 = vmul.f32 %v178, %v314
    %v337 = vmul.f32 %v188, %v316
    %v338 = vmul.f32 %v188, %v318
    %v339 = vmul.f32 %v183, %v320
    %v340 = vmul.f32 %v183, %v322
    %v341 = vmul.f32 %v198, %v324
    %v342 = vmul.f32 %v198, %v326
    %343 = vrot.lane.b32.xlu0 %v214, 56
    %v344 = vpop.permute.xlu0 %343
    %345 = vrot.lane.b32.xlu0 %v215, 56
    %v346 = vpop.permute.xlu0 %345
    %347 = vrot.lane.b32.xlu0 %v218, 56
    %v348 = vpop.permute.xlu0 %347
    %349 = vrot.lane.b32.xlu0 %v219, 56
    %v350 = vpop.permute.xlu0 %349
    %355 = vrot.lane.b32.xlu0 %v178, 72
    %v356 = vpop.permute.xlu0 %355
    %357 = vrot.lane.b32.xlu0 %v188, 72
    %v358 = vpop.permute.xlu0 %357
    %359 = vrot.lane.b32.xlu0 %v183, 72
    %v360 = vpop.permute.xlu0 %359
    %361 = vrot.lane.b32.xlu0 %v198, 72
    %v362 = vpop.permute.xlu0 %361
    %v367 = vsel %vm278, %v344, %v356
    %v368 = vsel %vm278, %v346, %v358
    %v369 = vsel %vm278, %v348, %v360
    %v370 = vsel %vm278, %v350, %v362
    %v371 = vmul.f32 %v367, %v57
    %v372 = vmul.f32 %v367, %v58
    %v373 = vmul.f32 %v368, %v59
    %v374 = vmul.f32 %v368, %v60
    %v375 = vmul.f32 %v369, %v61
    %v376 = vmul.f32 %v369, %v62
    %v377 = vmul.f32 %v370, %v63
    %v378 = vmul.f32 %v370, %v64
    %387 = vrot.lane.b32.xlu0 %v371, 64
    %v388 = vpop.permute.xlu0 %387
    %389 = vrot.lane.b32.xlu0 %v372, 64
    %v390 = vpop.permute.xlu0 %389
    %391 = vrot.lane.b32.xlu0 %v373, 64
    %v392 = vpop.permute.xlu0 %391
    %393 = vrot.lane.b32.xlu0 %v374, 64
    %v394 = vpop.permute.xlu0 %393
    %395 = vrot.lane.b32.xlu0 %v375, 64
    %v396 = vpop.permute.xlu0 %395
    %397 = vrot.lane.b32.xlu0 %v376, 64
    %v398 = vpop.permute.xlu0 %397
    %399 = vrot.lane.b32.xlu0 %v377, 64
    %v400 = vpop.permute.xlu0 %399
    %401 = vrot.lane.b32.xlu0 %v378, 64
    %v402 = vpop.permute.xlu0 %401
    %v411 = vadd.f32 %v335, %v388
    %v412 = vadd.f32 %v336, %v390
    %v413 = vadd.f32 %v337, %v392
    %v414 = vadd.f32 %v338, %v394
    %v415 = vadd.f32 %v339, %v396
    %v416 = vadd.f32 %v340, %v398
    %v417 = vadd.f32 %v341, %v400
    %v418 = vadd.f32 %v342, %v402
    %427 = vrot.lane.b32.xlu0 %v411, 64
    %v428 = vpop.permute.xlu0 %427
    %429 = vrot.lane.b32.xlu0 %v412, 64
    %v430 = vpop.permute.xlu0 %429
    %431 = vrot.lane.b32.xlu0 %v413, 64
    %v432 = vpop.permute.xlu0 %431
    %433 = vrot.lane.b32.xlu0 %v414, 64
    %v434 = vpop.permute.xlu0 %433
    %435 = vrot.lane.b32.xlu0 %v415, 64
    %v436 = vpop.permute.xlu0 %435
    %437 = vrot.lane.b32.xlu0 %v416, 64
    %v438 = vpop.permute.xlu0 %437
    %439 = vrot.lane.b32.xlu0 %v417, 64
    %v440 = vpop.permute.xlu0 %439
    %441 = vrot.lane.b32.xlu0 %v418, 64
    %v442 = vpop.permute.xlu0 %441
    %vm443 = vcmask 130048
    %v445 = vsel %vm443, %v295, 0
    %v448 = vsel %vm443, %v296, 0
    %v451 = vsel %vm443, %v297, 0
    %v454 = vsel %vm443, %v298, 0
    %v457 = vsel %vm443, %v299, 0
    %v460 = vsel %vm443, %v300, 0
    %v463 = vsel %vm443, %v301, 0
    %v466 = vsel %vm443, %v302, 0
    %v468 = vsel %vm443, %v428, 0
    %v470 = vsel %vm443, %v430, 0
    %v472 = vsel %vm443, %v432, 0
    %v474 = vsel %vm443, %v434, 0
    %v476 = vsel %vm443, %v436, 0
    %v478 = vsel %vm443, %v438, 0
    %v480 = vsel %vm443, %v440, 0
    %v482 = vsel %vm443, %v442, 0
    %484 = vmatprep.subr.mxu0 0.0
    %485 = vmatpush1.xpose.msra.mxu0 %v468
    %486 = vmatprep.subr.mxu0 0.0
    %487 = vmatpush1.xpose.msra.mxu0 %v470
    %488 = vmatprep.subr.mxu0 0.0
    %489 = vmatpush1.xpose.msra.mxu0 %v472
    %490 = vmatprep.subr.mxu0 0.0
    %491 = vmatpush1.xpose.msra.mxu0 %v474
    %492 = vmatprep.subr.mxu0 0.0
    %493 = vmatpush1.xpose.msra.mxu0 %v476
    %494 = vmatprep.subr.mxu0 0.0
    %495 = vmatpush1.xpose.msra.mxu0 %v478
    %496 = vmatprep.subr.mxu0 0.0
    %497 = vmatpush1.xpose.msra.mxu0 %v480
    %498 = vmatprep.subr.mxu0 0.0
    %499 = vmatpush1.xpose.msra.mxu0 %v482
    %500 = vmatprep.subr.mxu0 0.0
    %501 = vmatpush1.xpose.msra.mxu0 0.0
    %502 = vmatprep.subr.mxu0 0.0
    %503 = vmatpush1.xpose.msra.mxu0 0.0
    %504 = vmatprep.subr.mxu0 0.0
    %505 = vmatpush1.xpose.msra.mxu0 0.0
    %506 = vmatprep.subr.mxu0 0.0
    %507 = vmatpush1.xpose.msra.mxu0 0.0
    %508 = vmatprep.subr.mxu0 0.0
    %509 = vmatpush1.xpose.msra.mxu0 0.0
    %510 = vmatprep.subr.mxu0 0.0
    %511 = vmatpush1.xpose.msra.mxu0 0.0
    %512 = vmatprep.subr.mxu0 0.0
    %513 = vmatpush1.xpose.msra.mxu0 0.0
    %514 = vmatprep.subr.mxu0 0.0
    %515 = vmatpush1.xpose.msra.mxu0 0.0
    %516 = vmatprep.subr.mxu0 0.0
    %517 = vmatpush1.xpose.msra.mxu0 0.0
    %518 = vmatprep.subr.mxu0 0.0
    %519 = vmatpush1.xpose.msra.mxu0 0.0
    %520 = vmatprep.subr.mxu0 0.0
    %521 = vmatpush1.xpose.msra.mxu0 0.0
    %522 = vmatprep.subr.mxu0 0.0
    %523 = vmatpush1.xpose.msra.mxu0 0.0
    %524 = vmatprep.subr.mxu0 0.0
    %525 = vmatpush1.xpose.msra.mxu0 0.0
    %526 = vmatprep.subr.mxu0 0.0
    %527 = vmatpush1.xpose.msra.mxu0 0.0
    %528 = vmatprep.subr.mxu0 0.0
    %529 = vmatpush1.xpose.msra.mxu0 0.0
    %530 = vmatprep.subr.mxu0 0.0
    %531 = vmatpush1.xpose.msra.mxu0 0.0
    %532 = vmatprep.subr.mxu0 0.0
    %533 = vmatpush1.xpose.msra.mxu0 0.0
    %534 = vmatprep.subr.mxu0 0.0
    %535 = vmatpush1.xpose.msra.mxu0 0.0
    %536 = vmatprep.subr.mxu0 0.0
    %537 = vmatpush1.xpose.msra.mxu0 0.0
    %538 = vmatprep.subr.mxu0 0.0
    %539 = vmatpush1.xpose.msra.mxu0 0.0
    %540 = vmatprep.subr.mxu0 0.0
    %541 = vmatpush1.xpose.msra.mxu0 0.0
    %542 = vmatprep.subr.mxu0 0.0
    %543 = vmatpush1.xpose.msra.mxu0 0.0
    %544 = vmatprep.subr.mxu0 0.0
    %545 = vmatpush1.xpose.msra.mxu0 0.0
    %546 = vmatprep.subr.mxu0 0.0
    %547 = vmatpush1.xpose.msra.mxu0 0.0
    %548 = vmatprep.mubr.f32.mxu0 0.0
    %549 = vmatmul.mubr.f32.gmra.mrb[0].mxu0 %v445
    %v550 = vpop.f32.mrb[0].mxu0
    %v551 = vadd.f32 0.0, %v550
    %v552 = vpop.f32.mrb[0].mxu0
    %553 = vmatprep.mubr.f32.mxu0 0.0
    %554 = vmatmul.mubr.f32.gmra.mrb[0].mxu0 %v448
    %v555 = vpop.f32.mrb[0].mxu0
    %v556 = vadd.f32 0.0, %v555
    %v557 = vpop.f32.mrb[0].mxu0
    %558 = vmatprep.mubr.f32.mxu0 0.0
    %559 = vmatmul.mubr.f32.gmra.mrb[0].mxu0 %v451
    %v560 = vpop.f32.mrb[0].mxu0
    %v561 = vadd.f32 0.0, %v560
    %v562 = vpop.f32.mrb[0].mxu0
    %563 = vmatprep.mubr.f32.mxu0 0.0
    %564 = vmatmul.mubr.f32.gmra.mrb[0].mxu0 %v454
    %v565 = vpop.f32.mrb[0].mxu0
    %v566 = vadd.f32 0.0, %v565
    %v567 = vpop.f32.mrb[0].mxu0
    %568 = vmatprep.mubr.f32.mxu0 0.0
    %569 = vmatmul.mubr.f32.gmra.mrb[0].mxu0 %v457
    %v570 = vpop.f32.mrb[0].mxu0
    %v571 = vadd.f32 0.0, %v570
    %v572 = vpop.f32.mrb[0].mxu0
    %573 = vmatprep.mubr.f32.mxu0 0.0
    %574 = vmatmul.mubr.f32.gmra.mrb[0].mxu0 %v460
    %v575 = vpop.f32.mrb[0].mxu0
    %v576 = vadd.f32 0.0, %v575
    %v577 = vpop.f32.mrb[0].mxu0
    %578 = vmatprep.mubr.f32.mxu0 0.0
    %579 = vmatmul.mubr.f32.gmra.mrb[0].mxu0 %v463
    %v580 = vpop.f32.mrb[0].mxu0
    %v581 = vadd.f32 0.0, %v580
    %v582 = vpop.f32.mrb[0].mxu0
    %583 = vmatprep.mubr.f32.mxu0 0.0
    %584 = vmatmul.mubr.f32.gmra.mrb[0].mxu0 %v466
    %v585 = vpop.f32.mrb[0].mxu0
    %v586 = vadd.f32 0.0, %v585
    %v587 = vpop.f32.mrb[0].mxu0
    %588 = vdwg.mxu0
    %v589 = vmul.f32 %v551, 0.25
    %v590 = vmul.f32 %v556, 0.25
    %v591 = vmul.f32 %v561, 0.25
    %v592 = vmul.f32 %v566, 0.25
    %v593 = vmul.f32 %v571, 0.25
    %v594 = vmul.f32 %v576, 0.25
    %v595 = vmul.f32 %v581, 0.25
    %v596 = vmul.f32 %v586, 0.25
    %v597 = vadd.f32 %v589, %v65
    %v598 = vadd.f32 %v590, %v66
    %v599 = vadd.f32 %v591, %v67
    %v600 = vadd.f32 %v592, %v68
    %v601 = vadd.f32 %v593, %v69
    %v602 = vadd.f32 %v594, %v70
    %v603 = vadd.f32 %v595, %v71
    %v604 = vadd.f32 %v596, %v72
    %vm605 = vcmask 523264
    %v606 = vsel %vm605, %v597, -inf
    %607 = vmax.xlane.f32.xlu0 %v606
    %v608 = vpop.xlane.xlu0 %607
    %v609 = vsel %vm605, %v598, -inf
    %610 = vmax.xlane.f32.xlu0 %v609
    %v611 = vpop.xlane.xlu0 %610
    %v612 = vsel %vm605, %v599, -inf
    %613 = vmax.xlane.f32.xlu0 %v612
    %v614 = vpop.xlane.xlu0 %613
    %v615 = vsel %vm605, %v600, -inf
    %616 = vmax.xlane.f32.xlu0 %v615
    %v617 = vpop.xlane.xlu0 %616
    %v618 = vsel %vm605, %v601, -inf
    %619 = vmax.xlane.f32.xlu0 %v618
    %v620 = vpop.xlane.xlu0 %619
    %v621 = vsel %vm605, %v602, -inf
    %622 = vmax.xlane.f32.xlu0 %v621
    %v623 = vpop.xlane.xlu0 %622
    %v624 = vsel %vm605, %v603, -inf
    %625 = vmax.xlane.f32.xlu0 %v624
    %v626 = vpop.xlane.xlu0 %625
    %v627 = vsel %vm605, %v604, -inf
    %628 = vmax.xlane.f32.xlu0 %v627
    %v629 = vpop.xlane.xlu0 %628
    %v630 = vsub.f32 %v597, %v608
    %v631 = vsub.f32 %v598, %v611
    %v632 = vsub.f32 %v599, %v614
    %v633 = vsub.f32 %v600, %v617
    %v634 = vsub.f32 %v601, %v620
    %v635 = vsub.f32 %v602, %v623
    %v636 = vsub.f32 %v603, %v626
    %v637 = vsub.f32 %v604, %v629
    %v638 = vmul.f32 %v630, 1.442695
    %v639 = vpow.pop %v638
    %v640 = vmul.f32 %v631, 1.442695
    %v641 = vpow.pop %v640
    %v642 = vmul.f32 %v632, 1.442695
    %v643 = vpow.pop %v642
    %v644 = vmul.f32 %v633, 1.442695
    %v645 = vpow.pop %v644
    %v646 = vmul.f32 %v634, 1.442695
    %v647 = vpow.pop %v646
    %v648 = vmul.f32 %v635, 1.442695
    %v649 = vpow.pop %v648
    %v650 = vmul.f32 %v636, 1.442695
    %v651 = vpow.pop %v650
    %v652 = vmul.f32 %v637, 1.442695
    %v653 = vpow.pop %v652
    %v654 = vsel %vm605, %v639, 0.0
    %655 = vadd.xlane.f32.xlu0 %v654
    %v656 = vpop.xlane.xlu0 %655
    %v657 = vsel %vm605, %v641, 0.0
    %658 = vadd.xlane.f32.xlu0 %v657
    %v659 = vpop.xlane.xlu0 %658
    %v660 = vsel %vm605, %v643, 0.0
    %661 = vadd.xlane.f32.xlu0 %v660
    %v662 = vpop.xlane.xlu0 %661
    %v663 = vsel %vm605, %v645, 0.0
    %664 = vadd.xlane.f32.xlu0 %v663
    %v665 = vpop.xlane.xlu0 %664
    %v666 = vsel %vm605, %v647, 0.0
    %667 = vadd.xlane.f32.xlu0 %v666
    %v668 = vpop.xlane.xlu0 %667
    %v669 = vsel %vm605, %v649, 0.0
    %670 = vadd.xlane.f32.xlu0 %v669
    %v671 = vpop.xlane.xlu0 %670
    %v672 = vsel %vm605, %v651, 0.0
    %673 = vadd.xlane.f32.xlu0 %v672
    %v674 = vpop.xlane.xlu0 %673
    %v675 = vsel %vm605, %v653, 0.0
    %676 = vadd.xlane.f32.xlu0 %v675
    %v677 = vpop.xlane.xlu0 %676
    %v678 = vrcp.pop %v656
    %v679 = vrcp.pop %v659
    %v680 = vrcp.pop %v662
    %v681 = vrcp.pop %v665
    %v682 = vrcp.pop %v668
    %v683 = vrcp.pop %v671
    %v684 = vrcp.pop %v674
    %v685 = vrcp.pop %v677
    %v686 = vmul.f32 %v639, %v678
    %v687 = vmul.f32 %v641, %v679
    %v688 = vmul.f32 %v643, %v680
    %v689 = vmul.f32 %v645, %v681
    %v690 = vmul.f32 %v647, %v682
    %v691 = vmul.f32 %v649, %v683
    %v692 = vmul.f32 %v651, %v684
    %v693 = vmul.f32 %v653, %v685
    %694 = vrot.lane.b32.xlu0 %v178, 32
    %v695 = vpop.permute.xlu0 %694
    %696 = vrot.lane.b32.xlu0 %v188, 32
    %v697 = vpop.permute.xlu0 %696
    %698 = vrot.lane.b32.xlu0 %v183, 32
    %v699 = vpop.permute.xlu0 %698
    %700 = vrot.lane.b32.xlu0 %v198, 32
    %v701 = vpop.permute.xlu0 %700
    %v707 = vsel %vm605, %v686, 0
    %v710 = vsel %vm605, %v687, 0
    %v713 = vsel %vm605, %v688, 0
    %v716 = vsel %vm605, %v689, 0
    %v719 = vsel %vm605, %v690, 0
    %v722 = vsel %vm605, %v691, 0
    %v725 = vsel %vm605, %v692, 0
    %v728 = vsel %vm605, %v693, 0
    %730 = vmatprep.subr.mxu0 0.0
    %731 = vmatpush1.msra.mxu0 %v695
    %732 = vmatprep.subr.mxu0 0.0
    %733 = vmatpush1.msra.mxu0 %v695
    %734 = vmatprep.subr.mxu0 0.0
    %735 = vmatpush1.msra.mxu0 %v697
    %736 = vmatprep.subr.mxu0 0.0
    %737 = vmatpush1.msra.mxu0 %v697
    %738 = vmatprep.subr.mxu0 0.0
    %739 = vmatpush1.msra.mxu0 %v699
    %740 = vmatprep.subr.mxu0 0.0
    %741 = vmatpush1.msra.mxu0 %v699
    %742 = vmatprep.subr.mxu0 0.0
    %743 = vmatpush1.msra.mxu0 %v701
    %744 = vmatprep.subr.mxu0 0.0
    %745 = vmatpush1.msra.mxu0 %v701
    %746 = vmatprep.subr.mxu0 0.0
    %747 = vmatpush1.msra.mxu0 0.0
    %748 = vmatprep.subr.mxu0 0.0
    %749 = vmatpush1.msra.mxu0 0.0
    %750 = vmatprep.subr.mxu0 0.0
    %751 = vmatpush1.msra.mxu0 0.0
    %752 = vmatprep.subr.mxu0 0.0
    %753 = vmatpush1.msra.mxu0 0.0
    %754 = vmatprep.subr.mxu0 0.0
    %755 = vmatpush1.msra.mxu0 0.0
    %756 = vmatprep.subr.mxu0 0.0
    %757 = vmatpush1.msra.mxu0 0.0
    %758 = vmatprep.subr.mxu0 0.0
    %759 = vmatpush1.msra.mxu0 0.0
    %760 = vmatprep.subr.mxu0 0.0
    %761 = vmatpush1.msra.mxu0 0.0
    %762 = vmatprep.subr.mxu0 0.0
    %763 = vmatpush1.msra.mxu0 0.0
    %764 = vmatprep.subr.mxu0 0.0
    %765 = vmatpush1.msra.mxu0 0.0
    %766 = vmatprep.subr.mxu0 0.0
    %767 = vmatpush1.msra.mxu0 0.0
    %768 = vmatprep.subr.mxu0 0.0
    %769 = vmatpush1.msra.mxu0 0.0
    %770 = vmatprep.subr.mxu0 0.0
    %771 = vmatpush1.msra.mxu0 0.0
    %772 = vmatprep.subr.mxu0 0.0
    %773 = vmatpush1.msra.mxu0 0.0
    %774 = vmatprep.subr.mxu0 0.0
    %775 = vmatpush1.msra.mxu0 0.0
    %776 = vmatprep.subr.mxu0 0.0
    %777 = vmatpush1.msra.mxu0 0.0
    %778 = vmatprep.subr.mxu0 0.0
    %779 = vmatpush1.msra.mxu0 0.0
    %780 = vmatprep.subr.mxu0 0.0
    %781 = vmatpush1.msra.mxu0 0.0
    %782 = vmatprep.subr.mxu0 0.0
    %783 = vmatpush1.msra.mxu0 0.0
    %784 = vmatprep.subr.mxu0 0.0
    %785 = vmatpush1.msra.mxu0 0.0
    %786 = vmatprep.subr.mxu0 0.0
    %787 = vmatpush1.msra.mxu0 0.0
    %788 = vmatprep.subr.mxu0 0.0
    %789 = vmatpush1.msra.mxu0 0.0
    %790 = vmatprep.subr.mxu0 0.0
    %791 = vmatpush1.msra.mxu0 0.0
    %792 = vmatprep.subr.mxu0 0.0
    %793 = vmatpush1.msra.mxu0 0.0
    %794 = vmatprep.mubr.f32.mxu0 0.0
    %795 = vmatmul.mubr.f32.gmra.mrb[0].mxu0 %v707
    %v796 = vpop.f32.mrb[0].mxu0
    %v797 = vadd.f32 0.0, %v796
    %v798 = vpop.f32.mrb[0].mxu0
    %799 = vmatprep.mubr.f32.mxu0 0.0
    %800 = vmatmul.mubr.f32.gmra.mrb[0].mxu0 %v710
    %v801 = vpop.f32.mrb[0].mxu0
    %v802 = vadd.f32 0.0, %v801
    %v803 = vpop.f32.mrb[0].mxu0
    %804 = vmatprep.mubr.f32.mxu0 0.0
    %805 = vmatmul.mubr.f32.gmra.mrb[0].mxu0 %v713
    %v806 = vpop.f32.mrb[0].mxu0
    %v807 = vadd.f32 0.0, %v806
    %v808 = vpop.f32.mrb[0].mxu0
    %809 = vmatprep.mubr.f32.mxu0 0.0
    %810 = vmatmul.mubr.f32.gmra.mrb[0].mxu0 %v716
    %v811 = vpop.f32.mrb[0].mxu0
    %v812 = vadd.f32 0.0, %v811
    %v813 = vpop.f32.mrb[0].mxu0
    %814 = vmatprep.mubr.f32.mxu0 0.0
    %815 = vmatmul.mubr.f32.gmra.mrb[0].mxu0 %v719
    %v816 = vpop.f32.mrb[0].mxu0
    %v817 = vadd.f32 0.0, %v816
    %v818 = vpop.f32.mrb[0].mxu0
    %819 = vmatprep.mubr.f32.mxu0 0.0
    %820 = vmatmul.mubr.f32.gmra.mrb[0].mxu0 %v722
    %v821 = vpop.f32.mrb[0].mxu0
    %v822 = vadd.f32 0.0, %v821
    %v823 = vpop.f32.mrb[0].mxu0
    %824 = vmatprep.mubr.f32.mxu0 0.0
    %825 = vmatmul.mubr.f32.gmra.mrb[0].mxu0 %v725
    %v826 = vpop.f32.mrb[0].mxu0
    %v827 = vadd.f32 0.0, %v826
    %v828 = vpop.f32.mrb[0].mxu0
    %829 = vmatprep.mubr.f32.mxu0 0.0
    %830 = vmatmul.mubr.f32.gmra.mrb[0].mxu0 %v728
    %v831 = vpop.f32.mrb[0].mxu0
    %v832 = vadd.f32 0.0, %v831
    %v833 = vpop.f32.mrb[0].mxu0
    %834 = vdwg.mxu0
    %836 = vrot.lane.b32.xlu0 %v802, 16
    %v837 = vpop.permute.xlu0 %836
    %840 = vrot.lane.b32.xlu0 %v807, 32
    %v841 = vpop.permute.xlu0 %840
    %844 = vrot.lane.b32.xlu0 %v812, 48
    %v845 = vpop.permute.xlu0 %844
    %v847 = vsel %vm443, %v797, %v837
    %v848 = vsel %vm76, %v847, %v841
    %vm849 = vcmask 392192
    %v850 = vsel %vm849, %v848, %v845
    %852 = vrot.lane.b32.xlu0 %v822, 16
    %v853 = vpop.permute.xlu0 %852
    %856 = vrot.lane.b32.xlu0 %v827, 32
    %v857 = vpop.permute.xlu0 %856
    %860 = vrot.lane.b32.xlu0 %v832, 48
    %v861 = vpop.permute.xlu0 %860
    %v863 = vsel %vm443, %v817, %v853
    %v864 = vsel %vm76, %v863, %v857
    %v865 = vsel %vm849, %v864, %v861
    %v866 = vld [vmem:[%s7] sm:$0xff]
    %v867 = vld [vmem:[%s7 + $0x8] sm:$0xff]
    %v868 = vld [vmem:[%s7 + $0x10] sm:$0xff]
    %v869 = vld [vmem:[%s7 + $0x18] sm:$0xff]
    %v870 = vld [vmem:[%s7 + $0x20] sm:$0xff]
    %v871 = vld [vmem:[%s7 + $0x28] sm:$0xff]
    %v872 = vld [vmem:[%s7 + $0x30] sm:$0xff]
    %v873 = vld [vmem:[%s7 + $0x38] sm:$0xff]
    %v875 = vsel %vm605, %v850, 0
    %v878 = vsel %vm605, %v865, 0
    %880 = vmatprep.subr.mxu0 0.0
    %881 = vmatpush1.msra.mxu0 %v866
    %882 = vmatprep.subr.mxu0 0.0
    %883 = vmatpush1.msra.mxu0 %v867
    %884 = vmatprep.subr.mxu0 0.0
    %885 = vmatpush1.msra.mxu0 %v868
    %886 = vmatprep.subr.mxu0 0.0
    %887 = vmatpush1.msra.mxu0 %v869
    %888 = vmatprep.subr.mxu0 0.0
    %889 = vmatpush1.msra.mxu0 %v870
    %890 = vmatprep.subr.mxu0 0.0
    %891 = vmatpush1.msra.mxu0 %v871
    %892 = vmatprep.subr.mxu0 0.0
    %893 = vmatpush1.msra.mxu0 %v872
    %894 = vmatprep.subr.mxu0 0.0
    %895 = vmatpush1.msra.mxu0 %v873
    %896 = vmatprep.subr.mxu0 0.0
    %897 = vmatpush1.msra.mxu0 0.0
    %898 = vmatprep.subr.mxu0 0.0
    %899 = vmatpush1.msra.mxu0 0.0
    %900 = vmatprep.subr.mxu0 0.0
    %901 = vmatpush1.msra.mxu0 0.0
    %902 = vmatprep.subr.mxu0 0.0
    %903 = vmatpush1.msra.mxu0 0.0
    %904 = vmatprep.subr.mxu0 0.0
    %905 = vmatpush1.msra.mxu0 0.0
    %906 = vmatprep.subr.mxu0 0.0
    %907 = vmatpush1.msra.mxu0 0.0
    %908 = vmatprep.subr.mxu0 0.0
    %909 = vmatpush1.msra.mxu0 0.0
    %910 = vmatprep.subr.mxu0 0.0
    %911 = vmatpush1.msra.mxu0 0.0
    %912 = vmatprep.subr.mxu0 0.0
    %913 = vmatpush1.msra.mxu0 0.0
    %914 = vmatprep.subr.mxu0 0.0
    %915 = vmatpush1.msra.mxu0 0.0
    %916 = vmatprep.subr.mxu0 0.0
    %917 = vmatpush1.msra.mxu0 0.0
    %918 = vmatprep.subr.mxu0 0.0
    %919 = vmatpush1.msra.mxu0 0.0
    %920 = vmatprep.subr.mxu0 0.0
    %921 = vmatpush1.msra.mxu0 0.0
    %922 = vmatprep.subr.mxu0 0.0
    %923 = vmatpush1.msra.mxu0 0.0
    %924 = vmatprep.subr.mxu0 0.0
    %925 = vmatpush1.msra.mxu0 0.0
    %926 = vmatprep.subr.mxu0 0.0
    %927 = vmatpush1.msra.mxu0 0.0
    %928 = vmatprep.subr.mxu0 0.0
    %929 = vmatpush1.msra.mxu0 0.0
    %930 = vmatprep.subr.mxu0 0.0
    %931 = vmatpush1.msra.mxu0 0.0
    %932 = vmatprep.subr.mxu0 0.0
    %933 = vmatpush1.msra.mxu0 0.0
    %934 = vmatprep.subr.mxu0 0.0
    %935 = vmatpush1.msra.mxu0 0.0
    %936 = vmatprep.subr.mxu0 0.0
    %937 = vmatpush1.msra.mxu0 0.0
    %938 = vmatprep.subr.mxu0 0.0
    %939 = vmatpush1.msra.mxu0 0.0
    %940 = vmatprep.subr.mxu0 0.0
    %941 = vmatpush1.msra.mxu0 0.0
    %942 = vmatprep.subr.mxu0 0.0
    %943 = vmatpush1.msra.mxu0 0.0
    %944 = vmatprep.mubr.f32.mxu0 0.0
    %945 = vmatmul.mubr.f32.gmra.mrb[0].mxu0 %v875
    %v946 = vpop.f32.mrb[0].mxu0
    %v947 = vadd.f32 0.0, %v946
    %v948 = vpop.f32.mrb[0].mxu0
    %949 = vmatprep.mubr.f32.mxu0 0.0
    %950 = vmatmul.mubr.f32.gmra.mrb[0].mxu0 %v878
    %v951 = vpop.f32.mrb[0].mxu0
    %v952 = vadd.f32 0.0, %v951
    %v953 = vpop.f32.mrb[0].mxu0
    %954 = vdwg.mxu0
    %v955 = vadd.f32 %v47, %v947
    %v956 = vadd.f32 %v48, %v952
    %v957 = vld [vmem:[%s5] sm:$0x1]
    %v958 = vmul.f32 %v955, %v955
    %v959 = vmul.f32 %v956, %v956
    %v960 = vsel %vm76, %v958, 0.0
    %961 = vadd.xlane.f32.xlu0 %v960
    %v962 = vpop.xlane.xlu0 %961
    %v963 = vsel %vm76, %v959, 0.0
    %964 = vadd.xlane.f32.xlu0 %v963
    %v965 = vpop.xlane.xlu0 %964
    %v966 = vmul.f32 %v962, %v83
    %v967 = vmul.f32 %v965, %v83
    %v968 = vadd.f32 %v966, 1e-06
    %v969 = vadd.f32 %v967, 1e-06
    %v970 = vrsqrt.pop %v968
    %v971 = vrsqrt.pop %v969
    %v972 = vmul.f32 %v955, %v970
    %v973 = vmul.f32 %v956, %v971
    %v974 = vadd.f32 %v957, 1.0
    %v976 = vlaneseq
    %v977 = vshrl.u32 %v976, 7
    %v978 = vsub.s32 0, %v977
    %v979 = vrot.slane %v974, %v978
    %v981 = vmul.f32 %v972, %v979
    %v982 = vmul.f32 %v973, %v979
    %v983 = vld [vmem:[%s8] sm:$0xff]
    %v984 = vld [vmem:[%s8 + $0x8] sm:$0xff]
    %v985 = vld [vmem:[%s8 + $0x10] sm:$0xff]
    %v986 = vld [vmem:[%s8 + $0x18] sm:$0xff]
    %v987 = vld [vmem:[%s9] sm:$0x1]
    %v989 = vlaneseq
    %v990 = vshrl.u32 %v989, 7
    %v991 = vsub.s32 0, %v990
    %v992 = vrot.slane %v987, %v991
    %v995 = vsel %vm76, %v981, 0
    %v998 = vsel %vm76, %v982, 0
    %1000 = vmatprep.subr.mxu0 0.0
    %1001 = vmatpush1.msra.mxu0 %v983
    %1002 = vmatprep.subr.mxu0 0.0
    %1003 = vmatpush1.msra.mxu0 %v984
    %1004 = vmatprep.subr.mxu0 0.0
    %1005 = vmatpush1.msra.mxu0 %v985
    %1006 = vmatprep.subr.mxu0 0.0
    %1007 = vmatpush1.msra.mxu0 %v986
    %1008 = vmatprep.subr.mxu0 0.0
    %1009 = vmatpush1.msra.mxu0 0.0
    %1010 = vmatprep.subr.mxu0 0.0
    %1011 = vmatpush1.msra.mxu0 0.0
    %1012 = vmatprep.subr.mxu0 0.0
    %1013 = vmatpush1.msra.mxu0 0.0
    %1014 = vmatprep.subr.mxu0 0.0
    %1015 = vmatpush1.msra.mxu0 0.0
    %1016 = vmatprep.subr.mxu0 0.0
    %1017 = vmatpush1.msra.mxu0 0.0
    %1018 = vmatprep.subr.mxu0 0.0
    %1019 = vmatpush1.msra.mxu0 0.0
    %1020 = vmatprep.subr.mxu0 0.0
    %1021 = vmatpush1.msra.mxu0 0.0
    %1022 = vmatprep.subr.mxu0 0.0
    %1023 = vmatpush1.msra.mxu0 0.0
    %1024 = vmatprep.subr.mxu0 0.0
    %1025 = vmatpush1.msra.mxu0 0.0
    %1026 = vmatprep.subr.mxu0 0.0
    %1027 = vmatpush1.msra.mxu0 0.0
    %1028 = vmatprep.subr.mxu0 0.0
    %1029 = vmatpush1.msra.mxu0 0.0
    %1030 = vmatprep.subr.mxu0 0.0
    %1031 = vmatpush1.msra.mxu0 0.0
    %1032 = vmatprep.subr.mxu0 0.0
    %1033 = vmatpush1.msra.mxu0 0.0
    %1034 = vmatprep.subr.mxu0 0.0
    %1035 = vmatpush1.msra.mxu0 0.0
    %1036 = vmatprep.subr.mxu0 0.0
    %1037 = vmatpush1.msra.mxu0 0.0
    %1038 = vmatprep.subr.mxu0 0.0
    %1039 = vmatpush1.msra.mxu0 0.0
    %1040 = vmatprep.subr.mxu0 0.0
    %1041 = vmatpush1.msra.mxu0 0.0
    %1042 = vmatprep.subr.mxu0 0.0
    %1043 = vmatpush1.msra.mxu0 0.0
    %1044 = vmatprep.subr.mxu0 0.0
    %1045 = vmatpush1.msra.mxu0 0.0
    %1046 = vmatprep.subr.mxu0 0.0
    %1047 = vmatpush1.msra.mxu0 0.0
    %1048 = vmatprep.subr.mxu0 0.0
    %1049 = vmatpush1.msra.mxu0 0.0
    %1050 = vmatprep.subr.mxu0 0.0
    %1051 = vmatpush1.msra.mxu0 0.0
    %1052 = vmatprep.subr.mxu0 0.0
    %1053 = vmatpush1.msra.mxu0 0.0
    %1054 = vmatprep.subr.mxu0 0.0
    %1055 = vmatpush1.msra.mxu0 0.0
    %1056 = vmatprep.subr.mxu0 0.0
    %1057 = vmatpush1.msra.mxu0 0.0
    %1058 = vmatprep.subr.mxu0 0.0
    %1059 = vmatpush1.msra.mxu0 0.0
    %1060 = vmatprep.subr.mxu0 0.0
    %1061 = vmatpush1.msra.mxu0 0.0
    %1062 = vmatprep.subr.mxu0 0.0
    %1063 = vmatpush1.msra.mxu0 0.0
    %1064 = vmatprep.mubr.f32.mxu0 0.0
    %1065 = vmatmul.mubr.f32.gmra.mrb[0].mxu0 %v995
    %v1066 = vpop.f32.mrb[0].mxu0
    %v1067 = vadd.f32 %v992, %v1066
    %v1068 = vpop.f32.mrb[0].mxu0
    %1069 = vmatprep.mubr.f32.mxu0 0.0
    %1070 = vmatmul.mubr.f32.gmra.mrb[0].mxu0 %v998
    %v1071 = vpop.f32.mrb[0].mxu0
    %v1072 = vadd.f32 %v992, %v1071
    %v1073 = vpop.f32.mrb[0].mxu0
    %1074 = vdwg.mxu0
    %v1075 = vmul.f32 %v1067, 0.5
    %v1076 = vmul.f32 %v1072, 0.5
    %v1077 = vmul.f32 %v1067, 0.044715
    %v1078 = vmul.f32 %v1072, 0.044715
    %v1079 = vmul.f32 %v1077, %v1067
    %v1080 = vmul.f32 %v1078, %v1072
    %v1081 = vmul.f32 %v1079, %v1067
    %v1082 = vmul.f32 %v1080, %v1072
    %v1083 = vadd.f32 %v1067, %v1081
    %v1084 = vadd.f32 %v1072, %v1082
    %v1085 = vmul.f32 %v1083, 0.7978846
    %v1086 = vmul.f32 %v1084, 0.7978846
    %v1087 = vtanh.pop %v1085
    %v1088 = vtanh.pop %v1086
    %v1089 = vadd.f32 %v1087, 1.0
    %v1090 = vadd.f32 %v1088, 1.0
    %v1091 = vmul.f32 %v1075, %v1089
    %v1092 = vmul.f32 %v1076, %v1090
    %1095 = vrot.lane.b32.xlu0 %v1067, 64
    %v1096 = vpop.permute.xlu0 %1095
    %1097 = vrot.lane.b32.xlu0 %v1072, 64
    %v1098 = vpop.permute.xlu0 %1097
    %v1101 = vmul.f32 %v1091, %v1096
    %v1102 = vmul.f32 %v1092, %v1098
    %v1103 = vld [vmem:[%s10] sm:$0xff]
    %v1104 = vld [vmem:[%s10 + $0x8] sm:$0xff]
    %v1105 = vld [vmem:[%s10 + $0x10] sm:$0xff]
    %v1106 = vld [vmem:[%s10 + $0x18] sm:$0xff]
    %v1107 = vld [vmem:[%s10 + $0x20] sm:$0xff]
    %v1108 = vld [vmem:[%s10 + $0x28] sm:$0xff]
    %v1109 = vld [vmem:[%s10 + $0x30] sm:$0xff]
    %v1110 = vld [vmem:[%s10 + $0x38] sm:$0xff]
    %v1111 = vld [vmem:[%s11] sm:$0x1]
    %v1113 = vlaneseq
    %v1114 = vshrl.u32 %v1113, 7
    %v1115 = vsub.s32 0, %v1114
    %v1116 = vrot.slane %v1111, %v1115
    %v1119 = vsel %vm605, %v1101, 0
    %v1122 = vsel %vm605, %v1102, 0
    %1124 = vmatprep.subr.mxu0 0.0
    %1125 = vmatpush1.msra.mxu0 %v1103
    %1126 = vmatprep.subr.mxu0 0.0
    %1127 = vmatpush1.msra.mxu0 %v1104
    %1128 = vmatprep.subr.mxu0 0.0
    %1129 = vmatpush1.msra.mxu0 %v1105
    %1130 = vmatprep.subr.mxu0 0.0
    %1131 = vmatpush1.msra.mxu0 %v1106
    %1132 = vmatprep.subr.mxu0 0.0
    %1133 = vmatpush1.msra.mxu0 %v1107
    %1134 = vmatprep.subr.mxu0 0.0
    %1135 = vmatpush1.msra.mxu0 %v1108
    %1136 = vmatprep.subr.mxu0 0.0
    %1137 = vmatpush1.msra.mxu0 %v1109
    %1138 = vmatprep.subr.mxu0 0.0
    %1139 = vmatpush1.msra.mxu0 %v1110
    %1140 = vmatprep.subr.mxu0 0.0
    %1141 = vmatpush1.msra.mxu0 0.0
    %1142 = vmatprep.subr.mxu0 0.0
    %1143 = vmatpush1.msra.mxu0 0.0
    %1144 = vmatprep.subr.mxu0 0.0
    %1145 = vmatpush1.msra.mxu0 0.0
    %1146 = vmatprep.subr.mxu0 0.0
    %1147 = vmatpush1.msra.mxu0 0.0
    %1148 = vmatprep.subr.mxu0 0.0
    %1149 = vmatpush1.msra.mxu0 0.0
    %1150 = vmatprep.subr.mxu0 0.0
    %1151 = vmatpush1.msra.mxu0 0.0
    %1152 = vmatprep.subr.mxu0 0.0
    %1153 = vmatpush1.msra.mxu0 0.0
    %1154 = vmatprep.subr.mxu0 0.0
    %1155 = vmatpush1.msra.mxu0 0.0
    %1156 = vmatprep.subr.mxu0 0.0
    %1157 = vmatpush1.msra.mxu0 0.0
    %1158 = vmatprep.subr.mxu0 0.0
    %1159 = vmatpush1.msra.mxu0 0.0
    %1160 = vmatprep.subr.mxu0 0.0
    %1161 = vmatpush1.msra.mxu0 0.0
    %1162 = vmatprep.subr.mxu0 0.0
    %1163 = vmatpush1.msra.mxu0 0.0
    %1164 = vmatprep.subr.mxu0 0.0
    %1165 = vmatpush1.msra.mxu0 0.0
    %1166 = vmatprep.subr.mxu0 0.0
    %1167 = vmatpush1.msra.mxu0 0.0
    %1168 = vmatprep.subr.mxu0 0.0
    %1169 = vmatpush1.msra.mxu0 0.0
    %1170 = vmatprep.subr.mxu0 0.0
    %1171 = vmatpush1.msra.mxu0 0.0
    %1172 = vmatprep.subr.mxu0 0.0
    %1173 = vmatpush1.msra.mxu0 0.0
    %1174 = vmatprep.subr.mxu0 0.0
    %1175 = vmatpush1.msra.mxu0 0.0
    %1176 = vmatprep.subr.mxu0 0.0
    %1177 = vmatpush1.msra.mxu0 0.0
    %1178 = vmatprep.subr.mxu0 0.0
    %1179 = vmatpush1.msra.mxu0 0.0
    %1180 = vmatprep.subr.mxu0 0.0
    %1181 = vmatpush1.msra.mxu0 0.0
    %1182 = vmatprep.subr.mxu0 0.0
    %1183 = vmatpush1.msra.mxu0 0.0
    %1184 = vmatprep.subr.mxu0 0.0
    %1185 = vmatpush1.msra.mxu0 0.0
    %1186 = vmatprep.subr.mxu0 0.0
    %1187 = vmatpush1.msra.mxu0 0.0
    %1188 = vmatprep.mubr.f32.mxu0 0.0
    %1189 = vmatmul.mubr.f32.gmra.mrb[0].mxu0 %v1119
    %v1190 = vpop.f32.mrb[0].mxu0
    %v1191 = vadd.f32 %v1116, %v1190
    %v1192 = vpop.f32.mrb[0].mxu0
    %1193 = vmatprep.mubr.f32.mxu0 0.0
    %1194 = vmatmul.mubr.f32.gmra.mrb[0].mxu0 %v1122
    %v1195 = vpop.f32.mrb[0].mxu0
    %v1196 = vadd.f32 %v1116, %v1195
    %v1197 = vpop.f32.mrb[0].mxu0
    %1198 = vdwg.mxu0
    %v1199 = vadd.f32 %v955, %v1191
    %v1200 = vadd.f32 %v956, %v1196
    %s1201 = scalar_lea.vmem %s4, 1
    %v1202 = vld [vmem:[%s1201] sm:$0x1]
    %v1203 = vmul.f32 %v1199, %v1199
    %v1204 = vmul.f32 %v1200, %v1200
    %v1205 = vsel %vm76, %v1203, 0.0
    %1206 = vadd.xlane.f32.xlu0 %v1205
    %v1207 = vpop.xlane.xlu0 %1206
    %v1208 = vsel %vm76, %v1204, 0.0
    %1209 = vadd.xlane.f32.xlu0 %v1208
    %v1210 = vpop.xlane.xlu0 %1209
    %v1211 = vmul.f32 %v1207, %v83
    %v1212 = vmul.f32 %v1210, %v83
    %v1213 = vadd.f32 %v1211, 1e-06
    %v1214 = vadd.f32 %v1212, 1e-06
    %v1215 = vrsqrt.pop %v1213
    %v1216 = vrsqrt.pop %v1214
    %v1217 = vmul.f32 %v1199, %v1215
    %v1218 = vmul.f32 %v1200, %v1216
    %v1219 = vadd.f32 %v1202, 1.0
    %v1221 = vlaneseq
    %v1222 = vshrl.u32 %v1221, 7
    %v1223 = vsub.s32 0, %v1222
    %v1224 = vrot.slane %v1219, %v1223
    %v1226 = vmul.f32 %v1217, %v1224
    %v1227 = vmul.f32 %v1218, %v1224
    %s1228 = scalar_lea.vmem %s6, 32
    %v1229 = vld [vmem:[%s1228] sm:$0xff]
    %v1230 = vld [vmem:[%s1228 + $0x8] sm:$0xff]
    %v1231 = vld [vmem:[%s1228 + $0x10] sm:$0xff]
    %v1232 = vld [vmem:[%s1228 + $0x18] sm:$0xff]
    %v1234 = vsel %vm76, %v1226, 0
    %v1237 = vsel %vm76, %v1227, 0
    %1239 = vmatprep.subr.mxu0 0.0
    %1240 = vmatpush1.msra.mxu0 %v1229
    %1241 = vmatprep.subr.mxu0 0.0
    %1242 = vmatpush1.msra.mxu0 %v1230
    %1243 = vmatprep.subr.mxu0 0.0
    %1244 = vmatpush1.msra.mxu0 %v1231
    %1245 = vmatprep.subr.mxu0 0.0
    %1246 = vmatpush1.msra.mxu0 %v1232
    %1247 = vmatprep.subr.mxu0 0.0
    %1248 = vmatpush1.msra.mxu0 0.0
    %1249 = vmatprep.subr.mxu0 0.0
    %1250 = vmatpush1.msra.mxu0 0.0
    %1251 = vmatprep.subr.mxu0 0.0
    %1252 = vmatpush1.msra.mxu0 0.0
    %1253 = vmatprep.subr.mxu0 0.0
    %1254 = vmatpush1.msra.mxu0 0.0
    %1255 = vmatprep.subr.mxu0 0.0
    %1256 = vmatpush1.msra.mxu0 0.0
    %1257 = vmatprep.subr.mxu0 0.0
    %1258 = vmatpush1.msra.mxu0 0.0
    %1259 = vmatprep.subr.mxu0 0.0
    %1260 = vmatpush1.msra.mxu0 0.0
    %1261 = vmatprep.subr.mxu0 0.0
    %1262 = vmatpush1.msra.mxu0 0.0
    %1263 = vmatprep.subr.mxu0 0.0
    %1264 = vmatpush1.msra.mxu0 0.0
    %1265 = vmatprep.subr.mxu0 0.0
    %1266 = vmatpush1.msra.mxu0 0.0
    %1267 = vmatprep.subr.mxu0 0.0
    %1268 = vmatpush1.msra.mxu0 0.0
    %1269 = vmatprep.subr.mxu0 0.0
    %1270 = vmatpush1.msra.mxu0 0.0
    %1271 = vmatprep.subr.mxu0 0.0
    %1272 = vmatpush1.msra.mxu0 0.0
    %1273 = vmatprep.subr.mxu0 0.0
    %1274 = vmatpush1.msra.mxu0 0.0
    %1275 = vmatprep.subr.mxu0 0.0
    %1276 = vmatpush1.msra.mxu0 0.0
    %1277 = vmatprep.subr.mxu0 0.0
    %1278 = vmatpush1.msra.mxu0 0.0
    %1279 = vmatprep.subr.mxu0 0.0
    %1280 = vmatpush1.msra.mxu0 0.0
    %1281 = vmatprep.subr.mxu0 0.0
    %1282 = vmatpush1.msra.mxu0 0.0
    %1283 = vmatprep.subr.mxu0 0.0
    %1284 = vmatpush1.msra.mxu0 0.0
    %1285 = vmatprep.subr.mxu0 0.0
    %1286 = vmatpush1.msra.mxu0 0.0
    %1287 = vmatprep.subr.mxu0 0.0
    %1288 = vmatpush1.msra.mxu0 0.0
    %1289 = vmatprep.subr.mxu0 0.0
    %1290 = vmatpush1.msra.mxu0 0.0
    %1291 = vmatprep.subr.mxu0 0.0
    %1292 = vmatpush1.msra.mxu0 0.0
    %1293 = vmatprep.subr.mxu0 0.0
    %1294 = vmatpush1.msra.mxu0 0.0
    %1295 = vmatprep.subr.mxu0 0.0
    %1296 = vmatpush1.msra.mxu0 0.0
    %1297 = vmatprep.subr.mxu0 0.0
    %1298 = vmatpush1.msra.mxu0 0.0
    %1299 = vmatprep.subr.mxu0 0.0
    %1300 = vmatpush1.msra.mxu0 0.0
    %1301 = vmatprep.subr.mxu0 0.0
    %1302 = vmatpush1.msra.mxu0 0.0
    %1303 = vmatprep.mubr.f32.mxu0 0.0
    %1304 = vmatmul.mubr.f32.gmra.mrb[0].mxu0 %v1234
    %v1305 = vpop.f32.mrb[0].mxu0
    %v1306 = vadd.f32 0.0, %v1305
    %v1307 = vpop.f32.mrb[0].mxu0
    %1308 = vmatprep.mubr.f32.mxu0 0.0
    %1309 = vmatmul.mubr.f32.gmra.mrb[0].mxu0 %v1237
    %v1310 = vpop.f32.mrb[0].mxu0
    %v1311 = vadd.f32 0.0, %v1310
    %v1312 = vpop.f32.mrb[0].mxu0
    %1313 = vdwg.mxu0
    %1315 = vrot.lane.b32.xlu0 %v1306, 112
    %v1316 = vpop.permute.xlu0 %1315
    %1318 = vrot.lane.b32.xlu0 %v1306, 96
    %v1319 = vpop.permute.xlu0 %1318
    %1321 = vrot.lane.b32.xlu0 %v1306, 80
    %v1322 = vpop.permute.xlu0 %1321
    %1325 = vrot.lane.b32.xlu0 %v1311, 112
    %v1326 = vpop.permute.xlu0 %1325
    %1328 = vrot.lane.b32.xlu0 %v1311, 96
    %v1329 = vpop.permute.xlu0 %1328
    %1331 = vrot.lane.b32.xlu0 %v1311, 80
    %v1332 = vpop.permute.xlu0 %1331
    %v1334 = vmul.f32 %v1306, %v49
    %v1335 = vmul.f32 %v1316, %v50
    %v1336 = vmul.f32 %v1319, %v51
    %v1337 = vmul.f32 %v1322, %v52
    %v1338 = vmul.f32 %v1311, %v53
    %v1339 = vmul.f32 %v1326, %v54
    %v1340 = vmul.f32 %v1329, %v55
    %v1341 = vmul.f32 %v1332, %v56
    %v1342 = vsub.f32 0.0, %v1306
    %v1343 = vsub.f32 0.0, %v1316
    %v1344 = vsub.f32 0.0, %v1319
    %v1345 = vsub.f32 0.0, %v1322
    %v1346 = vsub.f32 0.0, %v1311
    %v1347 = vsub.f32 0.0, %v1326
    %v1348 = vsub.f32 0.0, %v1329
    %v1349 = vsub.f32 0.0, %v1332
    %1358 = vrot.lane.b32.xlu0 %v1342, 120
    %v1359 = vpop.permute.xlu0 %1358
    %1360 = vrot.lane.b32.xlu0 %v1343, 120
    %v1361 = vpop.permute.xlu0 %1360
    %1362 = vrot.lane.b32.xlu0 %v1344, 120
    %v1363 = vpop.permute.xlu0 %1362
    %1364 = vrot.lane.b32.xlu0 %v1345, 120
    %v1365 = vpop.permute.xlu0 %1364
    %1366 = vrot.lane.b32.xlu0 %v1346, 120
    %v1367 = vpop.permute.xlu0 %1366
    %1368 = vrot.lane.b32.xlu0 %v1347, 120
    %v1369 = vpop.permute.xlu0 %1368
    %1370 = vrot.lane.b32.xlu0 %v1348, 120
    %v1371 = vpop.permute.xlu0 %1370
    %1372 = vrot.lane.b32.xlu0 %v1349, 120
    %v1373 = vpop.permute.xlu0 %1372
    %1382 = vrot.lane.b32.xlu0 %v1306, 8
    %v1383 = vpop.permute.xlu0 %1382
    %1384 = vrot.lane.b32.xlu0 %v1316, 8
    %v1385 = vpop.permute.xlu0 %1384
    %1386 = vrot.lane.b32.xlu0 %v1319, 8
    %v1387 = vpop.permute.xlu0 %1386
    %1388 = vrot.lane.b32.xlu0 %v1322, 8
    %v1389 = vpop.permute.xlu0 %1388
    %1390 = vrot.lane.b32.xlu0 %v1311, 8
    %v1391 = vpop.permute.xlu0 %1390
    %1392 = vrot.lane.b32.xlu0 %v1326, 8
    %v1393 = vpop.permute.xlu0 %1392
    %1394 = vrot.lane.b32.xlu0 %v1329, 8
    %v1395 = vpop.permute.xlu0 %1394
    %1396 = vrot.lane.b32.xlu0 %v1332, 8
    %v1397 = vpop.permute.xlu0 %1396
    %v1406 = vsel %vm278, %v1359, %v1383
    %v1407 = vsel %vm278, %v1361, %v1385
    %v1408 = vsel %vm278, %v1363, %v1387
    %v1409 = vsel %vm278, %v1365, %v1389
    %v1410 = vsel %vm278, %v1367, %v1391
    %v1411 = vsel %vm278, %v1369, %v1393
    %v1412 = vsel %vm278, %v1371, %v1395
    %v1413 = vsel %vm278, %v1373, %v1397
    %v1414 = vmul.f32 %v1406, %v57
    %v1415 = vmul.f32 %v1407, %v58
    %v1416 = vmul.f32 %v1408, %v59
    %v1417 = vmul.f32 %v1409, %v60
    %v1418 = vmul.f32 %v1410, %v61
    %v1419 = vmul.f32 %v1411, %v62
    %v1420 = vmul.f32 %v1412, %v63
    %v1421 = vmul.f32 %v1413, %v64
    %v1422 = vadd.f32 %v1334, %v1414
    %v1423 = vadd.f32 %v1335, %v1415
    %v1424 = vadd.f32 %v1336, %v1416
    %v1425 = vadd.f32 %v1337, %v1417
    %v1426 = vadd.f32 %v1338, %v1418
    %v1427 = vadd.f32 %v1339, %v1419
    %v1428 = vadd.f32 %v1340, %v1420
    %v1429 = vadd.f32 %v1341, %v1421
    %v1430 = vmul.f32 %v1306, %v312
    %v1431 = vmul.f32 %v1306, %v314
    %v1432 = vmul.f32 %v1316, %v316
    %v1433 = vmul.f32 %v1316, %v318
    %v1434 = vmul.f32 %v1311, %v320
    %v1435 = vmul.f32 %v1311, %v322
    %v1436 = vmul.f32 %v1326, %v324
    %v1437 = vmul.f32 %v1326, %v326
    %1438 = vrot.lane.b32.xlu0 %v1342, 56
    %v1439 = vpop.permute.xlu0 %1438
    %1440 = vrot.lane.b32.xlu0 %v1343, 56
    %v1441 = vpop.permute.xlu0 %1440
    %1442 = vrot.lane.b32.xlu0 %v1346, 56
    %v1443 = vpop.permute.xlu0 %1442
    %1444 = vrot.lane.b32.xlu0 %v1347, 56
    %v1445 = vpop.permute.xlu0 %1444
    %1450 = vrot.lane.b32.xlu0 %v1306, 72
    %v1451 = vpop.permute.xlu0 %1450
    %1452 = vrot.lane.b32.xlu0 %v1316, 72
    %v1453 = vpop.permute.xlu0 %1452
    %1454 = vrot.lane.b32.xlu0 %v1311, 72
    %v1455 = vpop.permute.xlu0 %1454
    %1456 = vrot.lane.b32.xlu0 %v1326, 72
    %v1457 = vpop.permute.xlu0 %1456
    %v1462 = vsel %vm278, %v1439, %v1451
    %v1463 = vsel %vm278, %v1441, %v1453
    %v1464 = vsel %vm278, %v1443, %v1455
    %v1465 = vsel %vm278, %v1445, %v1457
    %v1466 = vmul.f32 %v1462, %v57
    %v1467 = vmul.f32 %v1462, %v58
    %v1468 = vmul.f32 %v1463, %v59
    %v1469 = vmul.f32 %v1463, %v60
    %v1470 = vmul.f32 %v1464, %v61
    %v1471 = vmul.f32 %v1464, %v62
    %v1472 = vmul.f32 %v1465, %v63
    %v1473 = vmul.f32 %v1465, %v64
    %1482 = vrot.lane.b32.xlu0 %v1466, 64
    %v1483 = vpop.permute.xlu0 %1482
    %1484 = vrot.lane.b32.xlu0 %v1467, 64
    %v1485 = vpop.permute.xlu0 %1484
    %1486 = vrot.lane.b32.xlu0 %v1468, 64
    %v1487 = vpop.permute.xlu0 %1486
    %1488 = vrot.lane.b32.xlu0 %v1469, 64
    %v1489 = vpop.permute.xlu0 %1488
    %1490 = vrot.lane.b32.xlu0 %v1470, 64
    %v1491 = vpop.permute.xlu0 %1490
    %1492 = vrot.lane.b32.xlu0 %v1471, 64
    %v1493 = vpop.permute.xlu0 %1492
    %1494 = vrot.lane.b32.xlu0 %v1472, 64
    %v1495 = vpop.permute.xlu0 %1494
    %1496 = vrot.lane.b32.xlu0 %v1473, 64
    %v1497 = vpop.permute.xlu0 %1496
    %v1506 = vadd.f32 %v1430, %v1483
    %v1507 = vadd.f32 %v1431, %v1485
    %v1508 = vadd.f32 %v1432, %v1487
    %v1509 = vadd.f32 %v1433, %v1489
    %v1510 = vadd.f32 %v1434, %v1491
    %v1511 = vadd.f32 %v1435, %v1493
    %v1512 = vadd.f32 %v1436, %v1495
    %v1513 = vadd.f32 %v1437, %v1497
    %1522 = vrot.lane.b32.xlu0 %v1506, 64
    %v1523 = vpop.permute.xlu0 %1522
    %1524 = vrot.lane.b32.xlu0 %v1507, 64
    %v1525 = vpop.permute.xlu0 %1524
    %1526 = vrot.lane.b32.xlu0 %v1508, 64
    %v1527 = vpop.permute.xlu0 %1526
    %1528 = vrot.lane.b32.xlu0 %v1509, 64
    %v1529 = vpop.permute.xlu0 %1528
    %1530 = vrot.lane.b32.xlu0 %v1510, 64
    %v1531 = vpop.permute.xlu0 %1530
    %1532 = vrot.lane.b32.xlu0 %v1511, 64
    %v1533 = vpop.permute.xlu0 %1532
    %1534 = vrot.lane.b32.xlu0 %v1512, 64
    %v1535 = vpop.permute.xlu0 %1534
    %1536 = vrot.lane.b32.xlu0 %v1513, 64
    %v1537 = vpop.permute.xlu0 %1536
    %v1539 = vsel %vm443, %v1422, 0
    %v1542 = vsel %vm443, %v1423, 0
    %v1545 = vsel %vm443, %v1424, 0
    %v1548 = vsel %vm443, %v1425, 0
    %v1551 = vsel %vm443, %v1426, 0
    %v1554 = vsel %vm443, %v1427, 0
    %v1557 = vsel %vm443, %v1428, 0
    %v1560 = vsel %vm443, %v1429, 0
    %v1562 = vsel %vm443, %v1523, 0
    %v1564 = vsel %vm443, %v1525, 0
    %v1566 = vsel %vm443, %v1527, 0
    %v1568 = vsel %vm443, %v1529, 0
    %v1570 = vsel %vm443, %v1531, 0
    %v1572 = vsel %vm443, %v1533, 0
    %v1574 = vsel %vm443, %v1535, 0
    %v1576 = vsel %vm443, %v1537, 0
    %1578 = vmatprep.subr.mxu0 0.0
    %1579 = vmatpush1.xpose.msra.mxu0 %v1562
    %1580 = vmatprep.subr.mxu0 0.0
    %1581 = vmatpush1.xpose.msra.mxu0 %v1564
    %1582 = vmatprep.subr.mxu0 0.0
    %1583 = vmatpush1.xpose.msra.mxu0 %v1566
    %1584 = vmatprep.subr.mxu0 0.0
    %1585 = vmatpush1.xpose.msra.mxu0 %v1568
    %1586 = vmatprep.subr.mxu0 0.0
    %1587 = vmatpush1.xpose.msra.mxu0 %v1570
    %1588 = vmatprep.subr.mxu0 0.0
    %1589 = vmatpush1.xpose.msra.mxu0 %v1572
    %1590 = vmatprep.subr.mxu0 0.0
    %1591 = vmatpush1.xpose.msra.mxu0 %v1574
    %1592 = vmatprep.subr.mxu0 0.0
    %1593 = vmatpush1.xpose.msra.mxu0 %v1576
    %1594 = vmatprep.subr.mxu0 0.0
    %1595 = vmatpush1.xpose.msra.mxu0 0.0
    %1596 = vmatprep.subr.mxu0 0.0
    %1597 = vmatpush1.xpose.msra.mxu0 0.0
    %1598 = vmatprep.subr.mxu0 0.0
    %1599 = vmatpush1.xpose.msra.mxu0 0.0
    %1600 = vmatprep.subr.mxu0 0.0
    %1601 = vmatpush1.xpose.msra.mxu0 0.0
    %1602 = vmatprep.subr.mxu0 0.0
    %1603 = vmatpush1.xpose.msra.mxu0 0.0
    %1604 = vmatprep.subr.mxu0 0.0
    %1605 = vmatpush1.xpose.msra.mxu0 0.0
    %1606 = vmatprep.subr.mxu0 0.0
    %1607 = vmatpush1.xpose.msra.mxu0 0.0
    %1608 = vmatprep.subr.mxu0 0.0
    %1609 = vmatpush1.xpose.msra.mxu0 0.0
    %1610 = vmatprep.subr.mxu0 0.0
    %1611 = vmatpush1.xpose.msra.mxu0 0.0
    %1612 = vmatprep.subr.mxu0 0.0
    %1613 = vmatpush1.xpose.msra.mxu0 0.0
    %1614 = vmatprep.subr.mxu0 0.0
    %1615 = vmatpush1.xpose.msra.mxu0 0.0
    %1616 = vmatprep.subr.mxu0 0.0
    %1617 = vmatpush1.xpose.msra.mxu0 0.0
    %1618 = vmatprep.subr.mxu0 0.0
    %1619 = vmatpush1.xpose.msra.mxu0 0.0
    %1620 = vmatprep.subr.mxu0 0.0
    %1621 = vmatpush1.xpose.msra.mxu0 0.0
    %1622 = vmatprep.subr.mxu0 0.0
    %1623 = vmatpush1.xpose.msra.mxu0 0.0
    %1624 = vmatprep.subr.mxu0 0.0
    %1625 = vmatpush1.xpose.msra.mxu0 0.0
    %1626 = vmatprep.subr.mxu0 0.0
    %1627 = vmatpush1.xpose.msra.mxu0 0.0
    %1628 = vmatprep.subr.mxu0 0.0
    %1629 = vmatpush1.xpose.msra.mxu0 0.0
    %1630 = vmatprep.subr.mxu0 0.0
    %1631 = vmatpush1.xpose.msra.mxu0 0.0
    %1632 = vmatprep.subr.mxu0 0.0
    %1633 = vmatpush1.xpose.msra.mxu0 0.0
    %1634 = vmatprep.subr.mxu0 0.0
    %1635 = vmatpush1.xpose.msra.mxu0 0.0
    %1636 = vmatprep.subr.mxu0 0.0
    %1637 = vmatpush1.xpose.msra.mxu0 0.0
    %1638 = vmatprep.subr.mxu0 0.0
    %1639 = vmatpush1.xpose.msra.mxu0 0.0
    %1640 = vmatprep.subr.mxu0 0.0
    %1641 = vmatpush1.xpose.msra.mxu0 0.0
    %1642 = vmatprep.mubr.f32.mxu0 0.0
    %1643 = vmatmul.mubr.f32.gmra.mrb[0].mxu0 %v1539
    %v1644 = vpop.f32.mrb[0].mxu0
    %v1645 = vadd.f32 0.0, %v1644
    %v1646 = vpop.f32.mrb[0].mxu0
    %1647 = vmatprep.mubr.f32.mxu0 0.0
    %1648 = vmatmul.mubr.f32.gmra.mrb[0].mxu0 %v1542
    %v1649 = vpop.f32.mrb[0].mxu0
    %v1650 = vadd.f32 0.0, %v1649
    %v1651 = vpop.f32.mrb[0].mxu0
    %1652 = vmatprep.mubr.f32.mxu0 0.0
    %1653 = vmatmul.mubr.f32.gmra.mrb[0].mxu0 %v1545
    %v1654 = vpop.f32.mrb[0].mxu0
    %v1655 = vadd.f32 0.0, %v1654
    %v1656 = vpop.f32.mrb[0].mxu0
    %1657 = vmatprep.mubr.f32.mxu0 0.0
    %1658 = vmatmul.mubr.f32.gmra.mrb[0].mxu0 %v1548
    %v1659 = vpop.f32.mrb[0].mxu0
    %v1660 = vadd.f32 0.0, %v1659
    %v1661 = vpop.f32.mrb[0].mxu0
    %1662 = vmatprep.mubr.f32.mxu0 0.0
    %1663 = vmatmul.mubr.f32.gmra.mrb[0].mxu0 %v1551
    %v1664 = vpop.f32.mrb[0].mxu0
    %v1665 = vadd.f32 0.0, %v1664
    %v1666 = vpop.f32.mrb[0].mxu0
    %1667 = vmatprep.mubr.f32.mxu0 0.0
    %1668 = vmatmul.mubr.f32.gmra.mrb[0].mxu0 %v1554
    %v1669 = vpop.f32.mrb[0].mxu0
    %v1670 = vadd.f32 0.0, %v1669
    %v1671 = vpop.f32.mrb[0].mxu0
    %1672 = vmatprep.mubr.f32.mxu0 0.0
    %1673 = vmatmul.mubr.f32.gmra.mrb[0].mxu0 %v1557
    %v1674 = vpop.f32.mrb[0].mxu0
    %v1675 = vadd.f32 0.0, %v1674
    %v1676 = vpop.f32.mrb[0].mxu0
    %1677 = vmatprep.mubr.f32.mxu0 0.0
    %1678 = vmatmul.mubr.f32.gmra.mrb[0].mxu0 %v1560
    %v1679 = vpop.f32.mrb[0].mxu0
    %v1680 = vadd.f32 0.0, %v1679
    %v1681 = vpop.f32.mrb[0].mxu0
    %1682 = vdwg.mxu0
    %v1683 = vmul.f32 %v1645, 0.25
    %v1684 = vmul.f32 %v1650, 0.25
    %v1685 = vmul.f32 %v1655, 0.25
    %v1686 = vmul.f32 %v1660, 0.25
    %v1687 = vmul.f32 %v1665, 0.25
    %v1688 = vmul.f32 %v1670, 0.25
    %v1689 = vmul.f32 %v1675, 0.25
    %v1690 = vmul.f32 %v1680, 0.25
    %v1691 = vadd.f32 %v1683, %v65
    %v1692 = vadd.f32 %v1684, %v66
    %v1693 = vadd.f32 %v1685, %v67
    %v1694 = vadd.f32 %v1686, %v68
    %v1695 = vadd.f32 %v1687, %v69
    %v1696 = vadd.f32 %v1688, %v70
    %v1697 = vadd.f32 %v1689, %v71
    %v1698 = vadd.f32 %v1690, %v72
    %v1699 = vsel %vm605, %v1691, -inf
    %1700 = vmax.xlane.f32.xlu0 %v1699
    %v1701 = vpop.xlane.xlu0 %1700
    %v1702 = vsel %vm605, %v1692, -inf
    %1703 = vmax.xlane.f32.xlu0 %v1702
    %v1704 = vpop.xlane.xlu0 %1703
    %v1705 = vsel %vm605, %v1693, -inf
    %1706 = vmax.xlane.f32.xlu0 %v1705
    %v1707 = vpop.xlane.xlu0 %1706
    %v1708 = vsel %vm605, %v1694, -inf
    %1709 = vmax.xlane.f32.xlu0 %v1708
    %v1710 = vpop.xlane.xlu0 %1709
    %v1711 = vsel %vm605, %v1695, -inf
    %1712 = vmax.xlane.f32.xlu0 %v1711
    %v1713 = vpop.xlane.xlu0 %1712
    %v1714 = vsel %vm605, %v1696, -inf
    %1715 = vmax.xlane.f32.xlu0 %v1714
    %v1716 = vpop.xlane.xlu0 %1715
    %v1717 = vsel %vm605, %v1697, -inf
    %1718 = vmax.xlane.f32.xlu0 %v1717
    %v1719 = vpop.xlane.xlu0 %1718
    %v1720 = vsel %vm605, %v1698, -inf
    %1721 = vmax.xlane.f32.xlu0 %v1720
    %v1722 = vpop.xlane.xlu0 %1721
    %v1723 = vsub.f32 %v1691, %v1701
    %v1724 = vsub.f32 %v1692, %v1704
    %v1725 = vsub.f32 %v1693, %v1707
    %v1726 = vsub.f32 %v1694, %v1710
    %v1727 = vsub.f32 %v1695, %v1713
    %v1728 = vsub.f32 %v1696, %v1716
    %v1729 = vsub.f32 %v1697, %v1719
    %v1730 = vsub.f32 %v1698, %v1722
    %v1731 = vmul.f32 %v1723, 1.442695
    %v1732 = vpow.pop %v1731
    %v1733 = vmul.f32 %v1724, 1.442695
    %v1734 = vpow.pop %v1733
    %v1735 = vmul.f32 %v1725, 1.442695
    %v1736 = vpow.pop %v1735
    %v1737 = vmul.f32 %v1726, 1.442695
    %v1738 = vpow.pop %v1737
    %v1739 = vmul.f32 %v1727, 1.442695
    %v1740 = vpow.pop %v1739
    %v1741 = vmul.f32 %v1728, 1.442695
    %v1742 = vpow.pop %v1741
    %v1743 = vmul.f32 %v1729, 1.442695
    %v1744 = vpow.pop %v1743
    %v1745 = vmul.f32 %v1730, 1.442695
    %v1746 = vpow.pop %v1745
    %v1747 = vsel %vm605, %v1732, 0.0
    %1748 = vadd.xlane.f32.xlu0 %v1747
    %v1749 = vpop.xlane.xlu0 %1748
    %v1750 = vsel %vm605, %v1734, 0.0
    %1751 = vadd.xlane.f32.xlu0 %v1750
    %v1752 = vpop.xlane.xlu0 %1751
    %v1753 = vsel %vm605, %v1736, 0.0
    %1754 = vadd.xlane.f32.xlu0 %v1753
    %v1755 = vpop.xlane.xlu0 %1754
    %v1756 = vsel %vm605, %v1738, 0.0
    %1757 = vadd.xlane.f32.xlu0 %v1756
    %v1758 = vpop.xlane.xlu0 %1757
    %v1759 = vsel %vm605, %v1740, 0.0
    %1760 = vadd.xlane.f32.xlu0 %v1759
    %v1761 = vpop.xlane.xlu0 %1760
    %v1762 = vsel %vm605, %v1742, 0.0
    %1763 = vadd.xlane.f32.xlu0 %v1762
    %v1764 = vpop.xlane.xlu0 %1763
    %v1765 = vsel %vm605, %v1744, 0.0
    %1766 = vadd.xlane.f32.xlu0 %v1765
    %v1767 = vpop.xlane.xlu0 %1766
    %v1768 = vsel %vm605, %v1746, 0.0
    %1769 = vadd.xlane.f32.xlu0 %v1768
    %v1770 = vpop.xlane.xlu0 %1769
    %v1771 = vrcp.pop %v1749
    %v1772 = vrcp.pop %v1752
    %v1773 = vrcp.pop %v1755
    %v1774 = vrcp.pop %v1758
    %v1775 = vrcp.pop %v1761
    %v1776 = vrcp.pop %v1764
    %v1777 = vrcp.pop %v1767
    %v1778 = vrcp.pop %v1770
    %v1779 = vmul.f32 %v1732, %v1771
    %v1780 = vmul.f32 %v1734, %v1772
    %v1781 = vmul.f32 %v1736, %v1773
    %v1782 = vmul.f32 %v1738, %v1774
    %v1783 = vmul.f32 %v1740, %v1775
    %v1784 = vmul.f32 %v1742, %v1776
    %v1785 = vmul.f32 %v1744, %v1777
    %v1786 = vmul.f32 %v1746, %v1778
    %1787 = vrot.lane.b32.xlu0 %v1306, 32
    %v1788 = vpop.permute.xlu0 %1787
    %1789 = vrot.lane.b32.xlu0 %v1316, 32
    %v1790 = vpop.permute.xlu0 %1789
    %1791 = vrot.lane.b32.xlu0 %v1311, 32
    %v1792 = vpop.permute.xlu0 %1791
    %1793 = vrot.lane.b32.xlu0 %v1326, 32
    %v1794 = vpop.permute.xlu0 %1793
    %v1800 = vsel %vm605, %v1779, 0
    %v1803 = vsel %vm605, %v1780, 0
    %v1806 = vsel %vm605, %v1781, 0
    %v1809 = vsel %vm605, %v1782, 0
    %v1812 = vsel %vm605, %v1783, 0
    %v1815 = vsel %vm605, %v1784, 0
    %v1818 = vsel %vm605, %v1785, 0
    %v1821 = vsel %vm605, %v1786, 0
    %1823 = vmatprep.subr.mxu0 0.0
    %1824 = vmatpush1.msra.mxu0 %v1788
    %1825 = vmatprep.subr.mxu0 0.0
    %1826 = vmatpush1.msra.mxu0 %v1788
    %1827 = vmatprep.subr.mxu0 0.0
    %1828 = vmatpush1.msra.mxu0 %v1790
    %1829 = vmatprep.subr.mxu0 0.0
    %1830 = vmatpush1.msra.mxu0 %v1790
    %1831 = vmatprep.subr.mxu0 0.0
    %1832 = vmatpush1.msra.mxu0 %v1792
    %1833 = vmatprep.subr.mxu0 0.0
    %1834 = vmatpush1.msra.mxu0 %v1792
    %1835 = vmatprep.subr.mxu0 0.0
    %1836 = vmatpush1.msra.mxu0 %v1794
    %1837 = vmatprep.subr.mxu0 0.0
    %1838 = vmatpush1.msra.mxu0 %v1794
    %1839 = vmatprep.subr.mxu0 0.0
    %1840 = vmatpush1.msra.mxu0 0.0
    %1841 = vmatprep.subr.mxu0 0.0
    %1842 = vmatpush1.msra.mxu0 0.0
    %1843 = vmatprep.subr.mxu0 0.0
    %1844 = vmatpush1.msra.mxu0 0.0
    %1845 = vmatprep.subr.mxu0 0.0
    %1846 = vmatpush1.msra.mxu0 0.0
    %1847 = vmatprep.subr.mxu0 0.0
    %1848 = vmatpush1.msra.mxu0 0.0
    %1849 = vmatprep.subr.mxu0 0.0
    %1850 = vmatpush1.msra.mxu0 0.0
    %1851 = vmatprep.subr.mxu0 0.0
    %1852 = vmatpush1.msra.mxu0 0.0
    %1853 = vmatprep.subr.mxu0 0.0
    %1854 = vmatpush1.msra.mxu0 0.0
    %1855 = vmatprep.subr.mxu0 0.0
    %1856 = vmatpush1.msra.mxu0 0.0
    %1857 = vmatprep.subr.mxu0 0.0
    %1858 = vmatpush1.msra.mxu0 0.0
    %1859 = vmatprep.subr.mxu0 0.0
    %1860 = vmatpush1.msra.mxu0 0.0
    %1861 = vmatprep.subr.mxu0 0.0
    %1862 = vmatpush1.msra.mxu0 0.0
    %1863 = vmatprep.subr.mxu0 0.0
    %1864 = vmatpush1.msra.mxu0 0.0
    %1865 = vmatprep.subr.mxu0 0.0
    %1866 = vmatpush1.msra.mxu0 0.0
    %1867 = vmatprep.subr.mxu0 0.0
    %1868 = vmatpush1.msra.mxu0 0.0
    %1869 = vmatprep.subr.mxu0 0.0
    %1870 = vmatpush1.msra.mxu0 0.0
    %1871 = vmatprep.subr.mxu0 0.0
    %1872 = vmatpush1.msra.mxu0 0.0
    %1873 = vmatprep.subr.mxu0 0.0
    %1874 = vmatpush1.msra.mxu0 0.0
    %1875 = vmatprep.subr.mxu0 0.0
    %1876 = vmatpush1.msra.mxu0 0.0
    %1877 = vmatprep.subr.mxu0 0.0
    %1878 = vmatpush1.msra.mxu0 0.0
    %1879 = vmatprep.subr.mxu0 0.0
    %1880 = vmatpush1.msra.mxu0 0.0
    %1881 = vmatprep.subr.mxu0 0.0
    %1882 = vmatpush1.msra.mxu0 0.0
    %1883 = vmatprep.subr.mxu0 0.0
    %1884 = vmatpush1.msra.mxu0 0.0
    %1885 = vmatprep.subr.mxu0 0.0
    %1886 = vmatpush1.msra.mxu0 0.0
    %1887 = vmatprep.mubr.f32.mxu0 0.0
    %1888 = vmatmul.mubr.f32.gmra.mrb[0].mxu0 %v1800
    %v1889 = vpop.f32.mrb[0].mxu0
    %v1890 = vadd.f32 0.0, %v1889
    %v1891 = vpop.f32.mrb[0].mxu0
    %1892 = vmatprep.mubr.f32.mxu0 0.0
    %1893 = vmatmul.mubr.f32.gmra.mrb[0].mxu0 %v1803
    %v1894 = vpop.f32.mrb[0].mxu0
    %v1895 = vadd.f32 0.0, %v1894
    %v1896 = vpop.f32.mrb[0].mxu0
    %1897 = vmatprep.mubr.f32.mxu0 0.0
    %1898 = vmatmul.mubr.f32.gmra.mrb[0].mxu0 %v1806
    %v1899 = vpop.f32.mrb[0].mxu0
    %v1900 = vadd.f32 0.0, %v1899
    %v1901 = vpop.f32.mrb[0].mxu0
    %1902 = vmatprep.mubr.f32.mxu0 0.0
    %1903 = vmatmul.mubr.f32.gmra.mrb[0].mxu0 %v1809
    %v1904 = vpop.f32.mrb[0].mxu0
    %v1905 = vadd.f32 0.0, %v1904
    %v1906 = vpop.f32.mrb[0].mxu0
    %1907 = vmatprep.mubr.f32.mxu0 0.0
    %1908 = vmatmul.mubr.f32.gmra.mrb[0].mxu0 %v1812
    %v1909 = vpop.f32.mrb[0].mxu0
    %v1910 = vadd.f32 0.0, %v1909
    %v1911 = vpop.f32.mrb[0].mxu0
    %1912 = vmatprep.mubr.f32.mxu0 0.0
    %1913 = vmatmul.mubr.f32.gmra.mrb[0].mxu0 %v1815
    %v1914 = vpop.f32.mrb[0].mxu0
    %v1915 = vadd.f32 0.0, %v1914
    %v1916 = vpop.f32.mrb[0].mxu0
    %1917 = vmatprep.mubr.f32.mxu0 0.0
    %1918 = vmatmul.mubr.f32.gmra.mrb[0].mxu0 %v1818
    %v1919 = vpop.f32.mrb[0].mxu0
    %v1920 = vadd.f32 0.0, %v1919
    %v1921 = vpop.f32.mrb[0].mxu0
    %1922 = vmatprep.mubr.f32.mxu0 0.0
    %1923 = vmatmul.mubr.f32.gmra.mrb[0].mxu0 %v1821
    %v1924 = vpop.f32.mrb[0].mxu0
    %v1925 = vadd.f32 0.0, %v1924
    %v1926 = vpop.f32.mrb[0].mxu0
    %1927 = vdwg.mxu0
    %1929 = vrot.lane.b32.xlu0 %v1895, 16
    %v1930 = vpop.permute.xlu0 %1929
    %1933 = vrot.lane.b32.xlu0 %v1900, 32
    %v1934 = vpop.permute.xlu0 %1933
    %1937 = vrot.lane.b32.xlu0 %v1905, 48
    %v1938 = vpop.permute.xlu0 %1937
    %v1940 = vsel %vm443, %v1890, %v1930
    %v1941 = vsel %vm76, %v1940, %v1934
    %v1942 = vsel %vm849, %v1941, %v1938
    %1944 = vrot.lane.b32.xlu0 %v1915, 16
    %v1945 = vpop.permute.xlu0 %1944
    %1948 = vrot.lane.b32.xlu0 %v1920, 32
    %v1949 = vpop.permute.xlu0 %1948
    %1952 = vrot.lane.b32.xlu0 %v1925, 48
    %v1953 = vpop.permute.xlu0 %1952
    %v1955 = vsel %vm443, %v1910, %v1945
    %v1956 = vsel %vm76, %v1955, %v1949
    %v1957 = vsel %vm849, %v1956, %v1953
    %s1958 = scalar_lea.vmem %s7, 64
    %v1959 = vld [vmem:[%s1958] sm:$0xff]
    %v1960 = vld [vmem:[%s1958 + $0x8] sm:$0xff]
    %v1961 = vld [vmem:[%s1958 + $0x10] sm:$0xff]
    %v1962 = vld [vmem:[%s1958 + $0x18] sm:$0xff]
    %v1963 = vld [vmem:[%s1958 + $0x20] sm:$0xff]
    %v1964 = vld [vmem:[%s1958 + $0x28] sm:$0xff]
    %v1965 = vld [vmem:[%s1958 + $0x30] sm:$0xff]
    %v1966 = vld [vmem:[%s1958 + $0x38] sm:$0xff]
    %v1968 = vsel %vm605, %v1942, 0
    %v1971 = vsel %vm605, %v1957, 0
    %1973 = vmatprep.subr.mxu0 0.0
    %1974 = vmatpush1.msra.mxu0 %v1959
    %1975 = vmatprep.subr.mxu0 0.0
    %1976 = vmatpush1.msra.mxu0 %v1960
    %1977 = vmatprep.subr.mxu0 0.0
    %1978 = vmatpush1.msra.mxu0 %v1961
    %1979 = vmatprep.subr.mxu0 0.0
    %1980 = vmatpush1.msra.mxu0 %v1962
    %1981 = vmatprep.subr.mxu0 0.0
    %1982 = vmatpush1.msra.mxu0 %v1963
    %1983 = vmatprep.subr.mxu0 0.0
    %1984 = vmatpush1.msra.mxu0 %v1964
    %1985 = vmatprep.subr.mxu0 0.0
    %1986 = vmatpush1.msra.mxu0 %v1965
    %1987 = vmatprep.subr.mxu0 0.0
    %1988 = vmatpush1.msra.mxu0 %v1966
    %1989 = vmatprep.subr.mxu0 0.0
    %1990 = vmatpush1.msra.mxu0 0.0
    %1991 = vmatprep.subr.mxu0 0.0
    %1992 = vmatpush1.msra.mxu0 0.0
    %1993 = vmatprep.subr.mxu0 0.0
    %1994 = vmatpush1.msra.mxu0 0.0
    %1995 = vmatprep.subr.mxu0 0.0
    %1996 = vmatpush1.msra.mxu0 0.0
    %1997 = vmatprep.subr.mxu0 0.0
    %1998 = vmatpush1.msra.mxu0 0.0
    %1999 = vmatprep.subr.mxu0 0.0
    %2000 = vmatpush1.msra.mxu0 0.0
    %2001 = vmatprep.subr.mxu0 0.0
    %2002 = vmatpush1.msra.mxu0 0.0
    %2003 = vmatprep.subr.mxu0 0.0
    %2004 = vmatpush1.msra.mxu0 0.0
    %2005 = vmatprep.subr.mxu0 0.0
    %2006 = vmatpush1.msra.mxu0 0.0
    %2007 = vmatprep.subr.mxu0 0.0
    %2008 = vmatpush1.msra.mxu0 0.0
    %2009 = vmatprep.subr.mxu0 0.0
    %2010 = vmatpush1.msra.mxu0 0.0
    %2011 = vmatprep.subr.mxu0 0.0
    %2012 = vmatpush1.msra.mxu0 0.0
    %2013 = vmatprep.subr.mxu0 0.0
    %2014 = vmatpush1.msra.mxu0 0.0
    %2015 = vmatprep.subr.mxu0 0.0
    %2016 = vmatpush1.msra.mxu0 0.0
    %2017 = vmatprep.subr.mxu0 0.0
    %2018 = vmatpush1.msra.mxu0 0.0
    %2019 = vmatprep.subr.mxu0 0.0
    %2020 = vmatpush1.msra.mxu0 0.0
    %2021 = vmatprep.subr.mxu0 0.0
    %2022 = vmatpush1.msra.mxu0 0.0
    %2023 = vmatprep.subr.mxu0 0.0
    %2024 = vmatpush1.msra.mxu0 0.0
    %2025 = vmatprep.subr.mxu0 0.0
    %2026 = vmatpush1.msra.mxu0 0.0
    %2027 = vmatprep.subr.mxu0 0.0
    %2028 = vmatpush1.msra.mxu0 0.0
    %2029 = vmatprep.subr.mxu0 0.0
    %2030 = vmatpush1.msra.mxu0 0.0
    %2031 = vmatprep.subr.mxu0 0.0
    %2032 = vmatpush1.msra.mxu0 0.0
    %2033 = vmatprep.subr.mxu0 0.0
    %2034 = vmatpush1.msra.mxu0 0.0
    %2035 = vmatprep.subr.mxu0 0.0
    %2036 = vmatpush1.msra.mxu0 0.0
    %2037 = vmatprep.mubr.f32.mxu0 0.0
    %2038 = vmatmul.mubr.f32.gmra.mrb[0].mxu0 %v1968
    %v2039 = vpop.f32.mrb[0].mxu0
    %v2040 = vadd.f32 0.0, %v2039
    %v2041 = vpop.f32.mrb[0].mxu0
    %2042 = vmatprep.mubr.f32.mxu0 0.0
    %2043 = vmatmul.mubr.f32.gmra.mrb[0].mxu0 %v1971
    %v2044 = vpop.f32.mrb[0].mxu0
    %v2045 = vadd.f32 0.0, %v2044
    %v2046 = vpop.f32.mrb[0].mxu0
    %2047 = vdwg.mxu0
    %v2048 = vadd.f32 %v1199, %v2040
    %v2049 = vadd.f32 %v1200, %v2045
    %s2050 = scalar_lea.vmem %s5, 1
    %v2051 = vld [vmem:[%s2050] sm:$0x1]
    %v2052 = vmul.f32 %v2048, %v2048
    %v2053 = vmul.f32 %v2049, %v2049
    %v2054 = vsel %vm76, %v2052, 0.0
    %2055 = vadd.xlane.f32.xlu0 %v2054
    %v2056 = vpop.xlane.xlu0 %2055
    %v2057 = vsel %vm76, %v2053, 0.0
    %2058 = vadd.xlane.f32.xlu0 %v2057
    %v2059 = vpop.xlane.xlu0 %2058
    %v2060 = vmul.f32 %v2056, %v83
    %v2061 = vmul.f32 %v2059, %v83
    %v2062 = vadd.f32 %v2060, 1e-06
    %v2063 = vadd.f32 %v2061, 1e-06
    %v2064 = vrsqrt.pop %v2062
    %v2065 = vrsqrt.pop %v2063
    %v2066 = vmul.f32 %v2048, %v2064
    %v2067 = vmul.f32 %v2049, %v2065
    %v2068 = vadd.f32 %v2051, 1.0
    %v2070 = vlaneseq
    %v2071 = vshrl.u32 %v2070, 7
    %v2072 = vsub.s32 0, %v2071
    %v2073 = vrot.slane %v2068, %v2072
    %v2075 = vmul.f32 %v2066, %v2073
    %v2076 = vmul.f32 %v2067, %v2073
    %s2077 = scalar_lea.vmem %s8, 32
    %v2078 = vld [vmem:[%s2077] sm:$0xff]
    %v2079 = vld [vmem:[%s2077 + $0x8] sm:$0xff]
    %v2080 = vld [vmem:[%s2077 + $0x10] sm:$0xff]
    %v2081 = vld [vmem:[%s2077 + $0x18] sm:$0xff]
    %s2082 = scalar_lea.vmem %s9, 1
    %v2083 = vld [vmem:[%s2082] sm:$0x1]
    %v2085 = vlaneseq
    %v2086 = vshrl.u32 %v2085, 7
    %v2087 = vsub.s32 0, %v2086
    %v2088 = vrot.slane %v2083, %v2087
    %v2091 = vsel %vm76, %v2075, 0
    %v2094 = vsel %vm76, %v2076, 0
    %2096 = vmatprep.subr.mxu0 0.0
    %2097 = vmatpush1.msra.mxu0 %v2078
    %2098 = vmatprep.subr.mxu0 0.0
    %2099 = vmatpush1.msra.mxu0 %v2079
    %2100 = vmatprep.subr.mxu0 0.0
    %2101 = vmatpush1.msra.mxu0 %v2080
    %2102 = vmatprep.subr.mxu0 0.0
    %2103 = vmatpush1.msra.mxu0 %v2081
    %2104 = vmatprep.subr.mxu0 0.0
    %2105 = vmatpush1.msra.mxu0 0.0
    %2106 = vmatprep.subr.mxu0 0.0
    %2107 = vmatpush1.msra.mxu0 0.0
    %2108 = vmatprep.subr.mxu0 0.0
    %2109 = vmatpush1.msra.mxu0 0.0
    %2110 = vmatprep.subr.mxu0 0.0
    %2111 = vmatpush1.msra.mxu0 0.0
    %2112 = vmatprep.subr.mxu0 0.0
    %2113 = vmatpush1.msra.mxu0 0.0
    %2114 = vmatprep.subr.mxu0 0.0
    %2115 = vmatpush1.msra.mxu0 0.0
    %2116 = vmatprep.subr.mxu0 0.0
    %2117 = vmatpush1.msra.mxu0 0.0
    %2118 = vmatprep.subr.mxu0 0.0
    %2119 = vmatpush1.msra.mxu0 0.0
    %2120 = vmatprep.subr.mxu0 0.0
    %2121 = vmatpush1.msra.mxu0 0.0
    %2122 = vmatprep.subr.mxu0 0.0
    %2123 = vmatpush1.msra.mxu0 0.0
    %2124 = vmatprep.subr.mxu0 0.0
    %2125 = vmatpush1.msra.mxu0 0.0
    %2126 = vmatprep.subr.mxu0 0.0
    %2127 = vmatpush1.msra.mxu0 0.0
    %2128 = vmatprep.subr.mxu0 0.0
    %2129 = vmatpush1.msra.mxu0 0.0
    %2130 = vmatprep.subr.mxu0 0.0
    %2131 = vmatpush1.msra.mxu0 0.0
    %2132 = vmatprep.subr.mxu0 0.0
    %2133 = vmatpush1.msra.mxu0 0.0
    %2134 = vmatprep.subr.mxu0 0.0
    %2135 = vmatpush1.msra.mxu0 0.0
    %2136 = vmatprep.subr.mxu0 0.0
    %2137 = vmatpush1.msra.mxu0 0.0
    %2138 = vmatprep.subr.mxu0 0.0
    %2139 = vmatpush1.msra.mxu0 0.0
    %2140 = vmatprep.subr.mxu0 0.0
    %2141 = vmatpush1.msra.mxu0 0.0
    %2142 = vmatprep.subr.mxu0 0.0
    %2143 = vmatpush1.msra.mxu0 0.0
    %2144 = vmatprep.subr.mxu0 0.0
    %2145 = vmatpush1.msra.mxu0 0.0
    %2146 = vmatprep.subr.mxu0 0.0
    %2147 = vmatpush1.msra.mxu0 0.0
    %2148 = vmatprep.subr.mxu0 0.0
    %2149 = vmatpush1.msra.mxu0 0.0
    %2150 = vmatprep.subr.mxu0 0.0
    %2151 = vmatpush1.msra.mxu0 0.0
    %2152 = vmatprep.subr.mxu0 0.0
    %2153 = vmatpush1.msra.mxu0 0.0
    %2154 = vmatprep.subr.mxu0 0.0
    %2155 = vmatpush1.msra.mxu0 0.0
    %2156 = vmatprep.subr.mxu0 0.0
    %2157 = vmatpush1.msra.mxu0 0.0
    %2158 = vmatprep.subr.mxu0 0.0
    %2159 = vmatpush1.msra.mxu0 0.0
    %2160 = vmatprep.mubr.f32.mxu0 0.0
    %2161 = vmatmul.mubr.f32.gmra.mrb[0].mxu0 %v2091
    %v2162 = vpop.f32.mrb[0].mxu0
    %v2163 = vadd.f32 %v2088, %v2162
    %v2164 = vpop.f32.mrb[0].mxu0
    %2165 = vmatprep.mubr.f32.mxu0 0.0
    %2166 = vmatmul.mubr.f32.gmra.mrb[0].mxu0 %v2094
    %v2167 = vpop.f32.mrb[0].mxu0
    %v2168 = vadd.f32 %v2088, %v2167
    %v2169 = vpop.f32.mrb[0].mxu0
    %2170 = vdwg.mxu0
    %v2171 = vmul.f32 %v2163, 0.5
    %v2172 = vmul.f32 %v2168, 0.5
    %v2173 = vmul.f32 %v2163, 0.044715
    %v2174 = vmul.f32 %v2168, 0.044715
    %v2175 = vmul.f32 %v2173, %v2163
    %v2176 = vmul.f32 %v2174, %v2168
    %v2177 = vmul.f32 %v2175, %v2163
    %v2178 = vmul.f32 %v2176, %v2168
    %v2179 = vadd.f32 %v2163, %v2177
    %v2180 = vadd.f32 %v2168, %v2178
    %v2181 = vmul.f32 %v2179, 0.7978846
    %v2182 = vmul.f32 %v2180, 0.7978846
    %v2183 = vtanh.pop %v2181
    %v2184 = vtanh.pop %v2182
    %v2185 = vadd.f32 %v2183, 1.0
    %v2186 = vadd.f32 %v2184, 1.0
    %v2187 = vmul.f32 %v2171, %v2185
    %v2188 = vmul.f32 %v2172, %v2186
    %2191 = vrot.lane.b32.xlu0 %v2163, 64
    %v2192 = vpop.permute.xlu0 %2191
    %2193 = vrot.lane.b32.xlu0 %v2168, 64
    %v2194 = vpop.permute.xlu0 %2193
    %v2197 = vmul.f32 %v2187, %v2192
    %v2198 = vmul.f32 %v2188, %v2194
    %s2199 = scalar_lea.vmem %s10, 64
    %v2200 = vld [vmem:[%s2199] sm:$0xff]
    %v2201 = vld [vmem:[%s2199 + $0x8] sm:$0xff]
    %v2202 = vld [vmem:[%s2199 + $0x10] sm:$0xff]
    %v2203 = vld [vmem:[%s2199 + $0x18] sm:$0xff]
    %v2204 = vld [vmem:[%s2199 + $0x20] sm:$0xff]
    %v2205 = vld [vmem:[%s2199 + $0x28] sm:$0xff]
    %v2206 = vld [vmem:[%s2199 + $0x30] sm:$0xff]
    %v2207 = vld [vmem:[%s2199 + $0x38] sm:$0xff]
    %s2208 = scalar_lea.vmem %s11, 1
    %v2209 = vld [vmem:[%s2208] sm:$0x1]
    %v2211 = vlaneseq
    %v2212 = vshrl.u32 %v2211, 7
    %v2213 = vsub.s32 0, %v2212
    %v2214 = vrot.slane %v2209, %v2213
    %v2217 = vsel %vm605, %v2197, 0
    %v2220 = vsel %vm605, %v2198, 0
    %2222 = vmatprep.subr.mxu0 0.0
    %2223 = vmatpush1.msra.mxu0 %v2200
    %2224 = vmatprep.subr.mxu0 0.0
    %2225 = vmatpush1.msra.mxu0 %v2201
    %2226 = vmatprep.subr.mxu0 0.0
    %2227 = vmatpush1.msra.mxu0 %v2202
    %2228 = vmatprep.subr.mxu0 0.0
    %2229 = vmatpush1.msra.mxu0 %v2203
    %2230 = vmatprep.subr.mxu0 0.0
    %2231 = vmatpush1.msra.mxu0 %v2204
    %2232 = vmatprep.subr.mxu0 0.0
    %2233 = vmatpush1.msra.mxu0 %v2205
    %2234 = vmatprep.subr.mxu0 0.0
    %2235 = vmatpush1.msra.mxu0 %v2206
    %2236 = vmatprep.subr.mxu0 0.0
    %2237 = vmatpush1.msra.mxu0 %v2207
    %2238 = vmatprep.subr.mxu0 0.0
    %2239 = vmatpush1.msra.mxu0 0.0
    %2240 = vmatprep.subr.mxu0 0.0
    %2241 = vmatpush1.msra.mxu0 0.0
    %2242 = vmatprep.subr.mxu0 0.0
    %2243 = vmatpush1.msra.mxu0 0.0
    %2244 = vmatprep.subr.mxu0 0.0
    %2245 = vmatpush1.msra.mxu0 0.0
    %2246 = vmatprep.subr.mxu0 0.0
    %2247 = vmatpush1.msra.mxu0 0.0
    %2248 = vmatprep.subr.mxu0 0.0
    %2249 = vmatpush1.msra.mxu0 0.0
    %2250 = vmatprep.subr.mxu0 0.0
    %2251 = vmatpush1.msra.mxu0 0.0
    %2252 = vmatprep.subr.mxu0 0.0
    %2253 = vmatpush1.msra.mxu0 0.0
    %2254 = vmatprep.subr.mxu0 0.0
    %2255 = vmatpush1.msra.mxu0 0.0
    %2256 = vmatprep.subr.mxu0 0.0
    %2257 = vmatpush1.msra.mxu0 0.0
    %2258 = vmatprep.subr.mxu0 0.0
    %2259 = vmatpush1.msra.mxu0 0.0
    %2260 = vmatprep.subr.mxu0 0.0
    %2261 = vmatpush1.msra.mxu0 0.0
    %2262 = vmatprep.subr.mxu0 0.0
    %2263 = vmatpush1.msra.mxu0 0.0
    %2264 = vmatprep.subr.mxu0 0.0
    %2265 = vmatpush1.msra.mxu0 0.0
    %2266 = vmatprep.subr.mxu0 0.0
    %2267 = vmatpush1.msra.mxu0 0.0
    %2268 = vmatprep.subr.mxu0 0.0
    %2269 = vmatpush1.msra.mxu0 0.0
    %2270 = vmatprep.subr.mxu0 0.0
    %2271 = vmatpush1.msra.mxu0 0.0
    %2272 = vmatprep.subr.mxu0 0.0
    %2273 = vmatpush1.msra.mxu0 0.0
    %2274 = vmatprep.subr.mxu0 0.0
    %2275 = vmatpush1.msra.mxu0 0.0
    %2276 = vmatprep.subr.mxu0 0.0
    %2277 = vmatpush1.msra.mxu0 0.0
    %2278 = vmatprep.subr.mxu0 0.0
    %2279 = vmatpush1.msra.mxu0 0.0
    %2280 = vmatprep.subr.mxu0 0.0
    %2281 = vmatpush1.msra.mxu0 0.0
    %2282 = vmatprep.subr.mxu0 0.0
    %2283 = vmatpush1.msra.mxu0 0.0
    %2284 = vmatprep.subr.mxu0 0.0
    %2285 = vmatpush1.msra.mxu0 0.0
    %2286 = vmatprep.mubr.f32.mxu0 0.0
    %2287 = vmatmul.mubr.f32.gmra.mrb[0].mxu0 %v2217
    %v2288 = vpop.f32.mrb[0].mxu0
    %v2289 = vadd.f32 %v2214, %v2288
    %v2290 = vpop.f32.mrb[0].mxu0
    %2291 = vmatprep.mubr.f32.mxu0 0.0
    %2292 = vmatmul.mubr.f32.gmra.mrb[0].mxu0 %v2220
    %v2293 = vpop.f32.mrb[0].mxu0
    %v2294 = vadd.f32 %v2214, %v2293
    %v2295 = vpop.f32.mrb[0].mxu0
    %2296 = vdwg.mxu0
    %v2297 = vadd.f32 %v2048, %v2289
    %v2298 = vadd.f32 %v2049, %v2294
    %v2299 = vld [vmem:[%s12] sm:$0x1]
    %v2300 = vmul.f32 %v2297, %v2297
    %v2301 = vmul.f32 %v2298, %v2298
    %v2302 = vsel %vm76, %v2300, 0.0
    %2303 = vadd.xlane.f32.xlu0 %v2302
    %v2304 = vpop.xlane.xlu0 %2303
    %v2305 = vsel %vm76, %v2301, 0.0
    %2306 = vadd.xlane.f32.xlu0 %v2305
    %v2307 = vpop.xlane.xlu0 %2306
    %v2308 = vmul.f32 %v2304, %v83
    %v2309 = vmul.f32 %v2307, %v83
    %v2310 = vadd.f32 %v2308, 1e-06
    %v2311 = vadd.f32 %v2309, 1e-06
    %v2312 = vrsqrt.pop %v2310
    %v2313 = vrsqrt.pop %v2311
    %v2314 = vmul.f32 %v2297, %v2312
    %v2315 = vmul.f32 %v2298, %v2313
    %v2316 = vadd.f32 %v2299, 1.0
    %v2318 = vlaneseq
    %v2319 = vshrl.u32 %v2318, 7
    %v2320 = vsub.s32 0, %v2319
    %v2321 = vrot.slane %v2316, %v2320
    %v2323 = vmul.f32 %v2314, %v2321
    %v2324 = vmul.f32 %v2315, %v2321
    %2325 = vst.msk [vmem:[#allocation2] sm:$0xff] %vm76, %v2323
    %2326 = vst.msk [vmem:[#allocation2 + $0x8] sm:$0xff] %vm76, %v2324
    // Predicated region
    $region54: #{gemma_forward.1} parent=1 // pred_check
      _
    $region55: #{gemma_forward.1} parent=1 // pred_check_branch
      %2328 = sbr.rel (0) target = $region57
    $region56: #{gemma_forward.1} parent=1 // pred_region
      %s2330 = ssub.s32 256, 256
      %2331 = vsyncadd [#allocation3], %s2330
      %s2332 = sshll.u32 [#allocation2], 4
      %s2333 = int_to_ptr.vmem [resolvable:$true] %s2332
      %2338 = dma.vmem_to_hbm [thread:$0]  %s2333, 256, %s13, [#allocation3], 128, 128, 8
    $region57: #{gemma_forward.1} parent=1 // pred_fallthru
      _
    // Predicated region
    $region58: #{gemma_forward.1} parent=1 // pred_check
      _
    $region59: #{gemma_forward.1} parent=1 // pred_check_branch
      %2340 = sbr.rel (0) target = $region61
    $region60: #{gemma_forward.1} parent=1 // pred_region
      %2341 = dma.done [#allocation3], 256
    $region61: #{gemma_forward.1} parent=1 // pred_fallthru
      _
    %2342 = vsyncpa [#allocation3], 1

</llo_original>
